<compile_context>
chip_gen: v5e
topology: v5e:2x2
jax: 0.10.0
libtpu: 0.0.40
codegen_flags: <defaults>
</compile_context>

<pallas_src>
import functools
import math

import jax
import jax.numpy as jnp
from jax.experimental import pallas as pl
from jax.experimental.pallas import tpu as pltpu


def _sha_kernel(q_ref, k_ref, v_ref, w_ref, b_ref, out_ref, *maybe_attn_ref,
                inv_scale, mm_dtype, approx_recip):
    """One grid step = a block of `bb` independent attention problems.

    q_ref: [bb, Nq, D]; k_ref/v_ref: [bb, Nk, D]
    w_ref: [3, D, D] stacked (Wq, Wk, Wv) in torch [out, in] layout (no transpose)
    b_ref: [3, 1, D] stacked biases (f32)
    out_ref: [bb, Nq*D] (lane-dense flat layout) or [bb, Nq, D]
    """
    bb, nq, d = q_ref.shape
    nk = k_ref.shape[1]

    def project(x_ref, idx):
        n = x_ref.shape[1]
        # Collapse (bb, n) -> rows: one wide MXU matmul per projection.  Only
        # leading dims are merged/split (layout-trivial reshapes).
        x2 = x_ref[...].reshape(bb * n, d).astype(mm_dtype)
        w = w_ref[idx]                              # [D, D], torch [out, in]
        # contract x2 dim 1 with w dim 1 == x @ W^T
        y = jax.lax.dot_general(x2, w, (((1,), (1,)), ((), ())),
                                preferred_element_type=jnp.float32)
        y = y + b_ref[idx]                          # [1, D] broadcast, f32
        return y.reshape(bb, n, d)

    # Fold 1/sqrt(D) into Q_ (touches Nq*D elems instead of Nq*Nk logits).
    Qp = project(q_ref, 0) * inv_scale
    Kp = project(k_ref, 1)
    Vp = project(v_ref, 2)

    # attn_logits = Q_ @ K_^T / sqrt(D)  (scale already folded into Qp)
    logits = jnp.einsum('bqd,bkd->bqk',
                        Qp.astype(mm_dtype), Kp.astype(mm_dtype),
                        preferred_element_type=jnp.float32)

    # Softmax over the key axis, numerically stable, always in f32.
    m = jnp.max(logits, axis=-1, keepdims=True)
    e = jnp.exp(logits - m)
    s = jnp.sum(e, axis=-1, keepdims=True)
    if approx_recip:
        wts = e * pl.reciprocal(s, approx=True)     # EUP slot, frees VALU
    else:
        wts = e / s

    if maybe_attn_ref:
        # Only emitted when the caller asks for it (last dim Nk < 128 ->
        # low-lane-utilization stores; off by default).
        maybe_attn_ref[0][...] = wts.astype(maybe_attn_ref[0].dtype)

    out = jnp.einsum('bqk,bkd->bqd',
                     wts.astype(mm_dtype), Vp.astype(mm_dtype),
                     preferred_element_type=jnp.float32)

    if len(out_ref.shape) == 2:
        # Lane-dense flat layout [bb, Nq*D]: fill with static lane-offset slices
        # so the HBM writeback block is a full multiple of 128 lanes.
        for q in range(nq):
            out_ref[:, q * d:(q + 1) * d] = out[:, q, :].astype(out_ref.dtype)
    else:
        out_ref[...] = out.astype(out_ref.dtype)


def _largest_divisor_not_above(n, cap):
    cap = max(1, min(n, cap))
    for c in range(cap, 0, -1):
        if n % c == 0:
            return c
    return 1


def _pick_block_b(B, Nq, Nk, D):
    """Largest block that (a) divides B, (b) fits a conservative VMEM budget and
    (c) still leaves >=2 grid steps when possible (v7x has 2 TensorCores)."""
    per_problem = 4 * (
        2 * ((Nq + 2 * Nk) * D + Nq * D + Nq * Nk)    # double-buffered in/out blocks
        + (Nq + 2 * Nk) * D + 3 * Nq * Nk)            # in-kernel intermediates
    budget = 8 * 1024 * 1024                          # << 16 MiB v5e default scoped VMEM
    cap = max(1, budget // per_problem)
    if B % 2 == 0:
        cap = min(cap, B // 2)                        # keep >=2 parallel steps (v7x 2 TCs)
    return _largest_divisor_not_above(B, cap)


@functools.partial(
    jax.jit,
    static_argnames=("block_b", "use_bf16_matmul", "approx_recip",
                     "return_attn", "out_dtype"))
def batched_single_head_attention(Q, K, V, Wq, bq, Wk, bk, Wv, bv, *,
                                  block_b=None,
                                  use_bf16_matmul=True,
                                  approx_recip=True,
                                  return_attn=False,
                                  out_dtype=jnp.float32):
    """Q: [B, Nq, D]; K, V: [B, Nk, D]; W*: torch-layout [D, D]; b*: [D]."""
    B, Nq, D = Q.shape
    Nk = K.shape[1]

    if block_b is None:
        block_b = _pick_block_b(B, Nq, Nk, D)
    assert B % block_b == 0, "block_b must divide the batch size"
    grid = (B // block_b,)

    inv_scale = 1.0 / math.sqrt(D)                   # pure Python, no device sync
    mm_dtype = jnp.bfloat16 if use_bf16_matmul else jnp.float32

    # Stack + pre-cast the projection weights: 2 operands/DMAs instead of 6,
    # and half the weight bytes on the bf16 path (torch [out, in] layout kept).
    W = jnp.stack([Wq, Wk, Wv]).astype(mm_dtype)           # [3, D, D]
    Bi = jnp.stack([bq, bk, bv]).reshape(3, 1, D).astype(jnp.float32)

    batch_map = lambda i: (i, 0, 0)
    rep_map = lambda i: (0, 0, 0)

    in_specs = [
        pl.BlockSpec((block_b, Nq, D), batch_map),
        pl.BlockSpec((block_b, Nk, D), batch_map),
        pl.BlockSpec((block_b, Nk, D), batch_map),
        pl.BlockSpec((3, D, D), rep_map),
        pl.BlockSpec((3, 1, D), rep_map),
    ]
    # TODO(synk): lane-pack 4 problems per 128-lane group for Q/K/V input DMAs
    # and use a block-diagonal 128x128 projection weight; skipped because the
    # per-problem attention matmuls would then need in-kernel cross-lane
    # relayouts, and input DMA volume is negligible at these shapes.

    # Lane-dense main output: emit [B, Nq*D] (multiple of 128 lanes for the
    # default shapes), reshape back to [B, Nq, D] for free in the wrapper.
    out_flat = (Nq * D) % 128 == 0
    if out_flat:
        out_shape_o = jax.ShapeDtypeStruct((B, Nq * D), out_dtype)
        out_spec_o = pl.BlockSpec((block_b, Nq * D), lambda i: (i, 0))
    else:
        out_shape_o = jax.ShapeDtypeStruct((B, Nq, D), out_dtype)
        out_spec_o = pl.BlockSpec((block_b, Nq, D), batch_map)

    if return_attn:
        out_shape = (out_shape_o, jax.ShapeDtypeStruct((B, Nq, Nk), out_dtype))
        out_specs = (out_spec_o, pl.BlockSpec((block_b, Nq, Nk), batch_map))
    else:
        out_shape = out_shape_o
        out_specs = out_spec_o

    flops = 2 * B * ((Nq + 2 * Nk) * D * D + 2 * Nq * Nk * D)
    bytes_accessed = (
        (Q.size + K.size + V.size) * Q.dtype.itemsize
        + W.size * W.dtype.itemsize + Bi.size * 4
        + B * Nq * D * jnp.dtype(out_dtype).itemsize
        + (B * Nq * Nk * jnp.dtype(out_dtype).itemsize if return_attn else 0))
    cost = pl.CostEstimate(flops=flops, transcendentals=B * Nq * Nk,
                           bytes_accessed=bytes_accessed)

    kernel = functools.partial(_sha_kernel, inv_scale=inv_scale,
                               mm_dtype=mm_dtype, approx_recip=approx_recip)

    res = pl.pallas_call(
        kernel,
        out_shape=out_shape,
        grid_spec=pltpu.PrefetchScalarGridSpec(
            num_scalar_prefetch=0,
            grid=grid,
            in_specs=in_specs,
            out_specs=out_specs),
        compiler_params=pltpu.CompilerParams(
            dimension_semantics=("parallel",),
            vmem_limit_bytes=32 * 1024 * 1024),
        cost_estimate=cost,
    )(Q, K, V, W, Bi)

    if return_attn:
        out, attn = res
    else:
        out, attn = res, None
    if out_flat:
        out = out.reshape(B, Nq, D)                  # contiguous -> free
    return (out, attn) if return_attn else out


def single_head_attention(Q, K, V, Wq, bq, Wk, bk, Wv, bv, **kwargs):
    """Module-exact 2-D API: Q [Nq, D], K/V [Nk, D] -> (out, attn_weights)."""
    out, attn = batched_single_head_attention(
        Q[None], K[None], V[None], Wq, bq, Wk, bk, Wv, bv,
        return_attn=True, **kwargs)
    return out[0], attn[0]


def _torch_like_linear_init(key, out_dim, in_dim):
    # PyTorch nn.Linear default: U(-1/sqrt(in), 1/sqrt(in)) for weight and bias.
    kw, kb = jax.random.split(key)
    bound = 1.0 / math.sqrt(in_dim)
    W = jax.random.uniform(kw, (out_dim, in_dim), jnp.float32, -bound, bound)
    b = jax.random.uniform(kb, (out_dim,), jnp.float32, -bound, bound)
    return W, b


if __name__ == "__main__":
    key = jax.random.PRNGKey(0)
    k_q, k_k, k_v, k_wq, k_wk, k_wv = jax.random.split(key, 6)

    embed_dim = 32
    B, Nq, Nk = 64, 8, 8

    Q = jax.random.normal(k_q, (B, Nq, embed_dim), jnp.float32)
    K = jax.random.normal(k_k, (B, Nk, embed_dim), jnp.float32)
    V = jax.random.normal(k_v, (B, Nk, embed_dim), jnp.float32)

    Wq, bq = _torch_like_linear_init(k_wq, embed_dim, embed_dim)
    Wk, bk = _torch_like_linear_init(k_wk, embed_dim, embed_dim)
    Wv, bv = _torch_like_linear_init(k_wv, embed_dim, embed_dim)

    # Pure-JAX reference of the PyTorch forward (full-precision matmuls),
    # vmapped over the batch.
    hp = jax.lax.Precision.HIGHEST

    def ref_one(q, k, v):
        Q_ = jnp.dot(q, Wq.T, precision=hp) + bq
        K_ = jnp.dot(k, Wk.T, precision=hp) + bk
        V_ = jnp.dot(v, Wv.T, precision=hp) + bv
        logits = jnp.dot(Q_, K_.T, precision=hp) / jnp.sqrt(jnp.float32(embed_dim))
        w = jax.nn.softmax(logits, axis=-1)   # torch dim=1 on a 2-D tensor == key axis
        return jnp.dot(w, V_, precision=hp), w

    out_ref, attn_ref = jax.vmap(ref_one)(Q, K, V)

    # 1) Precision path: f32 MXU operands, exact softmax division, attn returned.
    out, attn = batched_single_head_attention(
        Q, K, V, Wq, bq, Wk, bk, Wv, bv,
        use_bf16_matmul=False, approx_recip=False, return_attn=True)
    jax.block_until_ready((out, attn))
    assert out.shape == (B, Nq, embed_dim) and attn.shape == (B, Nq, Nk)
    assert jnp.allclose(out, out_ref, atol=2e-2, rtol=2e-2)
    assert jnp.allclose(attn, attn_ref, atol=2e-2, rtol=2e-2)
    assert jnp.allclose(jnp.sum(attn, axis=-1), 1.0, atol=1e-3)

    # 2) Fast path (defaults): bf16 MXU operands with f32 accumulation and f32
    #    softmax, EUP reciprocal, no attention writeback, bf16 output.
    out_fast = batched_single_head_attention(
        Q, K, V, Wq, bq, Wk, bk, Wv, bv, out_dtype=jnp.bfloat16)
    jax.block_until_ready(out_fast)
    assert out_fast.shape == (B, Nq, embed_dim)
    assert out_fast.dtype == jnp.bfloat16
    out_fast_f32 = out_fast.astype(jnp.float32)
    assert bool(jnp.all(jnp.isfinite(out_fast_f32)))
    assert jnp.allclose(out_fast_f32, out_ref, atol=1e-1, rtol=1e-1)

    # 3) Module-exact 2-D API (same call shape as the torch module).
    out2, attn2 = single_head_attention(
        Q[0], K[0], V[0], Wq, bq, Wk, bk, Wv, bv,
        use_bf16_matmul=False, approx_recip=False)
    jax.block_until_ready((out2, attn2))
    assert jnp.allclose(out2, out_ref[0], atol=2e-2, rtol=2e-2)
    assert jnp.allclose(attn2, attn_ref[0], atol=2e-2, rtol=2e-2)

    print("KERNEL_OK")
</pallas_src>

<mosaic_0001>
module attributes {stable_mosaic.version = 11 : i64} {
  func.func @_sha_kernel(%arg0: i32, %arg1: memref<32x8x32xf32, #tpu.memory_space<vmem>>, %arg2: memref<32x8x32xf32, #tpu.memory_space<vmem>>, %arg3: memref<32x8x32xf32, #tpu.memory_space<vmem>>, %arg4: memref<3x32x32xf32, #tpu.memory_space<vmem>>, %arg5: memref<3x1x32xf32, #tpu.memory_space<vmem>>, %arg6: memref<32x256xf32, #tpu.memory_space<vmem>>, %arg7: memref<32x8x8xf32, #tpu.memory_space<vmem>>) attributes {dimension_semantics = [#tpu.dimension_semantics<parallel>], iteration_bounds = array<i64: 2>, scalar_prefetch = 0 : i64, scratch_operands = 0 : i64, tpu.core_type = #tpu.core_type<tc>, window_params = [{transform_indices = @transform_0, window_bounds = array<i64: 32, 8, 32>}, {transform_indices = @transform_1, window_bounds = array<i64: 32, 8, 32>}, {transform_indices = @transform_2, window_bounds = array<i64: 32, 8, 32>}, {pipeline_mode = #tpu.pipeline_mode<synchronous>, transform_indices = @transform_3, window_bounds = array<i64: 3, 32, 32>}, {pipeline_mode = #tpu.pipeline_mode<synchronous>, transform_indices = @transform_4, window_bounds = array<i64: 3, 1, 32>}, {transform_indices = @transform_5, window_bounds = array<i64: 32, 256>}, {transform_indices = @transform_6, window_bounds = array<i64: 32, 8, 8>}]} {
    %c0 = arith.constant 0 : index
    %c0_0 = arith.constant 0 : index
    %c0_1 = arith.constant 0 : index
    %0 = vector.load %arg1[%c0, %c0_0, %c0_1] : memref<32x8x32xf32, #tpu.memory_space<vmem>>, vector<32x8x32xf32>
    %1 = vector.shape_cast %0 : vector<32x8x32xf32> to vector<256x32xf32>
    %c0_2 = arith.constant 0 : index
    %c0_3 = arith.constant 0 : index
    %c0_4 = arith.constant 0 : index
    %2 = vector.load %arg4[%c0_2, %c0_3, %c0_4] : memref<3x32x32xf32, #tpu.memory_space<vmem>>, vector<1x32x32xf32>
    %3 = vector.shape_cast %2 : vector<1x32x32xf32> to vector<32x32xf32>
    %cst = arith.constant dense<0.000000e+00> : vector<256x32xf32>
    %4 = tpu.matmul %1, %3, %cst {dimension_numbers = #tpu.dot_dimension_numbers<[1], [1], [0], [0], [0, 0, 1, 0], [], []>} : vector<256x32xf32>, vector<32x32xf32>, vector<256x32xf32> -> vector<256x32xf32>
    %c0_5 = arith.constant 0 : index
    %c0_6 = arith.constant 0 : index
    %c0_7 = arith.constant 0 : index
    %5 = vector.load %arg5[%c0_5, %c0_6, %c0_7] : memref<3x1x32xf32, #tpu.memory_space<vmem>>, vector<1x1x32xf32>
    %6 = vector.shape_cast %5 : vector<1x1x32xf32> to vector<1x32xf32>
    %7 = vector.broadcast %6 : vector<1x32xf32> to vector<256x32xf32>
    %8 = arith.addf %4, %7 : vector<256x32xf32>
    %9 = vector.shape_cast %8 : vector<256x32xf32> to vector<32x8x32xf32>
    %cst_8 = arith.constant 0.176776692 : f32
    %10 = vector.broadcast %cst_8 : f32 to vector<32x8x32xf32>
    %11 = arith.mulf %9, %10 : vector<32x8x32xf32>
    %c0_9 = arith.constant 0 : index
    %c0_10 = arith.constant 0 : index
    %c0_11 = arith.constant 0 : index
    %12 = vector.load %arg2[%c0_9, %c0_10, %c0_11] : memref<32x8x32xf32, #tpu.memory_space<vmem>>, vector<32x8x32xf32>
    %13 = vector.shape_cast %12 : vector<32x8x32xf32> to vector<256x32xf32>
    %c1 = arith.constant 1 : index
    %c0_12 = arith.constant 0 : index
    %c0_13 = arith.constant 0 : index
    %14 = vector.load %arg4[%c1, %c0_12, %c0_13] : memref<3x32x32xf32, #tpu.memory_space<vmem>>, vector<1x32x32xf32>
    %15 = vector.shape_cast %14 : vector<1x32x32xf32> to vector<32x32xf32>
    %cst_14 = arith.constant dense<0.000000e+00> : vector<256x32xf32>
    %16 = tpu.matmul %13, %15, %cst_14 {dimension_numbers = #tpu.dot_dimension_numbers<[1], [1], [0], [0], [0, 0, 1, 0], [], []>} : vector<256x32xf32>, vector<32x32xf32>, vector<256x32xf32> -> vector<256x32xf32>
    %c1_15 = arith.constant 1 : index
    %c0_16 = arith.constant 0 : index
    %c0_17 = arith.constant 0 : index
    %17 = vector.load %arg5[%c1_15, %c0_16, %c0_17] : memref<3x1x32xf32, #tpu.memory_space<vmem>>, vector<1x1x32xf32>
    %18 = vector.shape_cast %17 : vector<1x1x32xf32> to vector<1x32xf32>
    %19 = vector.broadcast %18 : vector<1x32xf32> to vector<256x32xf32>
    %20 = arith.addf %16, %19 : vector<256x32xf32>
    %21 = vector.shape_cast %20 : vector<256x32xf32> to vector<32x8x32xf32>
    %c0_18 = arith.constant 0 : index
    %c0_19 = arith.constant 0 : index
    %c0_20 = arith.constant 0 : index
    %22 = vector.load %arg3[%c0_18, %c0_19, %c0_20] : memref<32x8x32xf32, #tpu.memory_space<vmem>>, vector<32x8x32xf32>
    %23 = vector.shape_cast %22 : vector<32x8x32xf32> to vector<256x32xf32>
    %c2 = arith.constant 2 : index
    %c0_21 = arith.constant 0 : index
    %c0_22 = arith.constant 0 : index
    %24 = vector.load %arg4[%c2, %c0_21, %c0_22] : memref<3x32x32xf32, #tpu.memory_space<vmem>>, vector<1x32x32xf32>
    %25 = vector.shape_cast %24 : vector<1x32x32xf32> to vector<32x32xf32>
    %cst_23 = arith.constant dense<0.000000e+00> : vector<256x32xf32>
    %26 = tpu.matmul %23, %25, %cst_23 {dimension_numbers = #tpu.dot_dimension_numbers<[1], [1], [0], [0], [0, 0, 1, 0], [], []>} : vector<256x32xf32>, vector<32x32xf32>, vector<256x32xf32> -> vector<256x32xf32>
    %c2_24 = arith.constant 2 : index
    %c0_25 = arith.constant 0 : index
    %c0_26 = arith.constant 0 : index
    %27 = vector.load %arg5[%c2_24, %c0_25, %c0_26] : memref<3x1x32xf32, #tpu.memory_space<vmem>>, vector<1x1x32xf32>
    %28 = vector.shape_cast %27 : vector<1x1x32xf32> to vector<1x32xf32>
    %29 = vector.broadcast %28 : vector<1x32xf32> to vector<256x32xf32>
    %30 = arith.addf %26, %29 : vector<256x32xf32>
    %31 = vector.shape_cast %30 : vector<256x32xf32> to vector<32x8x32xf32>
    "tpu.trace_start"() <{level = 10 : i32, message = "bqd,bkd->bqk"}> : () -> ()
    %cst_27 = arith.constant dense<0.000000e+00> : vector<32x8x8xf32>
    %32 = tpu.matmul %11, %21, %cst_27 {dimension_numbers = #tpu.dot_dimension_numbers<[2], [2], [1], [1], [0, 0, 0, 1, 1, 1], [0], [0]>} : vector<32x8x32xf32>, vector<32x8x32xf32>, vector<32x8x8xf32> -> vector<32x8x8xf32>
    "tpu.trace_stop"() : () -> ()
    %cst_28 = arith.constant dense<0xFF800000> : vector<32x8xf32>
    %33 = vector.multi_reduction <maximumf>, %32, %cst_28 [2] : vector<32x8x8xf32> to vector<32x8xf32>
    %34 = vector.shape_cast %33 : vector<32x8xf32> to vector<32x8x1xf32>
    %35 = vector.broadcast %34 : vector<32x8x1xf32> to vector<32x8x8xf32>
    %36 = arith.subf %32, %35 : vector<32x8x8xf32>
    %37 = math.exp %36 : vector<32x8x8xf32>
    %cst_29 = arith.constant dense<0.000000e+00> : vector<32x8xf32>
    %38 = vector.multi_reduction <add>, %37, %cst_29 [2] : vector<32x8x8xf32> to vector<32x8xf32>
    %39 = vector.shape_cast %38 : vector<32x8xf32> to vector<32x8x1xf32>
    %40 = vector.broadcast %39 : vector<32x8x1xf32> to vector<32x8x8xf32>
    %41 = arith.divf %37, %40 : vector<32x8x8xf32>
    %c0_30 = arith.constant 0 : index
    %c0_31 = arith.constant 0 : index
    %c0_32 = arith.constant 0 : index
    %42 = vector.load %arg7[%c0_30, %c0_31, %c0_32] : memref<32x8x8xf32, #tpu.memory_space<vmem>>, vector<32x8x8xf32>
    tpu.vector_store %arg7[%c0_30, %c0_31, %c0_32], %41 {strides = array<i32>} : memref<32x8x8xf32, #tpu.memory_space<vmem>>, vector<32x8x8xf32>,
    "tpu.trace_start"() <{level = 10 : i32, message = "bqk,bkd->bqd"}> : () -> ()
    %cst_33 = arith.constant dense<0.000000e+00> : vector<32x8x32xf32>
    %43 = tpu.matmul %41, %31, %cst_33 {dimension_numbers = #tpu.dot_dimension_numbers<[2], [1], [1], [2], [0, 0, 0, 1, 1, 2], [0], [0]>} : vector<32x8x8xf32>, vector<32x8x32xf32>, vector<32x8x32xf32> -> vector<32x8x32xf32>
    "tpu.trace_stop"() : () -> ()
    %44 = vector.extract_strided_slice %43 {offsets = [0, 0, 0], sizes = [32, 1, 32], strides = [1, 1, 1]} : vector<32x8x32xf32> to vector<32x1x32xf32>
    %45 = vector.shape_cast %44 : vector<32x1x32xf32> to vector<32x32xf32>
    %c0_34 = arith.constant 0 : index
    %c0_35 = arith.constant 0 : index
    %46 = vector.load %arg6[%c0_34, %c0_35] : memref<32x256xf32, #tpu.memory_space<vmem>>, vector<32x32xf32>
    tpu.vector_store %arg6[%c0_34, %c0_35], %45 {strides = array<i32>} : memref<32x256xf32, #tpu.memory_space<vmem>>, vector<32x32xf32>,
    %47 = vector.extract_strided_slice %43 {offsets = [0, 1, 0], sizes = [32, 1, 32], strides = [1, 1, 1]} : vector<32x8x32xf32> to vector<32x1x32xf32>
    %48 = vector.shape_cast %47 : vector<32x1x32xf32> to vector<32x32xf32>
    %c0_36 = arith.constant 0 : index
    %c32 = arith.constant 32 : index
    %49 = vector.load %arg6[%c0_36, %c32] : memref<32x256xf32, #tpu.memory_space<vmem>>, vector<32x32xf32>
    tpu.vector_store %arg6[%c0_36, %c32], %48 {strides = array<i32>} : memref<32x256xf32, #tpu.memory_space<vmem>>, vector<32x32xf32>,
    %50 = vector.extract_strided_slice %43 {offsets = [0, 2, 0], sizes = [32, 1, 32], strides = [1, 1, 1]} : vector<32x8x32xf32> to vector<32x1x32xf32>
    %51 = vector.shape_cast %50 : vector<32x1x32xf32> to vector<32x32xf32>
    %c0_37 = arith.constant 0 : index
    %c64 = arith.constant 64 : index
    %52 = vector.load %arg6[%c0_37, %c64] : memref<32x256xf32, #tpu.memory_space<vmem>>, vector<32x32xf32>
    tpu.vector_store %arg6[%c0_37, %c64], %51 {strides = array<i32>} : memref<32x256xf32, #tpu.memory_space<vmem>>, vector<32x32xf32>,
    %53 = vector.extract_strided_slice %43 {offsets = [0, 3, 0], sizes = [32, 1, 32], strides = [1, 1, 1]} : vector<32x8x32xf32> to vector<32x1x32xf32>
    %54 = vector.shape_cast %53 : vector<32x1x32xf32> to vector<32x32xf32>
    %c0_38 = arith.constant 0 : index
    %c96 = arith.constant 96 : index
    %55 = vector.load %arg6[%c0_38, %c96] : memref<32x256xf32, #tpu.memory_space<vmem>>, vector<32x32xf32>
    tpu.vector_store %arg6[%c0_38, %c96], %54 {strides = array<i32>} : memref<32x256xf32, #tpu.memory_space<vmem>>, vector<32x32xf32>,
    %56 = vector.extract_strided_slice %43 {offsets = [0, 4, 0], sizes = [32, 1, 32], strides = [1, 1, 1]} : vector<32x8x32xf32> to vector<32x1x32xf32>
    %57 = vector.shape_cast %56 : vector<32x1x32xf32> to vector<32x32xf32>
    %c0_39 = arith.constant 0 : index
    %c128 = arith.constant 128 : index
    %58 = vector.load %arg6[%c0_39, %c128] : memref<32x256xf32, #tpu.memory_space<vmem>>, vector<32x32xf32>
    tpu.vector_store %arg6[%c0_39, %c128], %57 {strides = array<i32>} : memref<32x256xf32, #tpu.memory_space<vmem>>, vector<32x32xf32>,
    %59 = vector.extract_strided_slice %43 {offsets = [0, 5, 0], sizes = [32, 1, 32], strides = [1, 1, 1]} : vector<32x8x32xf32> to vector<32x1x32xf32>
    %60 = vector.shape_cast %59 : vector<32x1x32xf32> to vector<32x32xf32>
    %c0_40 = arith.constant 0 : index
    %c160 = arith.constant 160 : index
    %61 = vector.load %arg6[%c0_40, %c160] : memref<32x256xf32, #tpu.memory_space<vmem>>, vector<32x32xf32>
    tpu.vector_store %arg6[%c0_40, %c160], %60 {strides = array<i32>} : memref<32x256xf32, #tpu.memory_space<vmem>>, vector<32x32xf32>,
    %62 = vector.extract_strided_slice %43 {offsets = [0, 6, 0], sizes = [32, 1, 32], strides = [1, 1, 1]} : vector<32x8x32xf32> to vector<32x1x32xf32>
    %63 = vector.shape_cast %62 : vector<32x1x32xf32> to vector<32x32xf32>
    %c0_41 = arith.constant 0 : index
    %c192 = arith.constant 192 : index
    %64 = vector.load %arg6[%c0_41, %c192] : memref<32x256xf32, #tpu.memory_space<vmem>>, vector<32x32xf32>
    tpu.vector_store %arg6[%c0_41, %c192], %63 {strides = array<i32>} : memref<32x256xf32, #tpu.memory_space<vmem>>, vector<32x32xf32>,
    %65 = vector.extract_strided_slice %43 {offsets = [0, 7, 0], sizes = [32, 1, 32], strides = [1, 1, 1]} : vector<32x8x32xf32> to vector<32x1x32xf32>
    %66 = vector.shape_cast %65 : vector<32x1x32xf32> to vector<32x32xf32>
    %c0_42 = arith.constant 0 : index
    %c224 = arith.constant 224 : index
    %67 = vector.load %arg6[%c0_42, %c224] : memref<32x256xf32, #tpu.memory_space<vmem>>, vector<32x32xf32>
    tpu.vector_store %arg6[%c0_42, %c224], %66 {strides = array<i32>} : memref<32x256xf32, #tpu.memory_space<vmem>>, vector<32x32xf32>,
    return
  }
  func.func @transform_0(%arg0: i32) -> (i32, i32, i32) {
    %c0_i32 = arith.constant 0 : i32
    %c0_i32_0 = arith.constant 0 : i32
    %c0_i32_1 = arith.constant 0 : i32
    return %arg0, %c0_i32, %c0_i32_0 : i32, i32, i32
  }
  func.func @transform_1(%arg0: i32) -> (i32, i32, i32) {
    %c0_i32 = arith.constant 0 : i32
    %c0_i32_0 = arith.constant 0 : i32
    %c0_i32_1 = arith.constant 0 : i32
    return %arg0, %c0_i32, %c0_i32_0 : i32, i32, i32
  }
  func.func @transform_2(%arg0: i32) -> (i32, i32, i32) {
    %c0_i32 = arith.constant 0 : i32
    %c0_i32_0 = arith.constant 0 : i32
    %c0_i32_1 = arith.constant 0 : i32
    return %arg0, %c0_i32, %c0_i32_0 : i32, i32, i32
  }
  func.func @transform_3(%arg0: i32) -> (i32, i32, i32) {
    %c0_i32 = arith.constant 0 : i32
    %c0_i32_0 = arith.constant 0 : i32
    %c0_i32_1 = arith.constant 0 : i32
    %c0_i32_2 = arith.constant 0 : i32
    return %c0_i32, %c0_i32_0, %c0_i32_1 : i32, i32, i32
  }
  func.func @transform_4(%arg0: i32) -> (i32, i32, i32) {
    %c0_i32 = arith.constant 0 : i32
    %c0_i32_0 = arith.constant 0 : i32
    %c0_i32_1 = arith.constant 0 : i32
    %c0_i32_2 = arith.constant 0 : i32
    return %c0_i32, %c0_i32_0, %c0_i32_1 : i32, i32, i32
  }
  func.func @transform_5(%arg0: i32) -> (i32, i32) {
    %c0_i32 = arith.constant 0 : i32
    %c0_i32_0 = arith.constant 0 : i32
    return %arg0, %c0_i32 : i32, i32
  }
  func.func @transform_6(%arg0: i32) -> (i32, i32, i32) {
    %c0_i32 = arith.constant 0 : i32
    %c0_i32_0 = arith.constant 0 : i32
    %c0_i32_1 = arith.constant 0 : i32
    return %arg0, %c0_i32, %c0_i32_0 : i32, i32, i32
  }
}

</mosaic_0001>

<llo_original>
// kernel: batched_single_head_attention.1
$region0: #{batched_single_head_attention.1}
  #allocation0 [shape = 'u32[]', space=smem, size = 0x4, offset = 0x4, fixed_abs, tag = 'smem constant byte address 0x4 - core index']
  #allocation1 [shape = 'u32[72,128]{1,0:T(1,128)}', space=vmem, size = 0x9000, scoped, tag = 'internal scratch']
  %s0 = inlined_call_operand.vmem [shape: f32[64,8,32], index: 0, kind: input, shape index: {}]
  %s1 = inlined_call_operand.vmem [shape: f32[64,8,32], index: 1, kind: input, shape index: {}]
  %s2 = inlined_call_operand.vmem [shape: f32[64,8,32], index: 2, kind: input, shape index: {}]
  %s3 = inlined_call_operand.vmem [shape: f32[3,32,32], index: 3, kind: input, shape index: {}]
  %s4 = inlined_call_operand.vmem [shape: f32[3,1,32], index: 4, kind: input, shape index: {}]
  %s5 = inlined_call_operand.vmem [shape: f32[64,256], index: 5, kind: output, shape index: {0}]
  %s6 = inlined_call_operand.vmem [shape: f32[64,8,8], index: 6, kind: output, shape index: {1}]
  %7 = xla_tuple %s5, %s6
  %s8 = sld [smem:[#allocation0]]
  $region61: #{batched_single_head_attention.1} parent=0
    _
  %s10 = ssub.s32 1, %s8
  %s11 = scalar_select 0, %s10, %s8
  loop: start=0, step=1, limit=4
  $region2: #{batched_single_head_attention.1} parent=0 // loop_pre_header
    _
  $region3: #{batched_single_head_attention.1} parent=0 // loop_header
    %s13 = sphi 0, %s17
    %p14 = scmp.ge.s32.totalorder %s13, 4
    %s23 = sphi 0, %s25
    %s26 = sphi 0, %s23
    %s27 = sphi 0, %s26
    %s43 = sphi 0, %s27
    %s49 = sphi 0, %s51
    %s52 = sphi 0, %s49
    %s53 = sphi 0, %s52
    %s69 = sphi 0, %s53
    %s75 = sphi 0, %s77
    %s78 = sphi 0, %s75
    %s79 = sphi 0, %s78
    %s95 = sphi 0, %s79
    %s99 = sphi 0, %s99
    %s101 = sphi 0, %s99
    %s102 = sphi 0, %s101
    %s116 = sphi 0, %s102
    %s120 = sphi 0, %s120
    %s122 = sphi 0, %s120
    %s123 = sphi 0, %s122
    %s137 = sphi 0, %s123
    %s143 = sphi 0, %s145
    %s146 = sphi 0, %s143
    %s147 = sphi 0, %s146
    %s163 = sphi 0, %s147
    %s169 = sphi 0, %s171
    %s172 = sphi 0, %s169
    %s173 = sphi 0, %s172
    %s189 = sphi 0, %s173
  $region4: #{batched_single_head_attention.1} parent=0 // loop_header_branch
    %16 = sbr.rel (%p14) target = $region8
  $region5: #{batched_single_head_attention.1} parent=0 // loop_body
    %s18 = ssub.s32 %s13, 1
    %s19 = ssub.s32 %s13, 2
    %s20 = sadd.s32 %s13, 1
    %s21 = ssub.s32 %s13, %s20
    %p22 = scmp.eq.s32.totalorder %s21, 0
    %s24 = sadd.s32 %s23, 1
    %s25 = scalar_select %p22, %s23, %s24
    %p28 = pneg %p22
    %p29 = scmp.eq.s32.totalorder %s13, 1
    %p30 = por %p28, %p29
    %p31 = scmp.ne.s32.totalorder %s23, %s26
    %p32 = scmp.eq.s32.totalorder %s13, 0
    %p33 = por %p31, %p32
    %p34 = scmp.ne.s32.totalorder %s23, %s26
    %p35 = scmp.eq.s32.totalorder %s18, 1
    %p36 = por %p34, %p35
    %p37 = scmp.ne.s32.totalorder %s26, %s27
    %p38 = scmp.eq.s32.totalorder %s18, 0
    %p39 = por %p37, %p38
    %p40 = scmp.ne.s32.totalorder %s26, %s27
    %p41 = scmp.eq.s32.totalorder %s19, 1
    %p42 = por %p40, %p41
    %p44 = scmp.ne.s32.totalorder %s27, %s43
    %p45 = scmp.eq.s32.totalorder %s19, 0
    %p46 = por %p44, %p45
    %s47 = ssub.s32 %s13, %s20
    %p48 = scmp.eq.s32.totalorder %s47, 0
    %s50 = sadd.s32 %s49, 1
    %s51 = scalar_select %p48, %s49, %s50
    %p54 = pneg %p48
    %p55 = scmp.eq.s32.totalorder %s13, 1
    %p56 = por %p54, %p55
    %p57 = scmp.ne.s32.totalorder %s49, %s52
    %p58 = scmp.eq.s32.totalorder %s13, 0
    %p59 = por %p57, %p58
    %p60 = scmp.ne.s32.totalorder %s49, %s52
    %p61 = scmp.eq.s32.totalorder %s18, 1
    %p62 = por %p60, %p61
    %p63 = scmp.ne.s32.totalorder %s52, %s53
    %p64 = scmp.eq.s32.totalorder %s18, 0
    %p65 = por %p63, %p64
    %p66 = scmp.ne.s32.totalorder %s52, %s53
    %p67 = scmp.eq.s32.totalorder %s19, 1
    %p68 = por %p66, %p67
    %p70 = scmp.ne.s32.totalorder %s53, %s69
    %p71 = scmp.eq.s32.totalorder %s19, 0
    %p72 = por %p70, %p71
    %s73 = ssub.s32 %s13, %s20
    %p74 = scmp.eq.s32.totalorder %s73, 0
    %s76 = sadd.s32 %s75, 1
    %s77 = scalar_select %p74, %s75, %s76
    %p80 = pneg %p74
    %p81 = scmp.eq.s32.totalorder %s13, 1
    %p82 = por %p80, %p81
    %p83 = scmp.ne.s32.totalorder %s75, %s78
    %p84 = scmp.eq.s32.totalorder %s13, 0
    %p85 = por %p83, %p84
    %p86 = scmp.ne.s32.totalorder %s75, %s78
    %p87 = scmp.eq.s32.totalorder %s18, 1
    %p88 = por %p86, %p87
    %p89 = scmp.ne.s32.totalorder %s78, %s79
    %p90 = scmp.eq.s32.totalorder %s18, 0
    %p91 = por %p89, %p90
    %p92 = scmp.ne.s32.totalorder %s78, %s79
    %p93 = scmp.eq.s32.totalorder %s19, 1
    %p94 = por %p92, %p93
    %p96 = scmp.ne.s32.totalorder %s79, %s95
    %p97 = scmp.eq.s32.totalorder %s19, 0
    %p98 = por %p96, %p97
    %s100 = sadd.s32 %s99, 1
    %p103 = scmp.eq.s32.totalorder %s13, 1
    %p104 = scmp.ne.s32.totalorder %s99, %s101
    %p105 = scmp.eq.s32.totalorder %s13, 0
    %p106 = por %p104, %p105
    %p107 = scmp.ne.s32.totalorder %s99, %s101
    %p108 = scmp.eq.s32.totalorder %s18, 1
    %p109 = por %p107, %p108
    %p110 = scmp.ne.s32.totalorder %s101, %s102
    %p111 = scmp.eq.s32.totalorder %s18, 0
    %p112 = por %p110, %p111
    %p113 = scmp.ne.s32.totalorder %s101, %s102
    %p114 = scmp.eq.s32.totalorder %s19, 1
    %p115 = por %p113, %p114
    %p117 = scmp.ne.s32.totalorder %s102, %s116
    %p118 = scmp.eq.s32.totalorder %s19, 0
    %p119 = por %p117, %p118
    %s121 = sadd.s32 %s120, 1
    %p124 = scmp.eq.s32.totalorder %s13, 1
    %p125 = scmp.ne.s32.totalorder %s120, %s122
    %p126 = scmp.eq.s32.totalorder %s13, 0
    %p127 = por %p125, %p126
    %p128 = scmp.ne.s32.totalorder %s120, %s122
    %p129 = scmp.eq.s32.totalorder %s18, 1
    %p130 = por %p128, %p129
    %p131 = scmp.ne.s32.totalorder %s122, %s123
    %p132 = scmp.eq.s32.totalorder %s18, 0
    %p133 = por %p131, %p132
    %p134 = scmp.ne.s32.totalorder %s122, %s123
    %p135 = scmp.eq.s32.totalorder %s19, 1
    %p136 = por %p134, %p135
    %p138 = scmp.ne.s32.totalorder %s123, %s137
    %p139 = scmp.eq.s32.totalorder %s19, 0
    %p140 = por %p138, %p139
    %s141 = ssub.s32 %s13, %s20
    %p142 = scmp.eq.s32.totalorder %s141, 0
    %s144 = sadd.s32 %s143, 1
    %s145 = scalar_select %p142, %s143, %s144
    %p148 = pneg %p142
    %p149 = scmp.eq.s32.totalorder %s13, 1
    %p150 = por %p148, %p149
    %p151 = scmp.ne.s32.totalorder %s143, %s146
    %p152 = scmp.eq.s32.totalorder %s13, 0
    %p153 = por %p151, %p152
    %p154 = scmp.ne.s32.totalorder %s143, %s146
    %p155 = scmp.eq.s32.totalorder %s18, 1
    %p156 = por %p154, %p155
    %p157 = scmp.ne.s32.totalorder %s146, %s147
    %p158 = scmp.eq.s32.totalorder %s18, 0
    %p159 = por %p157, %p158
    %p160 = scmp.ne.s32.totalorder %s146, %s147
    %p161 = scmp.eq.s32.totalorder %s19, 1
    %p162 = por %p160, %p161
    %p164 = scmp.ne.s32.totalorder %s147, %s163
    %p165 = scmp.eq.s32.totalorder %s19, 0
    %p166 = por %p164, %p165
    %s167 = ssub.s32 %s13, %s20
    %p168 = scmp.eq.s32.totalorder %s167, 0
    %s170 = sadd.s32 %s169, 1
    %s171 = scalar_select %p168, %s169, %s170
    %p174 = pneg %p168
    %p175 = scmp.eq.s32.totalorder %s13, 1
    %p176 = por %p174, %p175
    %p177 = scmp.ne.s32.totalorder %s169, %s172
    %p178 = scmp.eq.s32.totalorder %s13, 0
    %p179 = por %p177, %p178
    %p180 = scmp.ne.s32.totalorder %s169, %s172
    %p181 = scmp.eq.s32.totalorder %s18, 1
    %p182 = por %p180, %p181
    %p183 = scmp.ne.s32.totalorder %s172, %s173
    %p184 = scmp.eq.s32.totalorder %s18, 0
    %p185 = por %p183, %p184
    %p186 = scmp.ne.s32.totalorder %s172, %s173
    %p187 = scmp.eq.s32.totalorder %s19, 1
    %p188 = por %p186, %p187
    %p190 = scmp.ne.s32.totalorder %s173, %s189
    %p191 = scmp.eq.s32.totalorder %s19, 0
    %p192 = por %p190, %p191
    %p193 = scmp.le.s32.totalorder 1, %s13
    %p194 = scmp.lt.s32.totalorder %s13, 3
    %p195 = pnand %p193, %p194
    %p196 = pneg %p195
    // Predicated region
    $region9: #{batched_single_head_attention.1} parent=5 // pred_check
      _
    $region10: #{batched_single_head_attention.1} parent=5 // pred_check_branch
      %198 = sbr.rel (%p195) target = $region12
    $region11: #{batched_single_head_attention.1} parent=5 // pred_region
      %s199 = ssub.s32 %s13, 1
      // Predicated region
      $region13: #{batched_single_head_attention.1} parent=11 // pred_check
        %p200 = pneg %p112
      $region14: #{batched_single_head_attention.1} parent=11 // pred_check_branch
        %202 = sbr.rel (%p200) target = $region16
      $region15: #{batched_single_head_attention.1} parent=11 // pred_region
        _
      $region16: #{batched_single_head_attention.1} parent=11 // pred_fallthru
        _
      // Predicated region
      $region17: #{batched_single_head_attention.1} parent=11 // pred_check
        %p203 = pneg %p133
      $region18: #{batched_single_head_attention.1} parent=11 // pred_check_branch
        %205 = sbr.rel (%p203) target = $region20
      $region19: #{batched_single_head_attention.1} parent=11 // pred_region
        _
      $region20: #{batched_single_head_attention.1} parent=11 // pred_fallthru
        _
    $region12: #{batched_single_head_attention.1} parent=5 // pred_fallthru
      _
    %p206 = scmp.lt.s32.totalorder %s13, 2
    // Predicated region
    $region21: #{batched_single_head_attention.1} parent=5 // pred_check
      %p207 = pneg %p206
    $region22: #{batched_single_head_attention.1} parent=5 // pred_check_branch
      %209 = sbr.rel (%p207) target = $region24
    $region23: #{batched_single_head_attention.1} parent=5 // pred_region
      // Predicated region
      $region25: #{batched_single_head_attention.1} parent=23 // pred_check
        %p210 = pneg %p33
      $region26: #{batched_single_head_attention.1} parent=23 // pred_check_branch
        %212 = sbr.rel (%p210) target = $region28
      $region27: #{batched_single_head_attention.1} parent=23 // pred_region
        %s213 = smul.u32 32, %s13
        %p214 = scmp.lt.s32.totalorder %s213, 63
        %s215 = scalar_select %p214, %s213, 63
        %s216 = smul.addr %s215, 8
        %s217 = scalar_lea.vmem %s0, %s216
        %s218 = smul.u32 32, %s13
      $region28: #{batched_single_head_attention.1} parent=23 // pred_fallthru
        _
      // Predicated region
      $region29: #{batched_single_head_attention.1} parent=23 // pred_check
        %p219 = pneg %p59
      $region30: #{batched_single_head_attention.1} parent=23 // pred_check_branch
        %221 = sbr.rel (%p219) target = $region32
      $region31: #{batched_single_head_attention.1} parent=23 // pred_region
        %s222 = smul.u32 32, %s13
        %p223 = scmp.lt.s32.totalorder %s222, 63
        %s224 = scalar_select %p223, %s222, 63
        %s225 = smul.addr %s224, 8
        %s226 = scalar_lea.vmem %s1, %s225
        %s227 = smul.u32 32, %s13
      $region32: #{batched_single_head_attention.1} parent=23 // pred_fallthru
        _
      // Predicated region
      $region33: #{batched_single_head_attention.1} parent=23 // pred_check
        %p228 = pneg %p85
      $region34: #{batched_single_head_attention.1} parent=23 // pred_check_branch
        %230 = sbr.rel (%p228) target = $region36
      $region35: #{batched_single_head_attention.1} parent=23 // pred_region
        %s231 = smul.u32 32, %s13
        %p232 = scmp.lt.s32.totalorder %s231, 63
        %s233 = scalar_select %p232, %s231, 63
        %s234 = smul.addr %s233, 8
        %s235 = scalar_lea.vmem %s2, %s234
        %s236 = smul.u32 32, %s13
      $region36: #{batched_single_head_attention.1} parent=23 // pred_fallthru
        _
    $region24: #{batched_single_head_attention.1} parent=5 // pred_fallthru
      _
    %p237 = scmp.le.s32.totalorder 1, %s13
    %p238 = scmp.lt.s32.totalorder %s13, 3
    %p239 = pnand %p237, %p238
    %p240 = pneg %p239
    // Predicated region
    $region37: #{batched_single_head_attention.1} parent=5 // pred_check
      _
    $region38: #{batched_single_head_attention.1} parent=5 // pred_check_branch
      %242 = sbr.rel (%p239) target = $region40
    $region39: #{batched_single_head_attention.1} parent=5 // pred_region
      %s243 = ssub.s32 %s13, 1
      %s244 = smul.u32 32, %s18
      %p245 = scmp.lt.s32.totalorder %s244, 63
      %s246 = scalar_select %p245, %s244, 63
      %s247 = smul.addr %s246, 8
      %s248 = scalar_lea.vmem %s0, %s247
      %p249 = pneg %p39
      %p250 = pneg %p36
      %s251 = smul.u32 32, %s18
      %p252 = scmp.lt.s32.totalorder %s251, 63
      %s253 = scalar_select %p252, %s251, 63
      %s254 = smul.addr %s253, 8
      %s255 = scalar_lea.vmem %s1, %s254
      %p256 = pneg %p65
      %p257 = pneg %p62
      %s258 = smul.u32 32, %s18
      %p259 = scmp.lt.s32.totalorder %s258, 63
      %s260 = scalar_select %p259, %s258, 63
      %s261 = smul.addr %s260, 8
      %s262 = scalar_lea.vmem %s2, %s261
      %p263 = pneg %p91
      %p264 = pneg %p88
      %p265 = pneg %p112
      %p266 = pneg %p109
      %p267 = pneg %p133
      %p268 = pneg %p130
      %p269 = pneg %p159
      %p270 = pneg %p156
      %s271 = smul.u32 4, %s18
      %p272 = scmp.lt.s32.totalorder %s271, 7
      %s273 = scalar_select %p272, %s271, 7
      %s274 = smul.addr %s273, 2
      %s275 = smul.addr %s274, 8
      %s276 = scalar_lea.vmem %s5, %s275
      %p277 = pneg %p185
      %p278 = pneg %p182
      %s279 = smul.u32 32, %s18
      %p280 = scmp.lt.s32.totalorder %s279, 63
      %s281 = scalar_select %p280, %s279, 63
      %s282 = smul.addr %s281, 8
      %s283 = scalar_lea.vmem %s6, %s282
      %s284 = smul.u32 32, %s18
      %p285 = scmp.lt.s32.totalorder %s284, 63
      %s286 = scalar_select %p285, %s284, 63
      %s287 = smul.addr %s286, 8
      %s288 = scalar_lea.vmem %s0, %s287
      %s289 = smul.u32 32, %s18
      %s290 = smul.u32 32, %s18
      %p291 = scmp.lt.s32.totalorder %s290, 63
      %s292 = scalar_select %p291, %s290, 63
      %s293 = smul.addr %s292, 8
      %s294 = scalar_lea.vmem %s1, %s293
      %s295 = smul.u32 32, %s18
      %s296 = smul.u32 32, %s18
      %p297 = scmp.lt.s32.totalorder %s296, 63
      %s298 = scalar_select %p297, %s296, 63
      %s299 = smul.addr %s298, 8
      %s300 = scalar_lea.vmem %s2, %s299
      %s301 = smul.u32 32, %s18
      %s302 = smul.u32 4, %s18
      %p303 = scmp.lt.s32.totalorder %s302, 7
      %s304 = scalar_select %p303, %s302, 7
      %s305 = smul.addr %s304, 2
      %s306 = smul.addr %s305, 8
      %s307 = scalar_lea.vmem %s5, %s306
      %s308 = smul.u32 4, %s18
      %s309 = smul.u32 32, %s18
      %p310 = scmp.lt.s32.totalorder %s309, 63
      %s311 = scalar_select %p310, %s309, 63
      %s312 = smul.addr %s311, 8
      %s313 = scalar_lea.vmem %s6, %s312
      %s314 = smul.u32 32, %s18
      %v315 = vld [vmem:[%s288] sm:$0xff]
      %v316 = vld [vmem:[%s288 + $0x8] sm:$0xff]
      %v317 = vld [vmem:[%s288 + $0x10] sm:$0xff]
      %v318 = vld [vmem:[%s288 + $0x18] sm:$0xff]
      %v319 = vld [vmem:[%s288 + $0x20] sm:$0xff]
      %v320 = vld [vmem:[%s288 + $0x28] sm:$0xff]
      %v321 = vld [vmem:[%s288 + $0x30] sm:$0xff]
      %v322 = vld [vmem:[%s288 + $0x38] sm:$0xff]
      %v323 = vld [vmem:[%s288 + $0x40] sm:$0xff]
      %v324 = vld [vmem:[%s288 + $0x48] sm:$0xff]
      %v325 = vld [vmem:[%s288 + $0x50] sm:$0xff]
      %v326 = vld [vmem:[%s288 + $0x58] sm:$0xff]
      %v327 = vld [vmem:[%s288 + $0x60] sm:$0xff]
      %v328 = vld [vmem:[%s288 + $0x68] sm:$0xff]
      %v329 = vld [vmem:[%s288 + $0x70] sm:$0xff]
      %v330 = vld [vmem:[%s288 + $0x78] sm:$0xff]
      %v331 = vld [vmem:[%s288 + $0x80] sm:$0xff]
      %v332 = vld [vmem:[%s288 + $0x88] sm:$0xff]
      %v333 = vld [vmem:[%s288 + $0x90] sm:$0xff]
      %v334 = vld [vmem:[%s288 + $0x98] sm:$0xff]
      %v335 = vld [vmem:[%s288 + $0xa0] sm:$0xff]
      %v336 = vld [vmem:[%s288 + $0xa8] sm:$0xff]
      %v337 = vld [vmem:[%s288 + $0xb0] sm:$0xff]
      %v338 = vld [vmem:[%s288 + $0xb8] sm:$0xff]
      %v339 = vld [vmem:[%s288 + $0xc0] sm:$0xff]
      %v340 = vld [vmem:[%s288 + $0xc8] sm:$0xff]
      %v341 = vld [vmem:[%s288 + $0xd0] sm:$0xff]
      %v342 = vld [vmem:[%s288 + $0xd8] sm:$0xff]
      %v343 = vld [vmem:[%s288 + $0xe0] sm:$0xff]
      %v344 = vld [vmem:[%s288 + $0xe8] sm:$0xff]
      %v345 = vld [vmem:[%s288 + $0xf0] sm:$0xff]
      %v346 = vld [vmem:[%s288 + $0xf8] sm:$0xff]
      %v347 = vld [vmem:[%s3] sm:$0xff]
      %v348 = vld [vmem:[%s3 + $0x8] sm:$0xff]
      %v349 = vld [vmem:[%s3 + $0x10] sm:$0xff]
      %v350 = vld [vmem:[%s3 + $0x18] sm:$0xff]
      %v351 = vld [vmem:[%s4] sm:$0x1]
      %v353 = vperm.slane %v351, 0
      %vm355 = vcmask 261120
      %v357 = vsel %vm355, %v315, 0
      %v360 = vsel %vm355, %v316, 0
      %v363 = vsel %vm355, %v317, 0
      %v366 = vsel %vm355, %v318, 0
      %v369 = vsel %vm355, %v319, 0
      %v372 = vsel %vm355, %v320, 0
      %v375 = vsel %vm355, %v321, 0
      %v378 = vsel %vm355, %v322, 0
      %v381 = vsel %vm355, %v323, 0
      %v384 = vsel %vm355, %v324, 0
      %v387 = vsel %vm355, %v325, 0
      %v390 = vsel %vm355, %v326, 0
      %v393 = vsel %vm355, %v327, 0
      %v396 = vsel %vm355, %v328, 0
      %v399 = vsel %vm355, %v329, 0
      %v402 = vsel %vm355, %v330, 0
      %v405 = vsel %vm355, %v331, 0
      %v408 = vsel %vm355, %v332, 0
      %v411 = vsel %vm355, %v333, 0
      %v414 = vsel %vm355, %v334, 0
      %v417 = vsel %vm355, %v335, 0
      %v420 = vsel %vm355, %v336, 0
      %v423 = vsel %vm355, %v337, 0
      %v426 = vsel %vm355, %v338, 0
      %v429 = vsel %vm355, %v339, 0
      %v432 = vsel %vm355, %v340, 0
      %v435 = vsel %vm355, %v341, 0
      %v438 = vsel %vm355, %v342, 0
      %v441 = vsel %vm355, %v343, 0
      %v444 = vsel %vm355, %v344, 0
      %v447 = vsel %vm355, %v345, 0
      %v450 = vsel %vm355, %v346, 0
      %v453 = vsel %vm355, %v347, 0
      %v456 = vsel %vm355, %v348, 0
      %v459 = vsel %vm355, %v349, 0
      %v462 = vsel %vm355, %v350, 0
      %464 = vmatpush.xpose.msra.mxu0 0.0
      %465 = vmatpush.xpose.msra.mxu0 0.0
      %466 = vmatpush.xpose.msra.mxu0 0.0
      %467 = vmatpush.xpose.msra.mxu0 0.0
      %468 = vmatpush.xpose.msra.mxu0 0.0
      %469 = vmatpush.xpose.msra.mxu0 0.0
      %470 = vmatpush.xpose.msra.mxu0 0.0
      %471 = vmatpush.xpose.msra.mxu0 0.0
      %472 = vmatpush.xpose.msra.mxu0 0.0
      %473 = vmatpush.xpose.msra.mxu0 0.0
      %474 = vmatpush.xpose.msra.mxu0 0.0
      %475 = vmatpush.xpose.msra.mxu0 0.0
      %476 = vmatpush.xpose.msra.mxu0 %v462
      %477 = vmatpush.xpose.msra.mxu0 %v459
      %478 = vmatpush.xpose.msra.mxu0 %v456
      %479 = vmatpush.xpose.msra.mxu0 %v453
      %480 = vmatmul.f32.gmra.mxu0 %v357
      %v481 = vpop.f32.mrf.mxu0
      %v482 = vadd.f32 %v353, %v481
      %483 = vmatmul.f32.gmra.mxu0 %v360
      %v484 = vpop.f32.mrf.mxu0
      %v485 = vadd.f32 %v353, %v484
      %486 = vmatmul.f32.gmra.mxu0 %v363
      %v487 = vpop.f32.mrf.mxu0
      %v488 = vadd.f32 %v353, %v487
      %489 = vmatmul.f32.gmra.mxu0 %v366
      %v490 = vpop.f32.mrf.mxu0
      %v491 = vadd.f32 %v353, %v490
      %492 = vmatmul.f32.gmra.mxu0 %v369
      %v493 = vpop.f32.mrf.mxu0
      %v494 = vadd.f32 %v353, %v493
      %495 = vmatmul.f32.gmra.mxu0 %v372
      %v496 = vpop.f32.mrf.mxu0
      %v497 = vadd.f32 %v353, %v496
      %498 = vmatmul.f32.gmra.mxu0 %v375
      %v499 = vpop.f32.mrf.mxu0
      %v500 = vadd.f32 %v353, %v499
      %501 = vmatmul.f32.gmra.mxu0 %v378
      %v502 = vpop.f32.mrf.mxu0
      %v503 = vadd.f32 %v353, %v502
      %504 = vmatmul.f32.gmra.mxu0 %v381
      %v505 = vpop.f32.mrf.mxu0
      %v506 = vadd.f32 %v353, %v505
      %507 = vmatmul.f32.gmra.mxu0 %v384
      %v508 = vpop.f32.mrf.mxu0
      %v509 = vadd.f32 %v353, %v508
      %510 = vmatmul.f32.gmra.mxu0 %v387
      %v511 = vpop.f32.mrf.mxu0
      %v512 = vadd.f32 %v353, %v511
      %513 = vmatmul.f32.gmra.mxu0 %v390
      %v514 = vpop.f32.mrf.mxu0
      %v515 = vadd.f32 %v353, %v514
      %516 = vmatmul.f32.gmra.mxu0 %v393
      %v517 = vpop.f32.mrf.mxu0
      %v518 = vadd.f32 %v353, %v517
      %519 = vmatmul.f32.gmra.mxu0 %v396
      %v520 = vpop.f32.mrf.mxu0
      %v521 = vadd.f32 %v353, %v520
      %522 = vmatmul.f32.gmra.mxu0 %v399
      %v523 = vpop.f32.mrf.mxu0
      %v524 = vadd.f32 %v353, %v523
      %525 = vmatmul.f32.gmra.mxu0 %v402
      %v526 = vpop.f32.mrf.mxu0
      %v527 = vadd.f32 %v353, %v526
      %528 = vmatmul.f32.gmra.mxu0 %v405
      %v529 = vpop.f32.mrf.mxu0
      %v530 = vadd.f32 %v353, %v529
      %531 = vmatmul.f32.gmra.mxu0 %v408
      %v532 = vpop.f32.mrf.mxu0
      %v533 = vadd.f32 %v353, %v532
      %534 = vmatmul.f32.gmra.mxu0 %v411
      %v535 = vpop.f32.mrf.mxu0
      %v536 = vadd.f32 %v353, %v535
      %537 = vmatmul.f32.gmra.mxu0 %v414
      %v538 = vpop.f32.mrf.mxu0
      %v539 = vadd.f32 %v353, %v538
      %540 = vmatmul.f32.gmra.mxu0 %v417
      %v541 = vpop.f32.mrf.mxu0
      %v542 = vadd.f32 %v353, %v541
      %543 = vmatmul.f32.gmra.mxu0 %v420
      %v544 = vpop.f32.mrf.mxu0
      %v545 = vadd.f32 %v353, %v544
      %546 = vmatmul.f32.gmra.mxu0 %v423
      %v547 = vpop.f32.mrf.mxu0
      %v548 = vadd.f32 %v353, %v547
      %549 = vmatmul.f32.gmra.mxu0 %v426
      %v550 = vpop.f32.mrf.mxu0
      %v551 = vadd.f32 %v353, %v550
      %552 = vmatmul.f32.gmra.mxu0 %v429
      %v553 = vpop.f32.mrf.mxu0
      %v554 = vadd.f32 %v353, %v553
      %555 = vmatmul.f32.gmra.mxu0 %v432
      %v556 = vpop.f32.mrf.mxu0
      %v557 = vadd.f32 %v353, %v556
      %558 = vmatmul.f32.gmra.mxu0 %v435
      %v559 = vpop.f32.mrf.mxu0
      %v560 = vadd.f32 %v353, %v559
      %561 = vmatmul.f32.gmra.mxu0 %v438
      %v562 = vpop.f32.mrf.mxu0
      %v563 = vadd.f32 %v353, %v562
      %564 = vmatmul.f32.gmra.mxu0 %v441
      %v565 = vpop.f32.mrf.mxu0
      %v566 = vadd.f32 %v353, %v565
      %567 = vmatmul.f32.gmra.mxu0 %v444
      %v568 = vpop.f32.mrf.mxu0
      %v569 = vadd.f32 %v353, %v568
      %570 = vmatmul.f32.gmra.mxu0 %v447
      %v571 = vpop.f32.mrf.mxu0
      %v572 = vadd.f32 %v353, %v571
      %573 = vmatmul.f32.gmra.mxu0 %v450
      %v574 = vpop.f32.mrf.mxu0
      %v575 = vadd.f32 %v353, %v574
      %576 = vdwg.mxu0
      %v577 = vmul.f32 %v482, 0.17677669
      %v578 = vmul.f32 %v485, 0.17677669
      %v579 = vmul.f32 %v488, 0.17677669
      %v580 = vmul.f32 %v491, 0.17677669
      %v581 = vmul.f32 %v494, 0.17677669
      %v582 = vmul.f32 %v497, 0.17677669
      %v583 = vmul.f32 %v500, 0.17677669
      %v584 = vmul.f32 %v503, 0.17677669
      %v585 = vmul.f32 %v506, 0.17677669
      %v586 = vmul.f32 %v509, 0.17677669
      %v587 = vmul.f32 %v512, 0.17677669
      %v588 = vmul.f32 %v515, 0.17677669
      %v589 = vmul.f32 %v518, 0.17677669
      %v590 = vmul.f32 %v521, 0.17677669
      %v591 = vmul.f32 %v524, 0.17677669
      %v592 = vmul.f32 %v527, 0.17677669
      %v593 = vmul.f32 %v530, 0.17677669
      %v594 = vmul.f32 %v533, 0.17677669
      %v595 = vmul.f32 %v536, 0.17677669
      %v596 = vmul.f32 %v539, 0.17677669
      %v597 = vmul.f32 %v542, 0.17677669
      %v598 = vmul.f32 %v545, 0.17677669
      %v599 = vmul.f32 %v548, 0.17677669
      %v600 = vmul.f32 %v551, 0.17677669
      %v601 = vmul.f32 %v554, 0.17677669
      %v602 = vmul.f32 %v557, 0.17677669
      %v603 = vmul.f32 %v560, 0.17677669
      %v604 = vmul.f32 %v563, 0.17677669
      %v605 = vmul.f32 %v566, 0.17677669
      %v606 = vmul.f32 %v569, 0.17677669
      %v607 = vmul.f32 %v572, 0.17677669
      %v608 = vmul.f32 %v575, 0.17677669
      %v609 = vld [vmem:[%s294] sm:$0xff]
      %v610 = vld [vmem:[%s294 + $0x8] sm:$0xff]
      %v611 = vld [vmem:[%s294 + $0x10] sm:$0xff]
      %v612 = vld [vmem:[%s294 + $0x18] sm:$0xff]
      %v613 = vld [vmem:[%s294 + $0x20] sm:$0xff]
      %v614 = vld [vmem:[%s294 + $0x28] sm:$0xff]
      %v615 = vld [vmem:[%s294 + $0x30] sm:$0xff]
      %v616 = vld [vmem:[%s294 + $0x38] sm:$0xff]
      %v617 = vld [vmem:[%s294 + $0x40] sm:$0xff]
      %v618 = vld [vmem:[%s294 + $0x48] sm:$0xff]
      %v619 = vld [vmem:[%s294 + $0x50] sm:$0xff]
      %v620 = vld [vmem:[%s294 + $0x58] sm:$0xff]
      %v621 = vld [vmem:[%s294 + $0x60] sm:$0xff]
      %v622 = vld [vmem:[%s294 + $0x68] sm:$0xff]
      %v623 = vld [vmem:[%s294 + $0x70] sm:$0xff]
      %v624 = vld [vmem:[%s294 + $0x78] sm:$0xff]
      %v625 = vld [vmem:[%s294 + $0x80] sm:$0xff]
      %v626 = vld [vmem:[%s294 + $0x88] sm:$0xff]
      %v627 = vld [vmem:[%s294 + $0x90] sm:$0xff]
      %v628 = vld [vmem:[%s294 + $0x98] sm:$0xff]
      %v629 = vld [vmem:[%s294 + $0xa0] sm:$0xff]
      %v630 = vld [vmem:[%s294 + $0xa8] sm:$0xff]
      %v631 = vld [vmem:[%s294 + $0xb0] sm:$0xff]
      %v632 = vld [vmem:[%s294 + $0xb8] sm:$0xff]
      %v633 = vld [vmem:[%s294 + $0xc0] sm:$0xff]
      %v634 = vld [vmem:[%s294 + $0xc8] sm:$0xff]
      %v635 = vld [vmem:[%s294 + $0xd0] sm:$0xff]
      %v636 = vld [vmem:[%s294 + $0xd8] sm:$0xff]
      %v637 = vld [vmem:[%s294 + $0xe0] sm:$0xff]
      %v638 = vld [vmem:[%s294 + $0xe8] sm:$0xff]
      %v639 = vld [vmem:[%s294 + $0xf0] sm:$0xff]
      %v640 = vld [vmem:[%s294 + $0xf8] sm:$0xff]
      %s641 = scalar_lea.vmem %s3, 32
      %v642 = vld [vmem:[%s641] sm:$0xff]
      %v643 = vld [vmem:[%s641 + $0x8] sm:$0xff]
      %v644 = vld [vmem:[%s641 + $0x10] sm:$0xff]
      %v645 = vld [vmem:[%s641 + $0x18] sm:$0xff]
      %s646 = scalar_lea.vmem %s4, 1
      %v647 = vld [vmem:[%s646] sm:$0x1]
      %v649 = vperm.slane %v647, 0
      %v652 = vsel %vm355, %v609, 0
      %v655 = vsel %vm355, %v610, 0
      %v658 = vsel %vm355, %v611, 0
      %v661 = vsel %vm355, %v612, 0
      %v664 = vsel %vm355, %v613, 0
      %v667 = vsel %vm355, %v614, 0
      %v670 = vsel %vm355, %v615, 0
      %v673 = vsel %vm355, %v616, 0
      %v676 = vsel %vm355, %v617, 0
      %v679 = vsel %vm355, %v618, 0
      %v682 = vsel %vm355, %v619, 0
      %v685 = vsel %vm355, %v620, 0
      %v688 = vsel %vm355, %v621, 0
      %v691 = vsel %vm355, %v622, 0
      %v694 = vsel %vm355, %v623, 0
      %v697 = vsel %vm355, %v624, 0
      %v700 = vsel %vm355, %v625, 0
      %v703 = vsel %vm355, %v626, 0
      %v706 = vsel %vm355, %v627, 0
      %v709 = vsel %vm355, %v628, 0
      %v712 = vsel %vm355, %v629, 0
      %v715 = vsel %vm355, %v630, 0
      %v718 = vsel %vm355, %v631, 0
      %v721 = vsel %vm355, %v632, 0
      %v724 = vsel %vm355, %v633, 0
      %v727 = vsel %vm355, %v634, 0
      %v730 = vsel %vm355, %v635, 0
      %v733 = vsel %vm355, %v636, 0
      %v736 = vsel %vm355, %v637, 0
      %v739 = vsel %vm355, %v638, 0
      %v742 = vsel %vm355, %v639, 0
      %v745 = vsel %vm355, %v640, 0
      %v748 = vsel %vm355, %v642, 0
      %v751 = vsel %vm355, %v643, 0
      %v754 = vsel %vm355, %v644, 0
      %v757 = vsel %vm355, %v645, 0
      %759 = vmatpush.xpose.msra.mxu0 0.0
      %760 = vmatpush.xpose.msra.mxu0 0.0
      %761 = vmatpush.xpose.msra.mxu0 0.0
      %762 = vmatpush.xpose.msra.mxu0 0.0
      %763 = vmatpush.xpose.msra.mxu0 0.0
      %764 = vmatpush.xpose.msra.mxu0 0.0
      %765 = vmatpush.xpose.msra.mxu0 0.0
      %766 = vmatpush.xpose.msra.mxu0 0.0
      %767 = vmatpush.xpose.msra.mxu0 0.0
      %768 = vmatpush.xpose.msra.mxu0 0.0
      %769 = vmatpush.xpose.msra.mxu0 0.0
      %770 = vmatpush.xpose.msra.mxu0 0.0
      %771 = vmatpush.xpose.msra.mxu0 %v757
      %772 = vmatpush.xpose.msra.mxu0 %v754
      %773 = vmatpush.xpose.msra.mxu0 %v751
      %774 = vmatpush.xpose.msra.mxu0 %v748
      %775 = vmatmul.f32.gmra.mxu0 %v652
      %v776 = vpop.f32.mrf.mxu0
      %v777 = vadd.f32 %v649, %v776
      %778 = vmatmul.f32.gmra.mxu0 %v655
      %v779 = vpop.f32.mrf.mxu0
      %v780 = vadd.f32 %v649, %v779
      %781 = vmatmul.f32.gmra.mxu0 %v658
      %v782 = vpop.f32.mrf.mxu0
      %v783 = vadd.f32 %v649, %v782
      %784 = vmatmul.f32.gmra.mxu0 %v661
      %v785 = vpop.f32.mrf.mxu0
      %v786 = vadd.f32 %v649, %v785
      %787 = vmatmul.f32.gmra.mxu0 %v664
      %v788 = vpop.f32.mrf.mxu0
      %v789 = vadd.f32 %v649, %v788
      %790 = vmatmul.f32.gmra.mxu0 %v667
      %v791 = vpop.f32.mrf.mxu0
      %v792 = vadd.f32 %v649, %v791
      %793 = vmatmul.f32.gmra.mxu0 %v670
      %v794 = vpop.f32.mrf.mxu0
      %v795 = vadd.f32 %v649, %v794
      %796 = vmatmul.f32.gmra.mxu0 %v673
      %v797 = vpop.f32.mrf.mxu0
      %v798 = vadd.f32 %v649, %v797
      %799 = vmatmul.f32.gmra.mxu0 %v676
      %v800 = vpop.f32.mrf.mxu0
      %v801 = vadd.f32 %v649, %v800
      %802 = vmatmul.f32.gmra.mxu0 %v679
      %v803 = vpop.f32.mrf.mxu0
      %v804 = vadd.f32 %v649, %v803
      %805 = vmatmul.f32.gmra.mxu0 %v682
      %v806 = vpop.f32.mrf.mxu0
      %v807 = vadd.f32 %v649, %v806
      %808 = vmatmul.f32.gmra.mxu0 %v685
      %v809 = vpop.f32.mrf.mxu0
      %v810 = vadd.f32 %v649, %v809
      %811 = vmatmul.f32.gmra.mxu0 %v688
      %v812 = vpop.f32.mrf.mxu0
      %v813 = vadd.f32 %v649, %v812
      %814 = vmatmul.f32.gmra.mxu0 %v691
      %v815 = vpop.f32.mrf.mxu0
      %v816 = vadd.f32 %v649, %v815
      %817 = vmatmul.f32.gmra.mxu0 %v694
      %v818 = vpop.f32.mrf.mxu0
      %v819 = vadd.f32 %v649, %v818
      %820 = vmatmul.f32.gmra.mxu0 %v697
      %v821 = vpop.f32.mrf.mxu0
      %v822 = vadd.f32 %v649, %v821
      %823 = vmatmul.f32.gmra.mxu0 %v700
      %v824 = vpop.f32.mrf.mxu0
      %v825 = vadd.f32 %v649, %v824
      %826 = vmatmul.f32.gmra.mxu0 %v703
      %v827 = vpop.f32.mrf.mxu0
      %v828 = vadd.f32 %v649, %v827
      %829 = vmatmul.f32.gmra.mxu0 %v706
      %v830 = vpop.f32.mrf.mxu0
      %v831 = vadd.f32 %v649, %v830
      %832 = vmatmul.f32.gmra.mxu0 %v709
      %v833 = vpop.f32.mrf.mxu0
      %v834 = vadd.f32 %v649, %v833
      %835 = vmatmul.f32.gmra.mxu0 %v712
      %v836 = vpop.f32.mrf.mxu0
      %v837 = vadd.f32 %v649, %v836
      %838 = vmatmul.f32.gmra.mxu0 %v715
      %v839 = vpop.f32.mrf.mxu0
      %v840 = vadd.f32 %v649, %v839
      %841 = vmatmul.f32.gmra.mxu0 %v718
      %v842 = vpop.f32.mrf.mxu0
      %v843 = vadd.f32 %v649, %v842
      %844 = vmatmul.f32.gmra.mxu0 %v721
      %v845 = vpop.f32.mrf.mxu0
      %v846 = vadd.f32 %v649, %v845
      %847 = vmatmul.f32.gmra.mxu0 %v724
      %v848 = vpop.f32.mrf.mxu0
      %v849 = vadd.f32 %v649, %v848
      %850 = vmatmul.f32.gmra.mxu0 %v727
      %v851 = vpop.f32.mrf.mxu0
      %v852 = vadd.f32 %v649, %v851
      %853 = vmatmul.f32.gmra.mxu0 %v730
      %v854 = vpop.f32.mrf.mxu0
      %v855 = vadd.f32 %v649, %v854
      %856 = vmatmul.f32.gmra.mxu0 %v733
      %v857 = vpop.f32.mrf.mxu0
      %v858 = vadd.f32 %v649, %v857
      %859 = vmatmul.f32.gmra.mxu0 %v736
      %v860 = vpop.f32.mrf.mxu0
      %v861 = vadd.f32 %v649, %v860
      %862 = vmatmul.f32.gmra.mxu0 %v739
      %v863 = vpop.f32.mrf.mxu0
      %v864 = vadd.f32 %v649, %v863
      %865 = vmatmul.f32.gmra.mxu0 %v742
      %v866 = vpop.f32.mrf.mxu0
      %v867 = vadd.f32 %v649, %v866
      %868 = vmatmul.f32.gmra.mxu0 %v745
      %v869 = vpop.f32.mrf.mxu0
      %v870 = vadd.f32 %v649, %v869
      %871 = vdwg.mxu0
      %v872 = vld [vmem:[%s300] sm:$0xff]
      %v873 = vld [vmem:[%s300 + $0x8] sm:$0xff]
      %v874 = vld [vmem:[%s300 + $0x10] sm:$0xff]
      %v875 = vld [vmem:[%s300 + $0x18] sm:$0xff]
      %v876 = vld [vmem:[%s300 + $0x20] sm:$0xff]
      %v877 = vld [vmem:[%s300 + $0x28] sm:$0xff]
      %v878 = vld [vmem:[%s300 + $0x30] sm:$0xff]
      %v879 = vld [vmem:[%s300 + $0x38] sm:$0xff]
      %v880 = vld [vmem:[%s300 + $0x40] sm:$0xff]
      %v881 = vld [vmem:[%s300 + $0x48] sm:$0xff]
      %v882 = vld [vmem:[%s300 + $0x50] sm:$0xff]
      %v883 = vld [vmem:[%s300 + $0x58] sm:$0xff]
      %v884 = vld [vmem:[%s300 + $0x60] sm:$0xff]
      %v885 = vld [vmem:[%s300 + $0x68] sm:$0xff]
      %v886 = vld [vmem:[%s300 + $0x70] sm:$0xff]
      %v887 = vld [vmem:[%s300 + $0x78] sm:$0xff]
      %v888 = vld [vmem:[%s300 + $0x80] sm:$0xff]
      %v889 = vld [vmem:[%s300 + $0x88] sm:$0xff]
      %v890 = vld [vmem:[%s300 + $0x90] sm:$0xff]
      %v891 = vld [vmem:[%s300 + $0x98] sm:$0xff]
      %v892 = vld [vmem:[%s300 + $0xa0] sm:$0xff]
      %v893 = vld [vmem:[%s300 + $0xa8] sm:$0xff]
      %v894 = vld [vmem:[%s300 + $0xb0] sm:$0xff]
      %v895 = vld [vmem:[%s300 + $0xb8] sm:$0xff]
      %v896 = vld [vmem:[%s300 + $0xc0] sm:$0xff]
      %v897 = vld [vmem:[%s300 + $0xc8] sm:$0xff]
      %v898 = vld [vmem:[%s300 + $0xd0] sm:$0xff]
      %v899 = vld [vmem:[%s300 + $0xd8] sm:$0xff]
      %v900 = vld [vmem:[%s300 + $0xe0] sm:$0xff]
      %v901 = vld [vmem:[%s300 + $0xe8] sm:$0xff]
      %v902 = vld [vmem:[%s300 + $0xf0] sm:$0xff]
      %v903 = vld [vmem:[%s300 + $0xf8] sm:$0xff]
      %s904 = scalar_lea.vmem %s3, 64
      %v905 = vld [vmem:[%s904] sm:$0xff]
      %v906 = vld [vmem:[%s904 + $0x8] sm:$0xff]
      %v907 = vld [vmem:[%s904 + $0x10] sm:$0xff]
      %v908 = vld [vmem:[%s904 + $0x18] sm:$0xff]
      %s909 = scalar_lea.vmem %s4, 2
      %v910 = vld [vmem:[%s909] sm:$0x1]
      %v912 = vperm.slane %v910, 0
      %v915 = vsel %vm355, %v872, 0
      %v918 = vsel %vm355, %v873, 0
      %v921 = vsel %vm355, %v874, 0
      %v924 = vsel %vm355, %v875, 0
      %v927 = vsel %vm355, %v876, 0
      %v930 = vsel %vm355, %v877, 0
      %v933 = vsel %vm355, %v878, 0
      %v936 = vsel %vm355, %v879, 0
      %v939 = vsel %vm355, %v880, 0
      %v942 = vsel %vm355, %v881, 0
      %v945 = vsel %vm355, %v882, 0
      %v948 = vsel %vm355, %v883, 0
      %v951 = vsel %vm355, %v884, 0
      %v954 = vsel %vm355, %v885, 0
      %v957 = vsel %vm355, %v886, 0
      %v960 = vsel %vm355, %v887, 0
      %v963 = vsel %vm355, %v888, 0
      %v966 = vsel %vm355, %v889, 0
      %v969 = vsel %vm355, %v890, 0
      %v972 = vsel %vm355, %v891, 0
      %v975 = vsel %vm355, %v892, 0
      %v978 = vsel %vm355, %v893, 0
      %v981 = vsel %vm355, %v894, 0
      %v984 = vsel %vm355, %v895, 0
      %v987 = vsel %vm355, %v896, 0
      %v990 = vsel %vm355, %v897, 0
      %v993 = vsel %vm355, %v898, 0
      %v996 = vsel %vm355, %v899, 0
      %v999 = vsel %vm355, %v900, 0
      %v1002 = vsel %vm355, %v901, 0
      %v1005 = vsel %vm355, %v902, 0
      %v1008 = vsel %vm355, %v903, 0
      %v1011 = vsel %vm355, %v905, 0
      %v1014 = vsel %vm355, %v906, 0
      %v1017 = vsel %vm355, %v907, 0
      %v1020 = vsel %vm355, %v908, 0
      %1022 = vmatpush.xpose.msra.mxu0 0.0
      %1023 = vmatpush.xpose.msra.mxu0 0.0
      %1024 = vmatpush.xpose.msra.mxu0 0.0
      %1025 = vmatpush.xpose.msra.mxu0 0.0
      %1026 = vmatpush.xpose.msra.mxu0 0.0
      %1027 = vmatpush.xpose.msra.mxu0 0.0
      %1028 = vmatpush.xpose.msra.mxu0 0.0
      %1029 = vmatpush.xpose.msra.mxu0 0.0
      %1030 = vmatpush.xpose.msra.mxu0 0.0
      %1031 = vmatpush.xpose.msra.mxu0 0.0
      %1032 = vmatpush.xpose.msra.mxu0 0.0
      %1033 = vmatpush.xpose.msra.mxu0 0.0
      %1034 = vmatpush.xpose.msra.mxu0 %v1020
      %1035 = vmatpush.xpose.msra.mxu0 %v1017
      %1036 = vmatpush.xpose.msra.mxu0 %v1014
      %1037 = vmatpush.xpose.msra.mxu0 %v1011
      %1038 = vmatmul.f32.gmra.mxu0 %v915
      %v1039 = vpop.f32.mrf.mxu0
      %v1040 = vadd.f32 %v912, %v1039
      %1041 = vmatmul.f32.gmra.mxu0 %v918
      %v1042 = vpop.f32.mrf.mxu0
      %v1043 = vadd.f32 %v912, %v1042
      %1044 = vmatmul.f32.gmra.mxu0 %v921
      %v1045 = vpop.f32.mrf.mxu0
      %v1046 = vadd.f32 %v912, %v1045
      %1047 = vmatmul.f32.gmra.mxu0 %v924
      %v1048 = vpop.f32.mrf.mxu0
      %v1049 = vadd.f32 %v912, %v1048
      %1050 = vmatmul.f32.gmra.mxu0 %v927
      %v1051 = vpop.f32.mrf.mxu0
      %v1052 = vadd.f32 %v912, %v1051
      %1053 = vmatmul.f32.gmra.mxu0 %v930
      %v1054 = vpop.f32.mrf.mxu0
      %v1055 = vadd.f32 %v912, %v1054
      %1056 = vmatmul.f32.gmra.mxu0 %v933
      %v1057 = vpop.f32.mrf.mxu0
      %v1058 = vadd.f32 %v912, %v1057
      %1059 = vmatmul.f32.gmra.mxu0 %v936
      %v1060 = vpop.f32.mrf.mxu0
      %v1061 = vadd.f32 %v912, %v1060
      %1062 = vmatmul.f32.gmra.mxu0 %v939
      %v1063 = vpop.f32.mrf.mxu0
      %v1064 = vadd.f32 %v912, %v1063
      %1065 = vmatmul.f32.gmra.mxu0 %v942
      %v1066 = vpop.f32.mrf.mxu0
      %v1067 = vadd.f32 %v912, %v1066
      %1068 = vmatmul.f32.gmra.mxu0 %v945
      %v1069 = vpop.f32.mrf.mxu0
      %v1070 = vadd.f32 %v912, %v1069
      %1071 = vmatmul.f32.gmra.mxu0 %v948
      %v1072 = vpop.f32.mrf.mxu0
      %v1073 = vadd.f32 %v912, %v1072
      %1074 = vmatmul.f32.gmra.mxu0 %v951
      %v1075 = vpop.f32.mrf.mxu0
      %v1076 = vadd.f32 %v912, %v1075
      %1077 = vmatmul.f32.gmra.mxu0 %v954
      %v1078 = vpop.f32.mrf.mxu0
      %v1079 = vadd.f32 %v912, %v1078
      %1080 = vmatmul.f32.gmra.mxu0 %v957
      %v1081 = vpop.f32.mrf.mxu0
      %v1082 = vadd.f32 %v912, %v1081
      %1083 = vmatmul.f32.gmra.mxu0 %v960
      %v1084 = vpop.f32.mrf.mxu0
      %v1085 = vadd.f32 %v912, %v1084
      %1086 = vmatmul.f32.gmra.mxu0 %v963
      %v1087 = vpop.f32.mrf.mxu0
      %v1088 = vadd.f32 %v912, %v1087
      %1089 = vmatmul.f32.gmra.mxu0 %v966
      %v1090 = vpop.f32.mrf.mxu0
      %v1091 = vadd.f32 %v912, %v1090
      %1092 = vmatmul.f32.gmra.mxu0 %v969
      %v1093 = vpop.f32.mrf.mxu0
      %v1094 = vadd.f32 %v912, %v1093
      %1095 = vmatmul.f32.gmra.mxu0 %v972
      %v1096 = vpop.f32.mrf.mxu0
      %v1097 = vadd.f32 %v912, %v1096
      %1098 = vmatmul.f32.gmra.mxu0 %v975
      %v1099 = vpop.f32.mrf.mxu0
      %v1100 = vadd.f32 %v912, %v1099
      %1101 = vmatmul.f32.gmra.mxu0 %v978
      %v1102 = vpop.f32.mrf.mxu0
      %v1103 = vadd.f32 %v912, %v1102
      %1104 = vmatmul.f32.gmra.mxu0 %v981
      %v1105 = vpop.f32.mrf.mxu0
      %v1106 = vadd.f32 %v912, %v1105
      %1107 = vmatmul.f32.gmra.mxu0 %v984
      %v1108 = vpop.f32.mrf.mxu0
      %v1109 = vadd.f32 %v912, %v1108
      %1110 = vmatmul.f32.gmra.mxu0 %v987
      %v1111 = vpop.f32.mrf.mxu0
      %v1112 = vadd.f32 %v912, %v1111
      %1113 = vmatmul.f32.gmra.mxu0 %v990
      %v1114 = vpop.f32.mrf.mxu0
      %v1115 = vadd.f32 %v912, %v1114
      %1116 = vmatmul.f32.gmra.mxu0 %v993
      %v1117 = vpop.f32.mrf.mxu0
      %v1118 = vadd.f32 %v912, %v1117
      %1119 = vmatmul.f32.gmra.mxu0 %v996
      %v1120 = vpop.f32.mrf.mxu0
      %v1121 = vadd.f32 %v912, %v1120
      %1122 = vmatmul.f32.gmra.mxu0 %v999
      %v1123 = vpop.f32.mrf.mxu0
      %v1124 = vadd.f32 %v912, %v1123
      %1125 = vmatmul.f32.gmra.mxu0 %v1002
      %v1126 = vpop.f32.mrf.mxu0
      %v1127 = vadd.f32 %v912, %v1126
      %1128 = vmatmul.f32.gmra.mxu0 %v1005
      %v1129 = vpop.f32.mrf.mxu0
      %v1130 = vadd.f32 %v912, %v1129
      %1131 = vmatmul.f32.gmra.mxu0 %v1008
      %v1132 = vpop.f32.mrf.mxu0
      %v1133 = vadd.f32 %v912, %v1132
      %1134 = vdwg.mxu0
      %v1136 = vsel %vm355, %v577, 0
      %v1139 = vsel %vm355, %v777, 0
      %1141 = vmatpush.xpose.msra.mxu0 0.0
      %1142 = vmatpush.xpose.msra.mxu0 0.0
      %1143 = vmatpush.xpose.msra.mxu0 0.0
      %1144 = vmatpush.xpose.msra.mxu0 0.0
      %1145 = vmatpush.xpose.msra.mxu0 0.0
      %1146 = vmatpush.xpose.msra.mxu0 0.0
      %1147 = vmatpush.xpose.msra.mxu0 0.0
      %1148 = vmatpush.xpose.msra.mxu0 0.0
      %1149 = vmatpush.xpose.msra.mxu0 0.0
      %1150 = vmatpush.xpose.msra.mxu0 0.0
      %1151 = vmatpush.xpose.msra.mxu0 0.0
      %1152 = vmatpush.xpose.msra.mxu0 0.0
      %1153 = vmatpush.xpose.msra.mxu0 0.0
      %1154 = vmatpush.xpose.msra.mxu0 0.0
      %1155 = vmatpush.xpose.msra.mxu0 0.0
      %1156 = vmatpush.xpose.msra.mxu0 %v1139
      %1157 = vmatmul.f32.gmra.mxu0 %v1136
      %v1158 = vpop.f32.mrf.mxu0
      %v1159 = vadd.f32 0.0, %v1158
      %1160 = vdwg.mxu0
      %v1162 = vsel %vm355, %v578, 0
      %v1165 = vsel %vm355, %v780, 0
      %1167 = vmatpush.xpose.msra.mxu0 0.0
      %1168 = vmatpush.xpose.msra.mxu0 0.0
      %1169 = vmatpush.xpose.msra.mxu0 0.0
      %1170 = vmatpush.xpose.msra.mxu0 0.0
      %1171 = vmatpush.xpose.msra.mxu0 0.0
      %1172 = vmatpush.xpose.msra.mxu0 0.0
      %1173 = vmatpush.xpose.msra.mxu0 0.0
      %1174 = vmatpush.xpose.msra.mxu0 0.0
      %1175 = vmatpush.xpose.msra.mxu0 0.0
      %1176 = vmatpush.xpose.msra.mxu0 0.0
      %1177 = vmatpush.xpose.msra.mxu0 0.0
      %1178 = vmatpush.xpose.msra.mxu0 0.0
      %1179 = vmatpush.xpose.msra.mxu0 0.0
      %1180 = vmatpush.xpose.msra.mxu0 0.0
      %1181 = vmatpush.xpose.msra.mxu0 0.0
      %1182 = vmatpush.xpose.msra.mxu0 %v1165
      %1183 = vmatmul.f32.gmra.mxu0 %v1162
      %v1184 = vpop.f32.mrf.mxu0
      %v1185 = vadd.f32 0.0, %v1184
      %1186 = vdwg.mxu0
      %v1188 = vsel %vm355, %v579, 0
      %v1191 = vsel %vm355, %v783, 0
      %1193 = vmatpush.xpose.msra.mxu0 0.0
      %1194 = vmatpush.xpose.msra.mxu0 0.0
      %1195 = vmatpush.xpose.msra.mxu0 0.0
      %1196 = vmatpush.xpose.msra.mxu0 0.0
      %1197 = vmatpush.xpose.msra.mxu0 0.0
      %1198 = vmatpush.xpose.msra.mxu0 0.0
      %1199 = vmatpush.xpose.msra.mxu0 0.0
      %1200 = vmatpush.xpose.msra.mxu0 0.0
      %1201 = vmatpush.xpose.msra.mxu0 0.0
      %1202 = vmatpush.xpose.msra.mxu0 0.0
      %1203 = vmatpush.xpose.msra.mxu0 0.0
      %1204 = vmatpush.xpose.msra.mxu0 0.0
      %1205 = vmatpush.xpose.msra.mxu0 0.0
      %1206 = vmatpush.xpose.msra.mxu0 0.0
      %1207 = vmatpush.xpose.msra.mxu0 0.0
      %1208 = vmatpush.xpose.msra.mxu0 %v1191
      %1209 = vmatmul.f32.gmra.mxu0 %v1188
      %v1210 = vpop.f32.mrf.mxu0
      %v1211 = vadd.f32 0.0, %v1210
      %1212 = vdwg.mxu0
      %v1214 = vsel %vm355, %v580, 0
      %v1217 = vsel %vm355, %v786, 0
      %1219 = vmatpush.xpose.msra.mxu0 0.0
      %1220 = vmatpush.xpose.msra.mxu0 0.0
      %1221 = vmatpush.xpose.msra.mxu0 0.0
      %1222 = vmatpush.xpose.msra.mxu0 0.0
      %1223 = vmatpush.xpose.msra.mxu0 0.0
      %1224 = vmatpush.xpose.msra.mxu0 0.0
      %1225 = vmatpush.xpose.msra.mxu0 0.0
      %1226 = vmatpush.xpose.msra.mxu0 0.0
      %1227 = vmatpush.xpose.msra.mxu0 0.0
      %1228 = vmatpush.xpose.msra.mxu0 0.0
      %1229 = vmatpush.xpose.msra.mxu0 0.0
      %1230 = vmatpush.xpose.msra.mxu0 0.0
      %1231 = vmatpush.xpose.msra.mxu0 0.0
      %1232 = vmatpush.xpose.msra.mxu0 0.0
      %1233 = vmatpush.xpose.msra.mxu0 0.0
      %1234 = vmatpush.xpose.msra.mxu0 %v1217
      %1235 = vmatmul.f32.gmra.mxu0 %v1214
      %v1236 = vpop.f32.mrf.mxu0
      %v1237 = vadd.f32 0.0, %v1236
      %1238 = vdwg.mxu0
      %v1240 = vsel %vm355, %v581, 0
      %v1243 = vsel %vm355, %v789, 0
      %1245 = vmatpush.xpose.msra.mxu0 0.0
      %1246 = vmatpush.xpose.msra.mxu0 0.0
      %1247 = vmatpush.xpose.msra.mxu0 0.0
      %1248 = vmatpush.xpose.msra.mxu0 0.0
      %1249 = vmatpush.xpose.msra.mxu0 0.0
      %1250 = vmatpush.xpose.msra.mxu0 0.0
      %1251 = vmatpush.xpose.msra.mxu0 0.0
      %1252 = vmatpush.xpose.msra.mxu0 0.0
      %1253 = vmatpush.xpose.msra.mxu0 0.0
      %1254 = vmatpush.xpose.msra.mxu0 0.0
      %1255 = vmatpush.xpose.msra.mxu0 0.0
      %1256 = vmatpush.xpose.msra.mxu0 0.0
      %1257 = vmatpush.xpose.msra.mxu0 0.0
      %1258 = vmatpush.xpose.msra.mxu0 0.0
      %1259 = vmatpush.xpose.msra.mxu0 0.0
      %1260 = vmatpush.xpose.msra.mxu0 %v1243
      %1261 = vmatmul.f32.gmra.mxu0 %v1240
      %v1262 = vpop.f32.mrf.mxu0
      %v1263 = vadd.f32 0.0, %v1262
      %1264 = vdwg.mxu0
      %v1266 = vsel %vm355, %v582, 0
      %v1269 = vsel %vm355, %v792, 0
      %1271 = vmatpush.xpose.msra.mxu0 0.0
      %1272 = vmatpush.xpose.msra.mxu0 0.0
      %1273 = vmatpush.xpose.msra.mxu0 0.0
      %1274 = vmatpush.xpose.msra.mxu0 0.0
      %1275 = vmatpush.xpose.msra.mxu0 0.0
      %1276 = vmatpush.xpose.msra.mxu0 0.0
      %1277 = vmatpush.xpose.msra.mxu0 0.0
      %1278 = vmatpush.xpose.msra.mxu0 0.0
      %1279 = vmatpush.xpose.msra.mxu0 0.0
      %1280 = vmatpush.xpose.msra.mxu0 0.0
      %1281 = vmatpush.xpose.msra.mxu0 0.0
      %1282 = vmatpush.xpose.msra.mxu0 0.0
      %1283 = vmatpush.xpose.msra.mxu0 0.0
      %1284 = vmatpush.xpose.msra.mxu0 0.0
      %1285 = vmatpush.xpose.msra.mxu0 0.0
      %1286 = vmatpush.xpose.msra.mxu0 %v1269
      %1287 = vmatmul.f32.gmra.mxu0 %v1266
      %v1288 = vpop.f32.mrf.mxu0
      %v1289 = vadd.f32 0.0, %v1288
      %1290 = vdwg.mxu0
      %v1292 = vsel %vm355, %v583, 0
      %v1295 = vsel %vm355, %v795, 0
      %1297 = vmatpush.xpose.msra.mxu0 0.0
      %1298 = vmatpush.xpose.msra.mxu0 0.0
      %1299 = vmatpush.xpose.msra.mxu0 0.0
      %1300 = vmatpush.xpose.msra.mxu0 0.0
      %1301 = vmatpush.xpose.msra.mxu0 0.0
      %1302 = vmatpush.xpose.msra.mxu0 0.0
      %1303 = vmatpush.xpose.msra.mxu0 0.0
      %1304 = vmatpush.xpose.msra.mxu0 0.0
      %1305 = vmatpush.xpose.msra.mxu0 0.0
      %1306 = vmatpush.xpose.msra.mxu0 0.0
      %1307 = vmatpush.xpose.msra.mxu0 0.0
      %1308 = vmatpush.xpose.msra.mxu0 0.0
      %1309 = vmatpush.xpose.msra.mxu0 0.0
      %1310 = vmatpush.xpose.msra.mxu0 0.0
      %1311 = vmatpush.xpose.msra.mxu0 0.0
      %1312 = vmatpush.xpose.msra.mxu0 %v1295
      %1313 = vmatmul.f32.gmra.mxu0 %v1292
      %v1314 = vpop.f32.mrf.mxu0
      %v1315 = vadd.f32 0.0, %v1314
      %1316 = vdwg.mxu0
      %v1318 = vsel %vm355, %v584, 0
      %v1321 = vsel %vm355, %v798, 0
      %1323 = vmatpush.xpose.msra.mxu0 0.0
      %1324 = vmatpush.xpose.msra.mxu0 0.0
      %1325 = vmatpush.xpose.msra.mxu0 0.0
      %1326 = vmatpush.xpose.msra.mxu0 0.0
      %1327 = vmatpush.xpose.msra.mxu0 0.0
      %1328 = vmatpush.xpose.msra.mxu0 0.0
      %1329 = vmatpush.xpose.msra.mxu0 0.0
      %1330 = vmatpush.xpose.msra.mxu0 0.0
      %1331 = vmatpush.xpose.msra.mxu0 0.0
      %1332 = vmatpush.xpose.msra.mxu0 0.0
      %1333 = vmatpush.xpose.msra.mxu0 0.0
      %1334 = vmatpush.xpose.msra.mxu0 0.0
      %1335 = vmatpush.xpose.msra.mxu0 0.0
      %1336 = vmatpush.xpose.msra.mxu0 0.0
      %1337 = vmatpush.xpose.msra.mxu0 0.0
      %1338 = vmatpush.xpose.msra.mxu0 %v1321
      %1339 = vmatmul.f32.gmra.mxu0 %v1318
      %v1340 = vpop.f32.mrf.mxu0
      %v1341 = vadd.f32 0.0, %v1340
      %1342 = vdwg.mxu0
      %v1344 = vsel %vm355, %v585, 0
      %v1347 = vsel %vm355, %v801, 0
      %1349 = vmatpush.xpose.msra.mxu0 0.0
      %1350 = vmatpush.xpose.msra.mxu0 0.0
      %1351 = vmatpush.xpose.msra.mxu0 0.0
      %1352 = vmatpush.xpose.msra.mxu0 0.0
      %1353 = vmatpush.xpose.msra.mxu0 0.0
      %1354 = vmatpush.xpose.msra.mxu0 0.0
      %1355 = vmatpush.xpose.msra.mxu0 0.0
      %1356 = vmatpush.xpose.msra.mxu0 0.0
      %1357 = vmatpush.xpose.msra.mxu0 0.0
      %1358 = vmatpush.xpose.msra.mxu0 0.0
      %1359 = vmatpush.xpose.msra.mxu0 0.0
      %1360 = vmatpush.xpose.msra.mxu0 0.0
      %1361 = vmatpush.xpose.msra.mxu0 0.0
      %1362 = vmatpush.xpose.msra.mxu0 0.0
      %1363 = vmatpush.xpose.msra.mxu0 0.0
      %1364 = vmatpush.xpose.msra.mxu0 %v1347
      %1365 = vmatmul.f32.gmra.mxu0 %v1344
      %v1366 = vpop.f32.mrf.mxu0
      %v1367 = vadd.f32 0.0, %v1366
      %1368 = vdwg.mxu0
      %v1370 = vsel %vm355, %v586, 0
      %v1373 = vsel %vm355, %v804, 0
      %1375 = vmatpush.xpose.msra.mxu0 0.0
      %1376 = vmatpush.xpose.msra.mxu0 0.0
      %1377 = vmatpush.xpose.msra.mxu0 0.0
      %1378 = vmatpush.xpose.msra.mxu0 0.0
      %1379 = vmatpush.xpose.msra.mxu0 0.0
      %1380 = vmatpush.xpose.msra.mxu0 0.0
      %1381 = vmatpush.xpose.msra.mxu0 0.0
      %1382 = vmatpush.xpose.msra.mxu0 0.0
      %1383 = vmatpush.xpose.msra.mxu0 0.0
      %1384 = vmatpush.xpose.msra.mxu0 0.0
      %1385 = vmatpush.xpose.msra.mxu0 0.0
      %1386 = vmatpush.xpose.msra.mxu0 0.0
      %1387 = vmatpush.xpose.msra.mxu0 0.0
      %1388 = vmatpush.xpose.msra.mxu0 0.0
      %1389 = vmatpush.xpose.msra.mxu0 0.0
      %1390 = vmatpush.xpose.msra.mxu0 %v1373
      %1391 = vmatmul.f32.gmra.mxu0 %v1370
      %v1392 = vpop.f32.mrf.mxu0
      %v1393 = vadd.f32 0.0, %v1392
      %1394 = vdwg.mxu0
      %v1396 = vsel %vm355, %v587, 0
      %v1399 = vsel %vm355, %v807, 0
      %1401 = vmatpush.xpose.msra.mxu0 0.0
      %1402 = vmatpush.xpose.msra.mxu0 0.0
      %1403 = vmatpush.xpose.msra.mxu0 0.0
      %1404 = vmatpush.xpose.msra.mxu0 0.0
      %1405 = vmatpush.xpose.msra.mxu0 0.0
      %1406 = vmatpush.xpose.msra.mxu0 0.0
      %1407 = vmatpush.xpose.msra.mxu0 0.0
      %1408 = vmatpush.xpose.msra.mxu0 0.0
      %1409 = vmatpush.xpose.msra.mxu0 0.0
      %1410 = vmatpush.xpose.msra.mxu0 0.0
      %1411 = vmatpush.xpose.msra.mxu0 0.0
      %1412 = vmatpush.xpose.msra.mxu0 0.0
      %1413 = vmatpush.xpose.msra.mxu0 0.0
      %1414 = vmatpush.xpose.msra.mxu0 0.0
      %1415 = vmatpush.xpose.msra.mxu0 0.0
      %1416 = vmatpush.xpose.msra.mxu0 %v1399
      %1417 = vmatmul.f32.gmra.mxu0 %v1396
      %v1418 = vpop.f32.mrf.mxu0
      %v1419 = vadd.f32 0.0, %v1418
      %1420 = vdwg.mxu0
      %v1422 = vsel %vm355, %v588, 0
      %v1425 = vsel %vm355, %v810, 0
      %1427 = vmatpush.xpose.msra.mxu0 0.0
      %1428 = vmatpush.xpose.msra.mxu0 0.0
      %1429 = vmatpush.xpose.msra.mxu0 0.0
      %1430 = vmatpush.xpose.msra.mxu0 0.0
      %1431 = vmatpush.xpose.msra.mxu0 0.0
      %1432 = vmatpush.xpose.msra.mxu0 0.0
      %1433 = vmatpush.xpose.msra.mxu0 0.0
      %1434 = vmatpush.xpose.msra.mxu0 0.0
      %1435 = vmatpush.xpose.msra.mxu0 0.0
      %1436 = vmatpush.xpose.msra.mxu0 0.0
      %1437 = vmatpush.xpose.msra.mxu0 0.0
      %1438 = vmatpush.xpose.msra.mxu0 0.0
      %1439 = vmatpush.xpose.msra.mxu0 0.0
      %1440 = vmatpush.xpose.msra.mxu0 0.0
      %1441 = vmatpush.xpose.msra.mxu0 0.0
      %1442 = vmatpush.xpose.msra.mxu0 %v1425
      %1443 = vmatmul.f32.gmra.mxu0 %v1422
      %v1444 = vpop.f32.mrf.mxu0
      %v1445 = vadd.f32 0.0, %v1444
      %1446 = vdwg.mxu0
      %v1448 = vsel %vm355, %v589, 0
      %v1451 = vsel %vm355, %v813, 0
      %1453 = vmatpush.xpose.msra.mxu0 0.0
      %1454 = vmatpush.xpose.msra.mxu0 0.0
      %1455 = vmatpush.xpose.msra.mxu0 0.0
      %1456 = vmatpush.xpose.msra.mxu0 0.0
      %1457 = vmatpush.xpose.msra.mxu0 0.0
      %1458 = vmatpush.xpose.msra.mxu0 0.0
      %1459 = vmatpush.xpose.msra.mxu0 0.0
      %1460 = vmatpush.xpose.msra.mxu0 0.0
      %1461 = vmatpush.xpose.msra.mxu0 0.0
      %1462 = vmatpush.xpose.msra.mxu0 0.0
      %1463 = vmatpush.xpose.msra.mxu0 0.0
      %1464 = vmatpush.xpose.msra.mxu0 0.0
      %1465 = vmatpush.xpose.msra.mxu0 0.0
      %1466 = vmatpush.xpose.msra.mxu0 0.0
      %1467 = vmatpush.xpose.msra.mxu0 0.0
      %1468 = vmatpush.xpose.msra.mxu0 %v1451
      %1469 = vmatmul.f32.gmra.mxu0 %v1448
      %v1470 = vpop.f32.mrf.mxu0
      %v1471 = vadd.f32 0.0, %v1470
      %1472 = vdwg.mxu0
      %v1474 = vsel %vm355, %v590, 0
      %v1477 = vsel %vm355, %v816, 0
      %1479 = vmatpush.xpose.msra.mxu0 0.0
      %1480 = vmatpush.xpose.msra.mxu0 0.0
      %1481 = vmatpush.xpose.msra.mxu0 0.0
      %1482 = vmatpush.xpose.msra.mxu0 0.0
      %1483 = vmatpush.xpose.msra.mxu0 0.0
      %1484 = vmatpush.xpose.msra.mxu0 0.0
      %1485 = vmatpush.xpose.msra.mxu0 0.0
      %1486 = vmatpush.xpose.msra.mxu0 0.0
      %1487 = vmatpush.xpose.msra.mxu0 0.0
      %1488 = vmatpush.xpose.msra.mxu0 0.0
      %1489 = vmatpush.xpose.msra.mxu0 0.0
      %1490 = vmatpush.xpose.msra.mxu0 0.0
      %1491 = vmatpush.xpose.msra.mxu0 0.0
      %1492 = vmatpush.xpose.msra.mxu0 0.0
      %1493 = vmatpush.xpose.msra.mxu0 0.0
      %1494 = vmatpush.xpose.msra.mxu0 %v1477
      %1495 = vmatmul.f32.gmra.mxu0 %v1474
      %v1496 = vpop.f32.mrf.mxu0
      %v1497 = vadd.f32 0.0, %v1496
      %1498 = vdwg.mxu0
      %v1500 = vsel %vm355, %v591, 0
      %v1503 = vsel %vm355, %v819, 0
      %1505 = vmatpush.xpose.msra.mxu0 0.0
      %1506 = vmatpush.xpose.msra.mxu0 0.0
      %1507 = vmatpush.xpose.msra.mxu0 0.0
      %1508 = vmatpush.xpose.msra.mxu0 0.0
      %1509 = vmatpush.xpose.msra.mxu0 0.0
      %1510 = vmatpush.xpose.msra.mxu0 0.0
      %1511 = vmatpush.xpose.msra.mxu0 0.0
      %1512 = vmatpush.xpose.msra.mxu0 0.0
      %1513 = vmatpush.xpose.msra.mxu0 0.0
      %1514 = vmatpush.xpose.msra.mxu0 0.0
      %1515 = vmatpush.xpose.msra.mxu0 0.0
      %1516 = vmatpush.xpose.msra.mxu0 0.0
      %1517 = vmatpush.xpose.msra.mxu0 0.0
      %1518 = vmatpush.xpose.msra.mxu0 0.0
      %1519 = vmatpush.xpose.msra.mxu0 0.0
      %1520 = vmatpush.xpose.msra.mxu0 %v1503
      %1521 = vmatmul.f32.gmra.mxu0 %v1500
      %v1522 = vpop.f32.mrf.mxu0
      %v1523 = vadd.f32 0.0, %v1522
      %1524 = vdwg.mxu0
      %v1526 = vsel %vm355, %v592, 0
      %v1529 = vsel %vm355, %v822, 0
      %1531 = vmatpush.xpose.msra.mxu0 0.0
      %1532 = vmatpush.xpose.msra.mxu0 0.0
      %1533 = vmatpush.xpose.msra.mxu0 0.0
      %1534 = vmatpush.xpose.msra.mxu0 0.0
      %1535 = vmatpush.xpose.msra.mxu0 0.0
      %1536 = vmatpush.xpose.msra.mxu0 0.0
      %1537 = vmatpush.xpose.msra.mxu0 0.0
      %1538 = vmatpush.xpose.msra.mxu0 0.0
      %1539 = vmatpush.xpose.msra.mxu0 0.0
      %1540 = vmatpush.xpose.msra.mxu0 0.0
      %1541 = vmatpush.xpose.msra.mxu0 0.0
      %1542 = vmatpush.xpose.msra.mxu0 0.0
      %1543 = vmatpush.xpose.msra.mxu0 0.0
      %1544 = vmatpush.xpose.msra.mxu0 0.0
      %1545 = vmatpush.xpose.msra.mxu0 0.0
      %1546 = vmatpush.xpose.msra.mxu0 %v1529
      %1547 = vmatmul.f32.gmra.mxu0 %v1526
      %v1548 = vpop.f32.mrf.mxu0
      %v1549 = vadd.f32 0.0, %v1548
      %1550 = vdwg.mxu0
      %v1552 = vsel %vm355, %v593, 0
      %v1555 = vsel %vm355, %v825, 0
      %1557 = vmatpush.xpose.msra.mxu0 0.0
      %1558 = vmatpush.xpose.msra.mxu0 0.0
      %1559 = vmatpush.xpose.msra.mxu0 0.0
      %1560 = vmatpush.xpose.msra.mxu0 0.0
      %1561 = vmatpush.xpose.msra.mxu0 0.0
      %1562 = vmatpush.xpose.msra.mxu0 0.0
      %1563 = vmatpush.xpose.msra.mxu0 0.0
      %1564 = vmatpush.xpose.msra.mxu0 0.0
      %1565 = vmatpush.xpose.msra.mxu0 0.0
      %1566 = vmatpush.xpose.msra.mxu0 0.0
      %1567 = vmatpush.xpose.msra.mxu0 0.0
      %1568 = vmatpush.xpose.msra.mxu0 0.0
      %1569 = vmatpush.xpose.msra.mxu0 0.0
      %1570 = vmatpush.xpose.msra.mxu0 0.0
      %1571 = vmatpush.xpose.msra.mxu0 0.0
      %1572 = vmatpush.xpose.msra.mxu0 %v1555
      %1573 = vmatmul.f32.gmra.mxu0 %v1552
      %v1574 = vpop.f32.mrf.mxu0
      %v1575 = vadd.f32 0.0, %v1574
      %1576 = vdwg.mxu0
      %v1578 = vsel %vm355, %v594, 0
      %v1581 = vsel %vm355, %v828, 0
      %1583 = vmatpush.xpose.msra.mxu0 0.0
      %1584 = vmatpush.xpose.msra.mxu0 0.0
      %1585 = vmatpush.xpose.msra.mxu0 0.0
      %1586 = vmatpush.xpose.msra.mxu0 0.0
      %1587 = vmatpush.xpose.msra.mxu0 0.0
      %1588 = vmatpush.xpose.msra.mxu0 0.0
      %1589 = vmatpush.xpose.msra.mxu0 0.0
      %1590 = vmatpush.xpose.msra.mxu0 0.0
      %1591 = vmatpush.xpose.msra.mxu0 0.0
      %1592 = vmatpush.xpose.msra.mxu0 0.0
      %1593 = vmatpush.xpose.msra.mxu0 0.0
      %1594 = vmatpush.xpose.msra.mxu0 0.0
      %1595 = vmatpush.xpose.msra.mxu0 0.0
      %1596 = vmatpush.xpose.msra.mxu0 0.0
      %1597 = vmatpush.xpose.msra.mxu0 0.0
      %1598 = vmatpush.xpose.msra.mxu0 %v1581
      %1599 = vmatmul.f32.gmra.mxu0 %v1578
      %v1600 = vpop.f32.mrf.mxu0
      %v1601 = vadd.f32 0.0, %v1600
      %1602 = vdwg.mxu0
      %v1604 = vsel %vm355, %v595, 0
      %v1607 = vsel %vm355, %v831, 0
      %1609 = vmatpush.xpose.msra.mxu0 0.0
      %1610 = vmatpush.xpose.msra.mxu0 0.0
      %1611 = vmatpush.xpose.msra.mxu0 0.0
      %1612 = vmatpush.xpose.msra.mxu0 0.0
      %1613 = vmatpush.xpose.msra.mxu0 0.0
      %1614 = vmatpush.xpose.msra.mxu0 0.0
      %1615 = vmatpush.xpose.msra.mxu0 0.0
      %1616 = vmatpush.xpose.msra.mxu0 0.0
      %1617 = vmatpush.xpose.msra.mxu0 0.0
      %1618 = vmatpush.xpose.msra.mxu0 0.0
      %1619 = vmatpush.xpose.msra.mxu0 0.0
      %1620 = vmatpush.xpose.msra.mxu0 0.0
      %1621 = vmatpush.xpose.msra.mxu0 0.0
      %1622 = vmatpush.xpose.msra.mxu0 0.0
      %1623 = vmatpush.xpose.msra.mxu0 0.0
      %1624 = vmatpush.xpose.msra.mxu0 %v1607
      %1625 = vmatmul.f32.gmra.mxu0 %v1604
      %v1626 = vpop.f32.mrf.mxu0
      %v1627 = vadd.f32 0.0, %v1626
      %1628 = vdwg.mxu0
      %v1630 = vsel %vm355, %v596, 0
      %v1633 = vsel %vm355, %v834, 0
      %1635 = vmatpush.xpose.msra.mxu0 0.0
      %1636 = vmatpush.xpose.msra.mxu0 0.0
      %1637 = vmatpush.xpose.msra.mxu0 0.0
      %1638 = vmatpush.xpose.msra.mxu0 0.0
      %1639 = vmatpush.xpose.msra.mxu0 0.0
      %1640 = vmatpush.xpose.msra.mxu0 0.0
      %1641 = vmatpush.xpose.msra.mxu0 0.0
      %1642 = vmatpush.xpose.msra.mxu0 0.0
      %1643 = vmatpush.xpose.msra.mxu0 0.0
      %1644 = vmatpush.xpose.msra.mxu0 0.0
      %1645 = vmatpush.xpose.msra.mxu0 0.0
      %1646 = vmatpush.xpose.msra.mxu0 0.0
      %1647 = vmatpush.xpose.msra.mxu0 0.0
      %1648 = vmatpush.xpose.msra.mxu0 0.0
      %1649 = vmatpush.xpose.msra.mxu0 0.0
      %1650 = vmatpush.xpose.msra.mxu0 %v1633
      %1651 = vmatmul.f32.gmra.mxu0 %v1630
      %v1652 = vpop.f32.mrf.mxu0
      %v1653 = vadd.f32 0.0, %v1652
      %1654 = vdwg.mxu0
      %v1656 = vsel %vm355, %v597, 0
      %v1659 = vsel %vm355, %v837, 0
      %1661 = vmatpush.xpose.msra.mxu0 0.0
      %1662 = vmatpush.xpose.msra.mxu0 0.0
      %1663 = vmatpush.xpose.msra.mxu0 0.0
      %1664 = vmatpush.xpose.msra.mxu0 0.0
      %1665 = vmatpush.xpose.msra.mxu0 0.0
      %1666 = vmatpush.xpose.msra.mxu0 0.0
      %1667 = vmatpush.xpose.msra.mxu0 0.0
      %1668 = vmatpush.xpose.msra.mxu0 0.0
      %1669 = vmatpush.xpose.msra.mxu0 0.0
      %1670 = vmatpush.xpose.msra.mxu0 0.0
      %1671 = vmatpush.xpose.msra.mxu0 0.0
      %1672 = vmatpush.xpose.msra.mxu0 0.0
      %1673 = vmatpush.xpose.msra.mxu0 0.0
      %1674 = vmatpush.xpose.msra.mxu0 0.0
      %1675 = vmatpush.xpose.msra.mxu0 0.0
      %1676 = vmatpush.xpose.msra.mxu0 %v1659
      %1677 = vmatmul.f32.gmra.mxu0 %v1656
      %v1678 = vpop.f32.mrf.mxu0
      %v1679 = vadd.f32 0.0, %v1678
      %1680 = vdwg.mxu0
      %v1682 = vsel %vm355, %v598, 0
      %v1685 = vsel %vm355, %v840, 0
      %1687 = vmatpush.xpose.msra.mxu0 0.0
      %1688 = vmatpush.xpose.msra.mxu0 0.0
      %1689 = vmatpush.xpose.msra.mxu0 0.0
      %1690 = vmatpush.xpose.msra.mxu0 0.0
      %1691 = vmatpush.xpose.msra.mxu0 0.0
      %1692 = vmatpush.xpose.msra.mxu0 0.0
      %1693 = vmatpush.xpose.msra.mxu0 0.0
      %1694 = vmatpush.xpose.msra.mxu0 0.0
      %1695 = vmatpush.xpose.msra.mxu0 0.0
      %1696 = vmatpush.xpose.msra.mxu0 0.0
      %1697 = vmatpush.xpose.msra.mxu0 0.0
      %1698 = vmatpush.xpose.msra.mxu0 0.0
      %1699 = vmatpush.xpose.msra.mxu0 0.0
      %1700 = vmatpush.xpose.msra.mxu0 0.0
      %1701 = vmatpush.xpose.msra.mxu0 0.0
      %1702 = vmatpush.xpose.msra.mxu0 %v1685
      %1703 = vmatmul.f32.gmra.mxu0 %v1682
      %v1704 = vpop.f32.mrf.mxu0
      %v1705 = vadd.f32 0.0, %v1704
      %1706 = vdwg.mxu0
      %v1708 = vsel %vm355, %v599, 0
      %v1711 = vsel %vm355, %v843, 0
      %1713 = vmatpush.xpose.msra.mxu0 0.0
      %1714 = vmatpush.xpose.msra.mxu0 0.0
      %1715 = vmatpush.xpose.msra.mxu0 0.0
      %1716 = vmatpush.xpose.msra.mxu0 0.0
      %1717 = vmatpush.xpose.msra.mxu0 0.0
      %1718 = vmatpush.xpose.msra.mxu0 0.0
      %1719 = vmatpush.xpose.msra.mxu0 0.0
      %1720 = vmatpush.xpose.msra.mxu0 0.0
      %1721 = vmatpush.xpose.msra.mxu0 0.0
      %1722 = vmatpush.xpose.msra.mxu0 0.0
      %1723 = vmatpush.xpose.msra.mxu0 0.0
      %1724 = vmatpush.xpose.msra.mxu0 0.0
      %1725 = vmatpush.xpose.msra.mxu0 0.0
      %1726 = vmatpush.xpose.msra.mxu0 0.0
      %1727 = vmatpush.xpose.msra.mxu0 0.0
      %1728 = vmatpush.xpose.msra.mxu0 %v1711
      %1729 = vmatmul.f32.gmra.mxu0 %v1708
      %v1730 = vpop.f32.mrf.mxu0
      %v1731 = vadd.f32 0.0, %v1730
      %1732 = vdwg.mxu0
      %v1734 = vsel %vm355, %v600, 0
      %v1737 = vsel %vm355, %v846, 0
      %1739 = vmatpush.xpose.msra.mxu0 0.0
      %1740 = vmatpush.xpose.msra.mxu0 0.0
      %1741 = vmatpush.xpose.msra.mxu0 0.0
      %1742 = vmatpush.xpose.msra.mxu0 0.0
      %1743 = vmatpush.xpose.msra.mxu0 0.0
      %1744 = vmatpush.xpose.msra.mxu0 0.0
      %1745 = vmatpush.xpose.msra.mxu0 0.0
      %1746 = vmatpush.xpose.msra.mxu0 0.0
      %1747 = vmatpush.xpose.msra.mxu0 0.0
      %1748 = vmatpush.xpose.msra.mxu0 0.0
      %1749 = vmatpush.xpose.msra.mxu0 0.0
      %1750 = vmatpush.xpose.msra.mxu0 0.0
      %1751 = vmatpush.xpose.msra.mxu0 0.0
      %1752 = vmatpush.xpose.msra.mxu0 0.0
      %1753 = vmatpush.xpose.msra.mxu0 0.0
      %1754 = vmatpush.xpose.msra.mxu0 %v1737
      %1755 = vmatmul.f32.gmra.mxu0 %v1734
      %v1756 = vpop.f32.mrf.mxu0
      %v1757 = vadd.f32 0.0, %v1756
      %1758 = vdwg.mxu0
      %v1760 = vsel %vm355, %v601, 0
      %v1763 = vsel %vm355, %v849, 0
      %1765 = vmatpush.xpose.msra.mxu0 0.0
      %1766 = vmatpush.xpose.msra.mxu0 0.0
      %1767 = vmatpush.xpose.msra.mxu0 0.0
      %1768 = vmatpush.xpose.msra.mxu0 0.0
      %1769 = vmatpush.xpose.msra.mxu0 0.0
      %1770 = vmatpush.xpose.msra.mxu0 0.0
      %1771 = vmatpush.xpose.msra.mxu0 0.0
      %1772 = vmatpush.xpose.msra.mxu0 0.0
      %1773 = vmatpush.xpose.msra.mxu0 0.0
      %1774 = vmatpush.xpose.msra.mxu0 0.0
      %1775 = vmatpush.xpose.msra.mxu0 0.0
      %1776 = vmatpush.xpose.msra.mxu0 0.0
      %1777 = vmatpush.xpose.msra.mxu0 0.0
      %1778 = vmatpush.xpose.msra.mxu0 0.0
      %1779 = vmatpush.xpose.msra.mxu0 0.0
      %1780 = vmatpush.xpose.msra.mxu0 %v1763
      %1781 = vmatmul.f32.gmra.mxu0 %v1760
      %v1782 = vpop.f32.mrf.mxu0
      %v1783 = vadd.f32 0.0, %v1782
      %1784 = vdwg.mxu0
      %v1786 = vsel %vm355, %v602, 0
      %v1789 = vsel %vm355, %v852, 0
      %1791 = vmatpush.xpose.msra.mxu0 0.0
      %1792 = vmatpush.xpose.msra.mxu0 0.0
      %1793 = vmatpush.xpose.msra.mxu0 0.0
      %1794 = vmatpush.xpose.msra.mxu0 0.0
      %1795 = vmatpush.xpose.msra.mxu0 0.0
      %1796 = vmatpush.xpose.msra.mxu0 0.0
      %1797 = vmatpush.xpose.msra.mxu0 0.0
      %1798 = vmatpush.xpose.msra.mxu0 0.0
      %1799 = vmatpush.xpose.msra.mxu0 0.0
      %1800 = vmatpush.xpose.msra.mxu0 0.0
      %1801 = vmatpush.xpose.msra.mxu0 0.0
      %1802 = vmatpush.xpose.msra.mxu0 0.0
      %1803 = vmatpush.xpose.msra.mxu0 0.0
      %1804 = vmatpush.xpose.msra.mxu0 0.0
      %1805 = vmatpush.xpose.msra.mxu0 0.0
      %1806 = vmatpush.xpose.msra.mxu0 %v1789
      %1807 = vmatmul.f32.gmra.mxu0 %v1786
      %v1808 = vpop.f32.mrf.mxu0
      %v1809 = vadd.f32 0.0, %v1808
      %1810 = vdwg.mxu0
      %v1812 = vsel %vm355, %v603, 0
      %v1815 = vsel %vm355, %v855, 0
      %1817 = vmatpush.xpose.msra.mxu0 0.0
      %1818 = vmatpush.xpose.msra.mxu0 0.0
      %1819 = vmatpush.xpose.msra.mxu0 0.0
      %1820 = vmatpush.xpose.msra.mxu0 0.0
      %1821 = vmatpush.xpose.msra.mxu0 0.0
      %1822 = vmatpush.xpose.msra.mxu0 0.0
      %1823 = vmatpush.xpose.msra.mxu0 0.0
      %1824 = vmatpush.xpose.msra.mxu0 0.0
      %1825 = vmatpush.xpose.msra.mxu0 0.0
      %1826 = vmatpush.xpose.msra.mxu0 0.0
      %1827 = vmatpush.xpose.msra.mxu0 0.0
      %1828 = vmatpush.xpose.msra.mxu0 0.0
      %1829 = vmatpush.xpose.msra.mxu0 0.0
      %1830 = vmatpush.xpose.msra.mxu0 0.0
      %1831 = vmatpush.xpose.msra.mxu0 0.0
      %1832 = vmatpush.xpose.msra.mxu0 %v1815
      %1833 = vmatmul.f32.gmra.mxu0 %v1812
      %v1834 = vpop.f32.mrf.mxu0
      %v1835 = vadd.f32 0.0, %v1834
      %1836 = vdwg.mxu0
      %v1838 = vsel %vm355, %v604, 0
      %v1841 = vsel %vm355, %v858, 0
      %1843 = vmatpush.xpose.msra.mxu0 0.0
      %1844 = vmatpush.xpose.msra.mxu0 0.0
      %1845 = vmatpush.xpose.msra.mxu0 0.0
      %1846 = vmatpush.xpose.msra.mxu0 0.0
      %1847 = vmatpush.xpose.msra.mxu0 0.0
      %1848 = vmatpush.xpose.msra.mxu0 0.0
      %1849 = vmatpush.xpose.msra.mxu0 0.0
      %1850 = vmatpush.xpose.msra.mxu0 0.0
      %1851 = vmatpush.xpose.msra.mxu0 0.0
      %1852 = vmatpush.xpose.msra.mxu0 0.0
      %1853 = vmatpush.xpose.msra.mxu0 0.0
      %1854 = vmatpush.xpose.msra.mxu0 0.0
      %1855 = vmatpush.xpose.msra.mxu0 0.0
      %1856 = vmatpush.xpose.msra.mxu0 0.0
      %1857 = vmatpush.xpose.msra.mxu0 0.0
      %1858 = vmatpush.xpose.msra.mxu0 %v1841
      %1859 = vmatmul.f32.gmra.mxu0 %v1838
      %v1860 = vpop.f32.mrf.mxu0
      %v1861 = vadd.f32 0.0, %v1860
      %1862 = vdwg.mxu0
      %v1864 = vsel %vm355, %v605, 0
      %v1867 = vsel %vm355, %v861, 0
      %1869 = vmatpush.xpose.msra.mxu0 0.0
      %1870 = vmatpush.xpose.msra.mxu0 0.0
      %1871 = vmatpush.xpose.msra.mxu0 0.0
      %1872 = vmatpush.xpose.msra.mxu0 0.0
      %1873 = vmatpush.xpose.msra.mxu0 0.0
      %1874 = vmatpush.xpose.msra.mxu0 0.0
      %1875 = vmatpush.xpose.msra.mxu0 0.0
      %1876 = vmatpush.xpose.msra.mxu0 0.0
      %1877 = vmatpush.xpose.msra.mxu0 0.0
      %1878 = vmatpush.xpose.msra.mxu0 0.0
      %1879 = vmatpush.xpose.msra.mxu0 0.0
      %1880 = vmatpush.xpose.msra.mxu0 0.0
      %1881 = vmatpush.xpose.msra.mxu0 0.0
      %1882 = vmatpush.xpose.msra.mxu0 0.0
      %1883 = vmatpush.xpose.msra.mxu0 0.0
      %1884 = vmatpush.xpose.msra.mxu0 %v1867
      %1885 = vmatmul.f32.gmra.mxu0 %v1864
      %v1886 = vpop.f32.mrf.mxu0
      %v1887 = vadd.f32 0.0, %v1886
      %1888 = vdwg.mxu0
      %v1890 = vsel %vm355, %v606, 0
      %v1893 = vsel %vm355, %v864, 0
      %1895 = vmatpush.xpose.msra.mxu0 0.0
      %1896 = vmatpush.xpose.msra.mxu0 0.0
      %1897 = vmatpush.xpose.msra.mxu0 0.0
      %1898 = vmatpush.xpose.msra.mxu0 0.0
      %1899 = vmatpush.xpose.msra.mxu0 0.0
      %1900 = vmatpush.xpose.msra.mxu0 0.0
      %1901 = vmatpush.xpose.msra.mxu0 0.0
      %1902 = vmatpush.xpose.msra.mxu0 0.0
      %1903 = vmatpush.xpose.msra.mxu0 0.0
      %1904 = vmatpush.xpose.msra.mxu0 0.0
      %1905 = vmatpush.xpose.msra.mxu0 0.0
      %1906 = vmatpush.xpose.msra.mxu0 0.0
      %1907 = vmatpush.xpose.msra.mxu0 0.0
      %1908 = vmatpush.xpose.msra.mxu0 0.0
      %1909 = vmatpush.xpose.msra.mxu0 0.0
      %1910 = vmatpush.xpose.msra.mxu0 %v1893
      %1911 = vmatmul.f32.gmra.mxu0 %v1890
      %v1912 = vpop.f32.mrf.mxu0
      %v1913 = vadd.f32 0.0, %v1912
      %1914 = vdwg.mxu0
      %v1916 = vsel %vm355, %v607, 0
      %v1919 = vsel %vm355, %v867, 0
      %1921 = vmatpush.xpose.msra.mxu0 0.0
      %1922 = vmatpush.xpose.msra.mxu0 0.0
      %1923 = vmatpush.xpose.msra.mxu0 0.0
      %1924 = vmatpush.xpose.msra.mxu0 0.0
      %1925 = vmatpush.xpose.msra.mxu0 0.0
      %1926 = vmatpush.xpose.msra.mxu0 0.0
      %1927 = vmatpush.xpose.msra.mxu0 0.0
      %1928 = vmatpush.xpose.msra.mxu0 0.0
      %1929 = vmatpush.xpose.msra.mxu0 0.0
      %1930 = vmatpush.xpose.msra.mxu0 0.0
      %1931 = vmatpush.xpose.msra.mxu0 0.0
      %1932 = vmatpush.xpose.msra.mxu0 0.0
      %1933 = vmatpush.xpose.msra.mxu0 0.0
      %1934 = vmatpush.xpose.msra.mxu0 0.0
      %1935 = vmatpush.xpose.msra.mxu0 0.0
      %1936 = vmatpush.xpose.msra.mxu0 %v1919
      %1937 = vmatmul.f32.gmra.mxu0 %v1916
      %v1938 = vpop.f32.mrf.mxu0
      %v1939 = vadd.f32 0.0, %v1938
      %1940 = vdwg.mxu0
      %v1942 = vsel %vm355, %v608, 0
      %v1945 = vsel %vm355, %v870, 0
      %1947 = vmatpush.xpose.msra.mxu0 0.0
      %1948 = vmatpush.xpose.msra.mxu0 0.0
      %1949 = vmatpush.xpose.msra.mxu0 0.0
      %1950 = vmatpush.xpose.msra.mxu0 0.0
      %1951 = vmatpush.xpose.msra.mxu0 0.0
      %1952 = vmatpush.xpose.msra.mxu0 0.0
      %1953 = vmatpush.xpose.msra.mxu0 0.0
      %1954 = vmatpush.xpose.msra.mxu0 0.0
      %1955 = vmatpush.xpose.msra.mxu0 0.0
      %1956 = vmatpush.xpose.msra.mxu0 0.0
      %1957 = vmatpush.xpose.msra.mxu0 0.0
      %1958 = vmatpush.xpose.msra.mxu0 0.0
      %1959 = vmatpush.xpose.msra.mxu0 0.0
      %1960 = vmatpush.xpose.msra.mxu0 0.0
      %1961 = vmatpush.xpose.msra.mxu0 0.0
      %1962 = vmatpush.xpose.msra.mxu0 %v1945
      %1963 = vmatmul.f32.gmra.mxu0 %v1942
      %v1964 = vpop.f32.mrf.mxu0
      %v1965 = vadd.f32 0.0, %v1964
      %1966 = vdwg.mxu0
      %vm1967 = vcmask 64512
      %v1968 = vsel %vm1967, %v1159, -inf
      %1969 = vmax.xlane.f32.xlu0 %v1968
      %v1970 = vpop.xlane.xlu0 %1969
      %v1971 = vsel %vm1967, %v1185, -inf
      %1972 = vmax.xlane.f32.xlu0 %v1971
      %v1973 = vpop.xlane.xlu0 %1972
      %v1974 = vsel %vm1967, %v1211, -inf
      %1975 = vmax.xlane.f32.xlu0 %v1974
      %v1976 = vpop.xlane.xlu0 %1975
      %v1977 = vsel %vm1967, %v1237, -inf
      %1978 = vmax.xlane.f32.xlu0 %v1977
      %v1979 = vpop.xlane.xlu0 %1978
      %v1980 = vsel %vm1967, %v1263, -inf
      %1981 = vmax.xlane.f32.xlu0 %v1980
      %v1982 = vpop.xlane.xlu0 %1981
      %v1983 = vsel %vm1967, %v1289, -inf
      %1984 = vmax.xlane.f32.xlu0 %v1983
      %v1985 = vpop.xlane.xlu0 %1984
      %v1986 = vsel %vm1967, %v1315, -inf
      %1987 = vmax.xlane.f32.xlu0 %v1986
      %v1988 = vpop.xlane.xlu0 %1987
      %v1989 = vsel %vm1967, %v1341, -inf
      %1990 = vmax.xlane.f32.xlu0 %v1989
      %v1991 = vpop.xlane.xlu0 %1990
      %v1992 = vsel %vm1967, %v1367, -inf
      %1993 = vmax.xlane.f32.xlu0 %v1992
      %v1994 = vpop.xlane.xlu0 %1993
      %v1995 = vsel %vm1967, %v1393, -inf
      %1996 = vmax.xlane.f32.xlu0 %v1995
      %v1997 = vpop.xlane.xlu0 %1996
      %v1998 = vsel %vm1967, %v1419, -inf
      %1999 = vmax.xlane.f32.xlu0 %v1998
      %v2000 = vpop.xlane.xlu0 %1999
      %v2001 = vsel %vm1967, %v1445, -inf
      %2002 = vmax.xlane.f32.xlu0 %v2001
      %v2003 = vpop.xlane.xlu0 %2002
      %v2004 = vsel %vm1967, %v1471, -inf
      %2005 = vmax.xlane.f32.xlu0 %v2004
      %v2006 = vpop.xlane.xlu0 %2005
      %v2007 = vsel %vm1967, %v1497, -inf
      %2008 = vmax.xlane.f32.xlu0 %v2007
      %v2009 = vpop.xlane.xlu0 %2008
      %v2010 = vsel %vm1967, %v1523, -inf
      %2011 = vmax.xlane.f32.xlu0 %v2010
      %v2012 = vpop.xlane.xlu0 %2011
      %v2013 = vsel %vm1967, %v1549, -inf
      %2014 = vmax.xlane.f32.xlu0 %v2013
      %v2015 = vpop.xlane.xlu0 %2014
      %v2016 = vsel %vm1967, %v1575, -inf
      %2017 = vmax.xlane.f32.xlu0 %v2016
      %v2018 = vpop.xlane.xlu0 %2017
      %v2019 = vsel %vm1967, %v1601, -inf
      %2020 = vmax.xlane.f32.xlu0 %v2019
      %v2021 = vpop.xlane.xlu0 %2020
      %v2022 = vsel %vm1967, %v1627, -inf
      %2023 = vmax.xlane.f32.xlu0 %v2022
      %v2024 = vpop.xlane.xlu0 %2023
      %v2025 = vsel %vm1967, %v1653, -inf
      %2026 = vmax.xlane.f32.xlu0 %v2025
      %v2027 = vpop.xlane.xlu0 %2026
      %v2028 = vsel %vm1967, %v1679, -inf
      %2029 = vmax.xlane.f32.xlu0 %v2028
      %v2030 = vpop.xlane.xlu0 %2029
      %v2031 = vsel %vm1967, %v1705, -inf
      %2032 = vmax.xlane.f32.xlu0 %v2031
      %v2033 = vpop.xlane.xlu0 %2032
      %v2034 = vsel %vm1967, %v1731, -inf
      %2035 = vmax.xlane.f32.xlu0 %v2034
      %v2036 = vpop.xlane.xlu0 %2035
      %v2037 = vsel %vm1967, %v1757, -inf
      %2038 = vmax.xlane.f32.xlu0 %v2037
      %v2039 = vpop.xlane.xlu0 %2038
      %v2040 = vsel %vm1967, %v1783, -inf
      %2041 = vmax.xlane.f32.xlu0 %v2040
      %v2042 = vpop.xlane.xlu0 %2041
      %v2043 = vsel %vm1967, %v1809, -inf
      %2044 = vmax.xlane.f32.xlu0 %v2043
      %v2045 = vpop.xlane.xlu0 %2044
      %v2046 = vsel %vm1967, %v1835, -inf
      %2047 = vmax.xlane.f32.xlu0 %v2046
      %v2048 = vpop.xlane.xlu0 %2047
      %v2049 = vsel %vm1967, %v1861, -inf
      %2050 = vmax.xlane.f32.xlu0 %v2049
      %v2051 = vpop.xlane.xlu0 %2050
      %v2052 = vsel %vm1967, %v1887, -inf
      %2053 = vmax.xlane.f32.xlu0 %v2052
      %v2054 = vpop.xlane.xlu0 %2053
      %v2055 = vsel %vm1967, %v1913, -inf
      %2056 = vmax.xlane.f32.xlu0 %v2055
      %v2057 = vpop.xlane.xlu0 %2056
      %v2058 = vsel %vm1967, %v1939, -inf
      %2059 = vmax.xlane.f32.xlu0 %v2058
      %v2060 = vpop.xlane.xlu0 %2059
      %v2061 = vsel %vm1967, %v1965, -inf
      %2062 = vmax.xlane.f32.xlu0 %v2061
      %v2063 = vpop.xlane.xlu0 %2062
      %v2064 = vsub.f32 %v1159, %v1970
      %v2065 = vsub.f32 %v1185, %v1973
      %v2066 = vsub.f32 %v1211, %v1976
      %v2067 = vsub.f32 %v1237, %v1979
      %v2068 = vsub.f32 %v1263, %v1982
      %v2069 = vsub.f32 %v1289, %v1985
      %v2070 = vsub.f32 %v1315, %v1988
      %v2071 = vsub.f32 %v1341, %v1991
      %v2072 = vsub.f32 %v1367, %v1994
      %v2073 = vsub.f32 %v1393, %v1997
      %v2074 = vsub.f32 %v1419, %v2000
      %v2075 = vsub.f32 %v1445, %v2003
      %v2076 = vsub.f32 %v1471, %v2006
      %v2077 = vsub.f32 %v1497, %v2009
      %v2078 = vsub.f32 %v1523, %v2012
      %v2079 = vsub.f32 %v1549, %v2015
      %v2080 = vsub.f32 %v1575, %v2018
      %v2081 = vsub.f32 %v1601, %v2021
      %v2082 = vsub.f32 %v1627, %v2024
      %v2083 = vsub.f32 %v1653, %v2027
      %v2084 = vsub.f32 %v1679, %v2030
      %v2085 = vsub.f32 %v1705, %v2033
      %v2086 = vsub.f32 %v1731, %v2036
      %v2087 = vsub.f32 %v1757, %v2039
      %v2088 = vsub.f32 %v1783, %v2042
      %v2089 = vsub.f32 %v1809, %v2045
      %v2090 = vsub.f32 %v1835, %v2048
      %v2091 = vsub.f32 %v1861, %v2051
      %v2092 = vsub.f32 %v1887, %v2054
      %v2093 = vsub.f32 %v1913, %v2057
      %v2094 = vsub.f32 %v1939, %v2060
      %v2095 = vsub.f32 %v1965, %v2063
      %v2096 = vmul.f32 %v2064, 1.442695
      %v2097 = vpow.pop %v2096
      %v2098 = vmul.f32 %v2065, 1.442695
      %v2099 = vpow.pop %v2098
      %v2100 = vmul.f32 %v2066, 1.442695
      %v2101 = vpow.pop %v2100
      %v2102 = vmul.f32 %v2067, 1.442695
      %v2103 = vpow.pop %v2102
      %v2104 = vmul.f32 %v2068, 1.442695
      %v2105 = vpow.pop %v2104
      %v2106 = vmul.f32 %v2069, 1.442695
      %v2107 = vpow.pop %v2106
      %v2108 = vmul.f32 %v2070, 1.442695
      %v2109 = vpow.pop %v2108
      %v2110 = vmul.f32 %v2071, 1.442695
      %v2111 = vpow.pop %v2110
      %v2112 = vmul.f32 %v2072, 1.442695
      %v2113 = vpow.pop %v2112
      %v2114 = vmul.f32 %v2073, 1.442695
      %v2115 = vpow.pop %v2114
      %v2116 = vmul.f32 %v2074, 1.442695
      %v2117 = vpow.pop %v2116
      %v2118 = vmul.f32 %v2075, 1.442695
      %v2119 = vpow.pop %v2118
      %v2120 = vmul.f32 %v2076, 1.442695
      %v2121 = vpow.pop %v2120
      %v2122 = vmul.f32 %v2077, 1.442695
      %v2123 = vpow.pop %v2122
      %v2124 = vmul.f32 %v2078, 1.442695
      %v2125 = vpow.pop %v2124
      %v2126 = vmul.f32 %v2079, 1.442695
      %v2127 = vpow.pop %v2126
      %v2128 = vmul.f32 %v2080, 1.442695
      %v2129 = vpow.pop %v2128
      %v2130 = vmul.f32 %v2081, 1.442695
      %v2131 = vpow.pop %v2130
      %v2132 = vmul.f32 %v2082, 1.442695
      %v2133 = vpow.pop %v2132
      %v2134 = vmul.f32 %v2083, 1.442695
      %v2135 = vpow.pop %v2134
      %v2136 = vmul.f32 %v2084, 1.442695
      %v2137 = vpow.pop %v2136
      %v2138 = vmul.f32 %v2085, 1.442695
      %v2139 = vpow.pop %v2138
      %v2140 = vmul.f32 %v2086, 1.442695
      %v2141 = vpow.pop %v2140
      %v2142 = vmul.f32 %v2087, 1.442695
      %v2143 = vpow.pop %v2142
      %v2144 = vmul.f32 %v2088, 1.442695
      %v2145 = vpow.pop %v2144
      %v2146 = vmul.f32 %v2089, 1.442695
      %v2147 = vpow.pop %v2146
      %v2148 = vmul.f32 %v2090, 1.442695
      %v2149 = vpow.pop %v2148
      %v2150 = vmul.f32 %v2091, 1.442695
      %v2151 = vpow.pop %v2150
      %v2152 = vmul.f32 %v2092, 1.442695
      %v2153 = vpow.pop %v2152
      %v2154 = vmul.f32 %v2093, 1.442695
      %v2155 = vpow.pop %v2154
      %v2156 = vmul.f32 %v2094, 1.442695
      %v2157 = vpow.pop %v2156
      %v2158 = vmul.f32 %v2095, 1.442695
      %v2159 = vpow.pop %v2158
      %v2160 = vsel %vm1967, %v2097, 0.0
      %2161 = vadd.xlane.f32.xlu0 %v2160
      %v2162 = vpop.xlane.xlu0 %2161
      %v2163 = vsel %vm1967, %v2099, 0.0
      %2164 = vadd.xlane.f32.xlu0 %v2163
      %v2165 = vpop.xlane.xlu0 %2164
      %v2166 = vsel %vm1967, %v2101, 0.0
      %2167 = vadd.xlane.f32.xlu0 %v2166
      %v2168 = vpop.xlane.xlu0 %2167
      %v2169 = vsel %vm1967, %v2103, 0.0
      %2170 = vadd.xlane.f32.xlu0 %v2169
      %v2171 = vpop.xlane.xlu0 %2170
      %v2172 = vsel %vm1967, %v2105, 0.0
      %2173 = vadd.xlane.f32.xlu0 %v2172
      %v2174 = vpop.xlane.xlu0 %2173
      %v2175 = vsel %vm1967, %v2107, 0.0
      %2176 = vadd.xlane.f32.xlu0 %v2175
      %v2177 = vpop.xlane.xlu0 %2176
      %v2178 = vsel %vm1967, %v2109, 0.0
      %2179 = vadd.xlane.f32.xlu0 %v2178
      %v2180 = vpop.xlane.xlu0 %2179
      %v2181 = vsel %vm1967, %v2111, 0.0
      %2182 = vadd.xlane.f32.xlu0 %v2181
      %v2183 = vpop.xlane.xlu0 %2182
      %v2184 = vsel %vm1967, %v2113, 0.0
      %2185 = vadd.xlane.f32.xlu0 %v2184
      %v2186 = vpop.xlane.xlu0 %2185
      %v2187 = vsel %vm1967, %v2115, 0.0
      %2188 = vadd.xlane.f32.xlu0 %v2187
      %v2189 = vpop.xlane.xlu0 %2188
      %v2190 = vsel %vm1967, %v2117, 0.0
      %2191 = vadd.xlane.f32.xlu0 %v2190
      %v2192 = vpop.xlane.xlu0 %2191
      %v2193 = vsel %vm1967, %v2119, 0.0
      %2194 = vadd.xlane.f32.xlu0 %v2193
      %v2195 = vpop.xlane.xlu0 %2194
      %v2196 = vsel %vm1967, %v2121, 0.0
      %2197 = vadd.xlane.f32.xlu0 %v2196
      %v2198 = vpop.xlane.xlu0 %2197
      %v2199 = vsel %vm1967, %v2123, 0.0
      %2200 = vadd.xlane.f32.xlu0 %v2199
      %v2201 = vpop.xlane.xlu0 %2200
      %v2202 = vsel %vm1967, %v2125, 0.0
      %2203 = vadd.xlane.f32.xlu0 %v2202
      %v2204 = vpop.xlane.xlu0 %2203
      %v2205 = vsel %vm1967, %v2127, 0.0
      %2206 = vadd.xlane.f32.xlu0 %v2205
      %v2207 = vpop.xlane.xlu0 %2206
      %v2208 = vsel %vm1967, %v2129, 0.0
      %2209 = vadd.xlane.f32.xlu0 %v2208
      %v2210 = vpop.xlane.xlu0 %2209
      %v2211 = vsel %vm1967, %v2131, 0.0
      %2212 = vadd.xlane.f32.xlu0 %v2211
      %v2213 = vpop.xlane.xlu0 %2212
      %v2214 = vsel %vm1967, %v2133, 0.0
      %2215 = vadd.xlane.f32.xlu0 %v2214
      %v2216 = vpop.xlane.xlu0 %2215
      %v2217 = vsel %vm1967, %v2135, 0.0
      %2218 = vadd.xlane.f32.xlu0 %v2217
      %v2219 = vpop.xlane.xlu0 %2218
      %v2220 = vsel %vm1967, %v2137, 0.0
      %2221 = vadd.xlane.f32.xlu0 %v2220
      %v2222 = vpop.xlane.xlu0 %2221
      %v2223 = vsel %vm1967, %v2139, 0.0
      %2224 = vadd.xlane.f32.xlu0 %v2223
      %v2225 = vpop.xlane.xlu0 %2224
      %v2226 = vsel %vm1967, %v2141, 0.0
      %2227 = vadd.xlane.f32.xlu0 %v2226
      %v2228 = vpop.xlane.xlu0 %2227
      %v2229 = vsel %vm1967, %v2143, 0.0
      %2230 = vadd.xlane.f32.xlu0 %v2229
      %v2231 = vpop.xlane.xlu0 %2230
      %v2232 = vsel %vm1967, %v2145, 0.0
      %2233 = vadd.xlane.f32.xlu0 %v2232
      %v2234 = vpop.xlane.xlu0 %2233
      %v2235 = vsel %vm1967, %v2147, 0.0
      %2236 = vadd.xlane.f32.xlu0 %v2235
      %v2237 = vpop.xlane.xlu0 %2236
      %v2238 = vsel %vm1967, %v2149, 0.0
      %2239 = vadd.xlane.f32.xlu0 %v2238
      %v2240 = vpop.xlane.xlu0 %2239
      %v2241 = vsel %vm1967, %v2151, 0.0
      %2242 = vadd.xlane.f32.xlu0 %v2241
      %v2243 = vpop.xlane.xlu0 %2242
      %v2244 = vsel %vm1967, %v2153, 0.0
      %2245 = vadd.xlane.f32.xlu0 %v2244
      %v2246 = vpop.xlane.xlu0 %2245
      %v2247 = vsel %vm1967, %v2155, 0.0
      %2248 = vadd.xlane.f32.xlu0 %v2247
      %v2249 = vpop.xlane.xlu0 %2248
      %v2250 = vsel %vm1967, %v2157, 0.0
      %2251 = vadd.xlane.f32.xlu0 %v2250
      %v2252 = vpop.xlane.xlu0 %2251
      %v2253 = vsel %vm1967, %v2159, 0.0
      %2254 = vadd.xlane.f32.xlu0 %v2253
      %v2255 = vpop.xlane.xlu0 %2254
      %v2256 = vrcp.pop %v2162
      %v2257 = vmul.f32 %v2162, %v2256
      %v2258 = vsub.f32 1.0, %v2257
      %v2259 = vmul.f32 %v2256, %v2258
      %v2260 = vadd.f32 %v2256, %v2259
      %vm2261 = vweird.f32 %v2162
      %vm2262 = vweird.f32 %v2256
      %vm2263 = vmor %vm2261, %vm2262
      %v2264 = vsel %vm2263, %v2256, %v2260
      %v2265 = vand.u32 2147483647, %v2162
      %vm2266 = vcmp.eq.f32.partialorder %v2265, 8.507059e+37
      %v2267 = vand.u32 %v2162, 2147483648
      %v2268 = vor.u32 1.1754944e-38, %v2267
      %v2269 = vsel %vm2266, %v2268, %v2264
      %v2270 = vmul.f32 %v2097, %v2269
      %v2271 = vrcp.pop %v2165
      %v2272 = vmul.f32 %v2165, %v2271
      %v2273 = vsub.f32 1.0, %v2272
      %v2274 = vmul.f32 %v2271, %v2273
      %v2275 = vadd.f32 %v2271, %v2274
      %vm2276 = vweird.f32 %v2165
      %vm2277 = vweird.f32 %v2271
      %vm2278 = vmor %vm2276, %vm2277
      %v2279 = vsel %vm2278, %v2271, %v2275
      %v2280 = vand.u32 2147483647, %v2165
      %vm2281 = vcmp.eq.f32.partialorder %v2280, 8.507059e+37
      %v2282 = vand.u32 %v2165, 2147483648
      %v2283 = vor.u32 1.1754944e-38, %v2282
      %v2284 = vsel %vm2281, %v2283, %v2279
      %v2285 = vmul.f32 %v2099, %v2284
      %v2286 = vrcp.pop %v2168
      %v2287 = vmul.f32 %v2168, %v2286
      %v2288 = vsub.f32 1.0, %v2287
      %v2289 = vmul.f32 %v2286, %v2288
      %v2290 = vadd.f32 %v2286, %v2289
      %vm2291 = vweird.f32 %v2168
      %vm2292 = vweird.f32 %v2286
      %vm2293 = vmor %vm2291, %vm2292
      %v2294 = vsel %vm2293, %v2286, %v2290
      %v2295 = vand.u32 2147483647, %v2168
      %vm2296 = vcmp.eq.f32.partialorder %v2295, 8.507059e+37
      %v2297 = vand.u32 %v2168, 2147483648
      %v2298 = vor.u32 1.1754944e-38, %v2297
      %v2299 = vsel %vm2296, %v2298, %v2294
      %v2300 = vmul.f32 %v2101, %v2299
      %v2301 = vrcp.pop %v2171
      %v2302 = vmul.f32 %v2171, %v2301
      %v2303 = vsub.f32 1.0, %v2302
      %v2304 = vmul.f32 %v2301, %v2303
      %v2305 = vadd.f32 %v2301, %v2304
      %vm2306 = vweird.f32 %v2171
      %vm2307 = vweird.f32 %v2301
      %vm2308 = vmor %vm2306, %vm2307
      %v2309 = vsel %vm2308, %v2301, %v2305
      %v2310 = vand.u32 2147483647, %v2171
      %vm2311 = vcmp.eq.f32.partialorder %v2310, 8.507059e+37
      %v2312 = vand.u32 %v2171, 2147483648
      %v2313 = vor.u32 1.1754944e-38, %v2312
      %v2314 = vsel %vm2311, %v2313, %v2309
      %v2315 = vmul.f32 %v2103, %v2314
      %v2316 = vrcp.pop %v2174
      %v2317 = vmul.f32 %v2174, %v2316
      %v2318 = vsub.f32 1.0, %v2317
      %v2319 = vmul.f32 %v2316, %v2318
      %v2320 = vadd.f32 %v2316, %v2319
      %vm2321 = vweird.f32 %v2174
      %vm2322 = vweird.f32 %v2316
      %vm2323 = vmor %vm2321, %vm2322
      %v2324 = vsel %vm2323, %v2316, %v2320
      %v2325 = vand.u32 2147483647, %v2174
      %vm2326 = vcmp.eq.f32.partialorder %v2325, 8.507059e+37
      %v2327 = vand.u32 %v2174, 2147483648
      %v2328 = vor.u32 1.1754944e-38, %v2327
      %v2329 = vsel %vm2326, %v2328, %v2324
      %v2330 = vmul.f32 %v2105, %v2329
      %v2331 = vrcp.pop %v2177
      %v2332 = vmul.f32 %v2177, %v2331
      %v2333 = vsub.f32 1.0, %v2332
      %v2334 = vmul.f32 %v2331, %v2333
      %v2335 = vadd.f32 %v2331, %v2334
      %vm2336 = vweird.f32 %v2177
      %vm2337 = vweird.f32 %v2331
      %vm2338 = vmor %vm2336, %vm2337
      %v2339 = vsel %vm2338, %v2331, %v2335
      %v2340 = vand.u32 2147483647, %v2177
      %vm2341 = vcmp.eq.f32.partialorder %v2340, 8.507059e+37
      %v2342 = vand.u32 %v2177, 2147483648
      %v2343 = vor.u32 1.1754944e-38, %v2342
      %v2344 = vsel %vm2341, %v2343, %v2339
      %v2345 = vmul.f32 %v2107, %v2344
      %v2346 = vrcp.pop %v2180
      %v2347 = vmul.f32 %v2180, %v2346
      %v2348 = vsub.f32 1.0, %v2347
      %v2349 = vmul.f32 %v2346, %v2348
      %v2350 = vadd.f32 %v2346, %v2349
      %vm2351 = vweird.f32 %v2180
      %vm2352 = vweird.f32 %v2346
      %vm2353 = vmor %vm2351, %vm2352
      %v2354 = vsel %vm2353, %v2346, %v2350
      %v2355 = vand.u32 2147483647, %v2180
      %vm2356 = vcmp.eq.f32.partialorder %v2355, 8.507059e+37
      %v2357 = vand.u32 %v2180, 2147483648
      %v2358 = vor.u32 1.1754944e-38, %v2357
      %v2359 = vsel %vm2356, %v2358, %v2354
      %v2360 = vmul.f32 %v2109, %v2359
      %v2361 = vrcp.pop %v2183
      %v2362 = vmul.f32 %v2183, %v2361
      %v2363 = vsub.f32 1.0, %v2362
      %v2364 = vmul.f32 %v2361, %v2363
      %v2365 = vadd.f32 %v2361, %v2364
      %vm2366 = vweird.f32 %v2183
      %vm2367 = vweird.f32 %v2361
      %vm2368 = vmor %vm2366, %vm2367
      %v2369 = vsel %vm2368, %v2361, %v2365
      %v2370 = vand.u32 2147483647, %v2183
      %vm2371 = vcmp.eq.f32.partialorder %v2370, 8.507059e+37
      %v2372 = vand.u32 %v2183, 2147483648
      %v2373 = vor.u32 1.1754944e-38, %v2372
      %v2374 = vsel %vm2371, %v2373, %v2369
      %v2375 = vmul.f32 %v2111, %v2374
      %v2376 = vrcp.pop %v2186
      %v2377 = vmul.f32 %v2186, %v2376
      %v2378 = vsub.f32 1.0, %v2377
      %v2379 = vmul.f32 %v2376, %v2378
      %v2380 = vadd.f32 %v2376, %v2379
      %vm2381 = vweird.f32 %v2186
      %vm2382 = vweird.f32 %v2376
      %vm2383 = vmor %vm2381, %vm2382
      %v2384 = vsel %vm2383, %v2376, %v2380
      %v2385 = vand.u32 2147483647, %v2186
      %vm2386 = vcmp.eq.f32.partialorder %v2385, 8.507059e+37
      %v2387 = vand.u32 %v2186, 2147483648
      %v2388 = vor.u32 1.1754944e-38, %v2387
      %v2389 = vsel %vm2386, %v2388, %v2384
      %v2390 = vmul.f32 %v2113, %v2389
      %v2391 = vrcp.pop %v2189
      %v2392 = vmul.f32 %v2189, %v2391
      %v2393 = vsub.f32 1.0, %v2392
      %v2394 = vmul.f32 %v2391, %v2393
      %v2395 = vadd.f32 %v2391, %v2394
      %vm2396 = vweird.f32 %v2189
      %vm2397 = vweird.f32 %v2391
      %vm2398 = vmor %vm2396, %vm2397
      %v2399 = vsel %vm2398, %v2391, %v2395
      %v2400 = vand.u32 2147483647, %v2189
      %vm2401 = vcmp.eq.f32.partialorder %v2400, 8.507059e+37
      %v2402 = vand.u32 %v2189, 2147483648
      %v2403 = vor.u32 1.1754944e-38, %v2402
      %v2404 = vsel %vm2401, %v2403, %v2399
      %v2405 = vmul.f32 %v2115, %v2404
      %v2406 = vrcp.pop %v2192
      %v2407 = vmul.f32 %v2192, %v2406
      %v2408 = vsub.f32 1.0, %v2407
      %v2409 = vmul.f32 %v2406, %v2408
      %v2410 = vadd.f32 %v2406, %v2409
      %vm2411 = vweird.f32 %v2192
      %vm2412 = vweird.f32 %v2406
      %vm2413 = vmor %vm2411, %vm2412
      %v2414 = vsel %vm2413, %v2406, %v2410
      %v2415 = vand.u32 2147483647, %v2192
      %vm2416 = vcmp.eq.f32.partialorder %v2415, 8.507059e+37
      %v2417 = vand.u32 %v2192, 2147483648
      %v2418 = vor.u32 1.1754944e-38, %v2417
      %v2419 = vsel %vm2416, %v2418, %v2414
      %v2420 = vmul.f32 %v2117, %v2419
      %v2421 = vrcp.pop %v2195
      %v2422 = vmul.f32 %v2195, %v2421
      %v2423 = vsub.f32 1.0, %v2422
      %v2424 = vmul.f32 %v2421, %v2423
      %v2425 = vadd.f32 %v2421, %v2424
      %vm2426 = vweird.f32 %v2195
      %vm2427 = vweird.f32 %v2421
      %vm2428 = vmor %vm2426, %vm2427
      %v2429 = vsel %vm2428, %v2421, %v2425
      %v2430 = vand.u32 2147483647, %v2195
      %vm2431 = vcmp.eq.f32.partialorder %v2430, 8.507059e+37
      %v2432 = vand.u32 %v2195, 2147483648
      %v2433 = vor.u32 1.1754944e-38, %v2432
      %v2434 = vsel %vm2431, %v2433, %v2429
      %v2435 = vmul.f32 %v2119, %v2434
      %v2436 = vrcp.pop %v2198
      %v2437 = vmul.f32 %v2198, %v2436
      %v2438 = vsub.f32 1.0, %v2437
      %v2439 = vmul.f32 %v2436, %v2438
      %v2440 = vadd.f32 %v2436, %v2439
      %vm2441 = vweird.f32 %v2198
      %vm2442 = vweird.f32 %v2436
      %vm2443 = vmor %vm2441, %vm2442
      %v2444 = vsel %vm2443, %v2436, %v2440
      %v2445 = vand.u32 2147483647, %v2198
      %vm2446 = vcmp.eq.f32.partialorder %v2445, 8.507059e+37
      %v2447 = vand.u32 %v2198, 2147483648
      %v2448 = vor.u32 1.1754944e-38, %v2447
      %v2449 = vsel %vm2446, %v2448, %v2444
      %v2450 = vmul.f32 %v2121, %v2449
      %v2451 = vrcp.pop %v2201
      %v2452 = vmul.f32 %v2201, %v2451
      %v2453 = vsub.f32 1.0, %v2452
      %v2454 = vmul.f32 %v2451, %v2453
      %v2455 = vadd.f32 %v2451, %v2454
      %vm2456 = vweird.f32 %v2201
      %vm2457 = vweird.f32 %v2451
      %vm2458 = vmor %vm2456, %vm2457
      %v2459 = vsel %vm2458, %v2451, %v2455
      %v2460 = vand.u32 2147483647, %v2201
      %vm2461 = vcmp.eq.f32.partialorder %v2460, 8.507059e+37
      %v2462 = vand.u32 %v2201, 2147483648
      %v2463 = vor.u32 1.1754944e-38, %v2462
      %v2464 = vsel %vm2461, %v2463, %v2459
      %v2465 = vmul.f32 %v2123, %v2464
      %v2466 = vrcp.pop %v2204
      %v2467 = vmul.f32 %v2204, %v2466
      %v2468 = vsub.f32 1.0, %v2467
      %v2469 = vmul.f32 %v2466, %v2468
      %v2470 = vadd.f32 %v2466, %v2469
      %vm2471 = vweird.f32 %v2204
      %vm2472 = vweird.f32 %v2466
      %vm2473 = vmor %vm2471, %vm2472
      %v2474 = vsel %vm2473, %v2466, %v2470
      %v2475 = vand.u32 2147483647, %v2204
      %vm2476 = vcmp.eq.f32.partialorder %v2475, 8.507059e+37
      %v2477 = vand.u32 %v2204, 2147483648
      %v2478 = vor.u32 1.1754944e-38, %v2477
      %v2479 = vsel %vm2476, %v2478, %v2474
      %v2480 = vmul.f32 %v2125, %v2479
      %v2481 = vrcp.pop %v2207
      %v2482 = vmul.f32 %v2207, %v2481
      %v2483 = vsub.f32 1.0, %v2482
      %v2484 = vmul.f32 %v2481, %v2483
      %v2485 = vadd.f32 %v2481, %v2484
      %vm2486 = vweird.f32 %v2207
      %vm2487 = vweird.f32 %v2481
      %vm2488 = vmor %vm2486, %vm2487
      %v2489 = vsel %vm2488, %v2481, %v2485
      %v2490 = vand.u32 2147483647, %v2207
      %vm2491 = vcmp.eq.f32.partialorder %v2490, 8.507059e+37
      %v2492 = vand.u32 %v2207, 2147483648
      %v2493 = vor.u32 1.1754944e-38, %v2492
      %v2494 = vsel %vm2491, %v2493, %v2489
      %v2495 = vmul.f32 %v2127, %v2494
      %v2496 = vrcp.pop %v2210
      %v2497 = vmul.f32 %v2210, %v2496
      %v2498 = vsub.f32 1.0, %v2497
      %v2499 = vmul.f32 %v2496, %v2498
      %v2500 = vadd.f32 %v2496, %v2499
      %vm2501 = vweird.f32 %v2210
      %vm2502 = vweird.f32 %v2496
      %vm2503 = vmor %vm2501, %vm2502
      %v2504 = vsel %vm2503, %v2496, %v2500
      %v2505 = vand.u32 2147483647, %v2210
      %vm2506 = vcmp.eq.f32.partialorder %v2505, 8.507059e+37
      %v2507 = vand.u32 %v2210, 2147483648
      %v2508 = vor.u32 1.1754944e-38, %v2507
      %v2509 = vsel %vm2506, %v2508, %v2504
      %v2510 = vmul.f32 %v2129, %v2509
      %v2511 = vrcp.pop %v2213
      %v2512 = vmul.f32 %v2213, %v2511
      %v2513 = vsub.f32 1.0, %v2512
      %v2514 = vmul.f32 %v2511, %v2513
      %v2515 = vadd.f32 %v2511, %v2514
      %vm2516 = vweird.f32 %v2213
      %vm2517 = vweird.f32 %v2511
      %vm2518 = vmor %vm2516, %vm2517
      %v2519 = vsel %vm2518, %v2511, %v2515
      %v2520 = vand.u32 2147483647, %v2213
      %vm2521 = vcmp.eq.f32.partialorder %v2520, 8.507059e+37
      %v2522 = vand.u32 %v2213, 2147483648
      %v2523 = vor.u32 1.1754944e-38, %v2522
      %v2524 = vsel %vm2521, %v2523, %v2519
      %v2525 = vmul.f32 %v2131, %v2524
      %v2526 = vrcp.pop %v2216
      %v2527 = vmul.f32 %v2216, %v2526
      %v2528 = vsub.f32 1.0, %v2527
      %v2529 = vmul.f32 %v2526, %v2528
      %v2530 = vadd.f32 %v2526, %v2529
      %vm2531 = vweird.f32 %v2216
      %vm2532 = vweird.f32 %v2526
      %vm2533 = vmor %vm2531, %vm2532
      %v2534 = vsel %vm2533, %v2526, %v2530
      %v2535 = vand.u32 2147483647, %v2216
      %vm2536 = vcmp.eq.f32.partialorder %v2535, 8.507059e+37
      %v2537 = vand.u32 %v2216, 2147483648
      %v2538 = vor.u32 1.1754944e-38, %v2537
      %v2539 = vsel %vm2536, %v2538, %v2534
      %v2540 = vmul.f32 %v2133, %v2539
      %v2541 = vrcp.pop %v2219
      %v2542 = vmul.f32 %v2219, %v2541
      %v2543 = vsub.f32 1.0, %v2542
      %v2544 = vmul.f32 %v2541, %v2543
      %v2545 = vadd.f32 %v2541, %v2544
      %vm2546 = vweird.f32 %v2219
      %vm2547 = vweird.f32 %v2541
      %vm2548 = vmor %vm2546, %vm2547
      %v2549 = vsel %vm2548, %v2541, %v2545
      %v2550 = vand.u32 2147483647, %v2219
      %vm2551 = vcmp.eq.f32.partialorder %v2550, 8.507059e+37
      %v2552 = vand.u32 %v2219, 2147483648
      %v2553 = vor.u32 1.1754944e-38, %v2552
      %v2554 = vsel %vm2551, %v2553, %v2549
      %v2555 = vmul.f32 %v2135, %v2554
      %v2556 = vrcp.pop %v2222
      %v2557 = vmul.f32 %v2222, %v2556
      %v2558 = vsub.f32 1.0, %v2557
      %v2559 = vmul.f32 %v2556, %v2558
      %v2560 = vadd.f32 %v2556, %v2559
      %vm2561 = vweird.f32 %v2222
      %vm2562 = vweird.f32 %v2556
      %vm2563 = vmor %vm2561, %vm2562
      %v2564 = vsel %vm2563, %v2556, %v2560
      %v2565 = vand.u32 2147483647, %v2222
      %vm2566 = vcmp.eq.f32.partialorder %v2565, 8.507059e+37
      %v2567 = vand.u32 %v2222, 2147483648
      %v2568 = vor.u32 1.1754944e-38, %v2567
      %v2569 = vsel %vm2566, %v2568, %v2564
      %v2570 = vmul.f32 %v2137, %v2569
      %v2571 = vrcp.pop %v2225
      %v2572 = vmul.f32 %v2225, %v2571
      %v2573 = vsub.f32 1.0, %v2572
      %v2574 = vmul.f32 %v2571, %v2573
      %v2575 = vadd.f32 %v2571, %v2574
      %vm2576 = vweird.f32 %v2225
      %vm2577 = vweird.f32 %v2571
      %vm2578 = vmor %vm2576, %vm2577
      %v2579 = vsel %vm2578, %v2571, %v2575
      %v2580 = vand.u32 2147483647, %v2225
      %vm2581 = vcmp.eq.f32.partialorder %v2580, 8.507059e+37
      %v2582 = vand.u32 %v2225, 2147483648
      %v2583 = vor.u32 1.1754944e-38, %v2582
      %v2584 = vsel %vm2581, %v2583, %v2579
      %v2585 = vmul.f32 %v2139, %v2584
      %v2586 = vrcp.pop %v2228
      %v2587 = vmul.f32 %v2228, %v2586
      %v2588 = vsub.f32 1.0, %v2587
      %v2589 = vmul.f32 %v2586, %v2588
      %v2590 = vadd.f32 %v2586, %v2589
      %vm2591 = vweird.f32 %v2228
      %vm2592 = vweird.f32 %v2586
      %vm2593 = vmor %vm2591, %vm2592
      %v2594 = vsel %vm2593, %v2586, %v2590
      %v2595 = vand.u32 2147483647, %v2228
      %vm2596 = vcmp.eq.f32.partialorder %v2595, 8.507059e+37
      %v2597 = vand.u32 %v2228, 2147483648
      %v2598 = vor.u32 1.1754944e-38, %v2597
      %v2599 = vsel %vm2596, %v2598, %v2594
      %v2600 = vmul.f32 %v2141, %v2599
      %v2601 = vrcp.pop %v2231
      %v2602 = vmul.f32 %v2231, %v2601
      %v2603 = vsub.f32 1.0, %v2602
      %v2604 = vmul.f32 %v2601, %v2603
      %v2605 = vadd.f32 %v2601, %v2604
      %vm2606 = vweird.f32 %v2231
      %vm2607 = vweird.f32 %v2601
      %vm2608 = vmor %vm2606, %vm2607
      %v2609 = vsel %vm2608, %v2601, %v2605
      %v2610 = vand.u32 2147483647, %v2231
      %vm2611 = vcmp.eq.f32.partialorder %v2610, 8.507059e+37
      %v2612 = vand.u32 %v2231, 2147483648
      %v2613 = vor.u32 1.1754944e-38, %v2612
      %v2614 = vsel %vm2611, %v2613, %v2609
      %v2615 = vmul.f32 %v2143, %v2614
      %v2616 = vrcp.pop %v2234
      %v2617 = vmul.f32 %v2234, %v2616
      %v2618 = vsub.f32 1.0, %v2617
      %v2619 = vmul.f32 %v2616, %v2618
      %v2620 = vadd.f32 %v2616, %v2619
      %vm2621 = vweird.f32 %v2234
      %vm2622 = vweird.f32 %v2616
      %vm2623 = vmor %vm2621, %vm2622
      %v2624 = vsel %vm2623, %v2616, %v2620
      %v2625 = vand.u32 2147483647, %v2234
      %vm2626 = vcmp.eq.f32.partialorder %v2625, 8.507059e+37
      %v2627 = vand.u32 %v2234, 2147483648
      %v2628 = vor.u32 1.1754944e-38, %v2627
      %v2629 = vsel %vm2626, %v2628, %v2624
      %v2630 = vmul.f32 %v2145, %v2629
      %v2631 = vrcp.pop %v2237
      %v2632 = vmul.f32 %v2237, %v2631
      %v2633 = vsub.f32 1.0, %v2632
      %v2634 = vmul.f32 %v2631, %v2633
      %v2635 = vadd.f32 %v2631, %v2634
      %vm2636 = vweird.f32 %v2237
      %vm2637 = vweird.f32 %v2631
      %vm2638 = vmor %vm2636, %vm2637
      %v2639 = vsel %vm2638, %v2631, %v2635
      %v2640 = vand.u32 2147483647, %v2237
      %vm2641 = vcmp.eq.f32.partialorder %v2640, 8.507059e+37
      %v2642 = vand.u32 %v2237, 2147483648
      %v2643 = vor.u32 1.1754944e-38, %v2642
      %v2644 = vsel %vm2641, %v2643, %v2639
      %v2645 = vmul.f32 %v2147, %v2644
      %v2646 = vrcp.pop %v2240
      %v2647 = vmul.f32 %v2240, %v2646
      %v2648 = vsub.f32 1.0, %v2647
      %v2649 = vmul.f32 %v2646, %v2648
      %v2650 = vadd.f32 %v2646, %v2649
      %vm2651 = vweird.f32 %v2240
      %vm2652 = vweird.f32 %v2646
      %vm2653 = vmor %vm2651, %vm2652
      %v2654 = vsel %vm2653, %v2646, %v2650
      %v2655 = vand.u32 2147483647, %v2240
      %vm2656 = vcmp.eq.f32.partialorder %v2655, 8.507059e+37
      %v2657 = vand.u32 %v2240, 2147483648
      %v2658 = vor.u32 1.1754944e-38, %v2657
      %v2659 = vsel %vm2656, %v2658, %v2654
      %v2660 = vmul.f32 %v2149, %v2659
      %v2661 = vrcp.pop %v2243
      %v2662 = vmul.f32 %v2243, %v2661
      %v2663 = vsub.f32 1.0, %v2662
      %v2664 = vmul.f32 %v2661, %v2663
      %v2665 = vadd.f32 %v2661, %v2664
      %vm2666 = vweird.f32 %v2243
      %vm2667 = vweird.f32 %v2661
      %vm2668 = vmor %vm2666, %vm2667
      %v2669 = vsel %vm2668, %v2661, %v2665
      %v2670 = vand.u32 2147483647, %v2243
      %vm2671 = vcmp.eq.f32.partialorder %v2670, 8.507059e+37
      %v2672 = vand.u32 %v2243, 2147483648
      %v2673 = vor.u32 1.1754944e-38, %v2672
      %v2674 = vsel %vm2671, %v2673, %v2669
      %v2675 = vmul.f32 %v2151, %v2674
      %v2676 = vrcp.pop %v2246
      %v2677 = vmul.f32 %v2246, %v2676
      %v2678 = vsub.f32 1.0, %v2677
      %v2679 = vmul.f32 %v2676, %v2678
      %v2680 = vadd.f32 %v2676, %v2679
      %vm2681 = vweird.f32 %v2246
      %vm2682 = vweird.f32 %v2676
      %vm2683 = vmor %vm2681, %vm2682
      %v2684 = vsel %vm2683, %v2676, %v2680
      %v2685 = vand.u32 2147483647, %v2246
      %vm2686 = vcmp.eq.f32.partialorder %v2685, 8.507059e+37
      %v2687 = vand.u32 %v2246, 2147483648
      %v2688 = vor.u32 1.1754944e-38, %v2687
      %v2689 = vsel %vm2686, %v2688, %v2684
      %v2690 = vmul.f32 %v2153, %v2689
      %v2691 = vrcp.pop %v2249
      %v2692 = vmul.f32 %v2249, %v2691
      %v2693 = vsub.f32 1.0, %v2692
      %v2694 = vmul.f32 %v2691, %v2693
      %v2695 = vadd.f32 %v2691, %v2694
      %vm2696 = vweird.f32 %v2249
      %vm2697 = vweird.f32 %v2691
      %vm2698 = vmor %vm2696, %vm2697
      %v2699 = vsel %vm2698, %v2691, %v2695
      %v2700 = vand.u32 2147483647, %v2249
      %vm2701 = vcmp.eq.f32.partialorder %v2700, 8.507059e+37
      %v2702 = vand.u32 %v2249, 2147483648
      %v2703 = vor.u32 1.1754944e-38, %v2702
      %v2704 = vsel %vm2701, %v2703, %v2699
      %v2705 = vmul.f32 %v2155, %v2704
      %v2706 = vrcp.pop %v2252
      %v2707 = vmul.f32 %v2252, %v2706
      %v2708 = vsub.f32 1.0, %v2707
      %v2709 = vmul.f32 %v2706, %v2708
      %v2710 = vadd.f32 %v2706, %v2709
      %vm2711 = vweird.f32 %v2252
      %vm2712 = vweird.f32 %v2706
      %vm2713 = vmor %vm2711, %vm2712
      %v2714 = vsel %vm2713, %v2706, %v2710
      %v2715 = vand.u32 2147483647, %v2252
      %vm2716 = vcmp.eq.f32.partialorder %v2715, 8.507059e+37
      %v2717 = vand.u32 %v2252, 2147483648
      %v2718 = vor.u32 1.1754944e-38, %v2717
      %v2719 = vsel %vm2716, %v2718, %v2714
      %v2720 = vmul.f32 %v2157, %v2719
      %v2721 = vrcp.pop %v2255
      %v2722 = vmul.f32 %v2255, %v2721
      %v2723 = vsub.f32 1.0, %v2722
      %v2724 = vmul.f32 %v2721, %v2723
      %v2725 = vadd.f32 %v2721, %v2724
      %vm2726 = vweird.f32 %v2255
      %vm2727 = vweird.f32 %v2721
      %vm2728 = vmor %vm2726, %vm2727
      %v2729 = vsel %vm2728, %v2721, %v2725
      %v2730 = vand.u32 2147483647, %v2255
      %vm2731 = vcmp.eq.f32.partialorder %v2730, 8.507059e+37
      %v2732 = vand.u32 %v2255, 2147483648
      %v2733 = vor.u32 1.1754944e-38, %v2732
      %v2734 = vsel %vm2731, %v2733, %v2729
      %v2735 = vmul.f32 %v2159, %v2734
      %2736 = vst.msk [vmem:[%s313] sm:$0xff] %vm1967, %v2270
      %2737 = vst.msk [vmem:[%s313 + $0x8] sm:$0xff] %vm1967, %v2285
      %2738 = vst.msk [vmem:[%s313 + $0x10] sm:$0xff] %vm1967, %v2300
      %2739 = vst.msk [vmem:[%s313 + $0x18] sm:$0xff] %vm1967, %v2315
      %2740 = vst.msk [vmem:[%s313 + $0x20] sm:$0xff] %vm1967, %v2330
      %2741 = vst.msk [vmem:[%s313 + $0x28] sm:$0xff] %vm1967, %v2345
      %2742 = vst.msk [vmem:[%s313 + $0x30] sm:$0xff] %vm1967, %v2360
      %2743 = vst.msk [vmem:[%s313 + $0x38] sm:$0xff] %vm1967, %v2375
      %2744 = vst.msk [vmem:[%s313 + $0x40] sm:$0xff] %vm1967, %v2390
      %2745 = vst.msk [vmem:[%s313 + $0x48] sm:$0xff] %vm1967, %v2405
      %2746 = vst.msk [vmem:[%s313 + $0x50] sm:$0xff] %vm1967, %v2420
      %2747 = vst.msk [vmem:[%s313 + $0x58] sm:$0xff] %vm1967, %v2435
      %2748 = vst.msk [vmem:[%s313 + $0x60] sm:$0xff] %vm1967, %v2450
      %2749 = vst.msk [vmem:[%s313 + $0x68] sm:$0xff] %vm1967, %v2465
      %2750 = vst.msk [vmem:[%s313 + $0x70] sm:$0xff] %vm1967, %v2480
      %2751 = vst.msk [vmem:[%s313 + $0x78] sm:$0xff] %vm1967, %v2495
      %2752 = vst.msk [vmem:[%s313 + $0x80] sm:$0xff] %vm1967, %v2510
      %2753 = vst.msk [vmem:[%s313 + $0x88] sm:$0xff] %vm1967, %v2525
      %2754 = vst.msk [vmem:[%s313 + $0x90] sm:$0xff] %vm1967, %v2540
      %2755 = vst.msk [vmem:[%s313 + $0x98] sm:$0xff] %vm1967, %v2555
      %2756 = vst.msk [vmem:[%s313 + $0xa0] sm:$0xff] %vm1967, %v2570
      %2757 = vst.msk [vmem:[%s313 + $0xa8] sm:$0xff] %vm1967, %v2585
      %2758 = vst.msk [vmem:[%s313 + $0xb0] sm:$0xff] %vm1967, %v2600
      %2759 = vst.msk [vmem:[%s313 + $0xb8] sm:$0xff] %vm1967, %v2615
      %2760 = vst.msk [vmem:[%s313 + $0xc0] sm:$0xff] %vm1967, %v2630
      %2761 = vst.msk [vmem:[%s313 + $0xc8] sm:$0xff] %vm1967, %v2645
      %2762 = vst.msk [vmem:[%s313 + $0xd0] sm:$0xff] %vm1967, %v2660
      %2763 = vst.msk [vmem:[%s313 + $0xd8] sm:$0xff] %vm1967, %v2675
      %2764 = vst.msk [vmem:[%s313 + $0xe0] sm:$0xff] %vm1967, %v2690
      %2765 = vst.msk [vmem:[%s313 + $0xe8] sm:$0xff] %vm1967, %v2705
      %2766 = vst.msk [vmem:[%s313 + $0xf0] sm:$0xff] %vm1967, %v2720
      %2767 = vst.msk [vmem:[%s313 + $0xf8] sm:$0xff] %vm1967, %v2735
      %v2769 = vsel %vm1967, %v2270, 0
      %2771 = vmatpush.msra.mxu0 0.0
      %2772 = vmatpush.msra.mxu0 0.0
      %2773 = vmatpush.msra.mxu0 0.0
      %2774 = vmatpush.msra.mxu0 0.0
      %2775 = vmatpush.msra.mxu0 0.0
      %2776 = vmatpush.msra.mxu0 0.0
      %2777 = vmatpush.msra.mxu0 0.0
      %2778 = vmatpush.msra.mxu0 0.0
      %2779 = vmatpush.msra.mxu0 0.0
      %2780 = vmatpush.msra.mxu0 0.0
      %2781 = vmatpush.msra.mxu0 0.0
      %2782 = vmatpush.msra.mxu0 0.0
      %2783 = vmatpush.msra.mxu0 0.0
      %2784 = vmatpush.msra.mxu0 0.0
      %2785 = vmatpush.msra.mxu0 0.0
      %2786 = vmatpush.msra.mxu0 %v1040
      %2787 = vmatmul.f32.gmra.mxu0 %v2769
      %v2788 = vpop.f32.mrf.mxu0
      %v2789 = vadd.f32 0.0, %v2788
      %2790 = vdwg.mxu0
      %v2792 = vsel %vm1967, %v2285, 0
      %2794 = vmatpush.msra.mxu0 0.0
      %2795 = vmatpush.msra.mxu0 0.0
      %2796 = vmatpush.msra.mxu0 0.0
      %2797 = vmatpush.msra.mxu0 0.0
      %2798 = vmatpush.msra.mxu0 0.0
      %2799 = vmatpush.msra.mxu0 0.0
      %2800 = vmatpush.msra.mxu0 0.0
      %2801 = vmatpush.msra.mxu0 0.0
      %2802 = vmatpush.msra.mxu0 0.0
      %2803 = vmatpush.msra.mxu0 0.0
      %2804 = vmatpush.msra.mxu0 0.0
      %2805 = vmatpush.msra.mxu0 0.0
      %2806 = vmatpush.msra.mxu0 0.0
      %2807 = vmatpush.msra.mxu0 0.0
      %2808 = vmatpush.msra.mxu0 0.0
      %2809 = vmatpush.msra.mxu0 %v1043
      %2810 = vmatmul.f32.gmra.mxu0 %v2792
      %v2811 = vpop.f32.mrf.mxu0
      %v2812 = vadd.f32 0.0, %v2811
      %2813 = vdwg.mxu0
      %v2815 = vsel %vm1967, %v2300, 0
      %2817 = vmatpush.msra.mxu0 0.0
      %2818 = vmatpush.msra.mxu0 0.0
      %2819 = vmatpush.msra.mxu0 0.0
      %2820 = vmatpush.msra.mxu0 0.0
      %2821 = vmatpush.msra.mxu0 0.0
      %2822 = vmatpush.msra.mxu0 0.0
      %2823 = vmatpush.msra.mxu0 0.0
      %2824 = vmatpush.msra.mxu0 0.0
      %2825 = vmatpush.msra.mxu0 0.0
      %2826 = vmatpush.msra.mxu0 0.0
      %2827 = vmatpush.msra.mxu0 0.0
      %2828 = vmatpush.msra.mxu0 0.0
      %2829 = vmatpush.msra.mxu0 0.0
      %2830 = vmatpush.msra.mxu0 0.0
      %2831 = vmatpush.msra.mxu0 0.0
      %2832 = vmatpush.msra.mxu0 %v1046
      %2833 = vmatmul.f32.gmra.mxu0 %v2815
      %v2834 = vpop.f32.mrf.mxu0
      %v2835 = vadd.f32 0.0, %v2834
      %2836 = vdwg.mxu0
      %v2838 = vsel %vm1967, %v2315, 0
      %2840 = vmatpush.msra.mxu0 0.0
      %2841 = vmatpush.msra.mxu0 0.0
      %2842 = vmatpush.msra.mxu0 0.0
      %2843 = vmatpush.msra.mxu0 0.0
      %2844 = vmatpush.msra.mxu0 0.0
      %2845 = vmatpush.msra.mxu0 0.0
      %2846 = vmatpush.msra.mxu0 0.0
      %2847 = vmatpush.msra.mxu0 0.0
      %2848 = vmatpush.msra.mxu0 0.0
      %2849 = vmatpush.msra.mxu0 0.0
      %2850 = vmatpush.msra.mxu0 0.0
      %2851 = vmatpush.msra.mxu0 0.0
      %2852 = vmatpush.msra.mxu0 0.0
      %2853 = vmatpush.msra.mxu0 0.0
      %2854 = vmatpush.msra.mxu0 0.0
      %2855 = vmatpush.msra.mxu0 %v1049
      %2856 = vmatmul.f32.gmra.mxu0 %v2838
      %v2857 = vpop.f32.mrf.mxu0
      %v2858 = vadd.f32 0.0, %v2857
      %2859 = vdwg.mxu0
      %v2861 = vsel %vm1967, %v2330, 0
      %2863 = vmatpush.msra.mxu0 0.0
      %2864 = vmatpush.msra.mxu0 0.0
      %2865 = vmatpush.msra.mxu0 0.0
      %2866 = vmatpush.msra.mxu0 0.0
      %2867 = vmatpush.msra.mxu0 0.0
      %2868 = vmatpush.msra.mxu0 0.0
      %2869 = vmatpush.msra.mxu0 0.0
      %2870 = vmatpush.msra.mxu0 0.0
      %2871 = vmatpush.msra.mxu0 0.0
      %2872 = vmatpush.msra.mxu0 0.0
      %2873 = vmatpush.msra.mxu0 0.0
      %2874 = vmatpush.msra.mxu0 0.0
      %2875 = vmatpush.msra.mxu0 0.0
      %2876 = vmatpush.msra.mxu0 0.0
      %2877 = vmatpush.msra.mxu0 0.0
      %2878 = vmatpush.msra.mxu0 %v1052
      %2879 = vmatmul.f32.gmra.mxu0 %v2861
      %v2880 = vpop.f32.mrf.mxu0
      %v2881 = vadd.f32 0.0, %v2880
      %2882 = vdwg.mxu0
      %v2884 = vsel %vm1967, %v2345, 0
      %2886 = vmatpush.msra.mxu0 0.0
      %2887 = vmatpush.msra.mxu0 0.0
      %2888 = vmatpush.msra.mxu0 0.0
      %2889 = vmatpush.msra.mxu0 0.0
      %2890 = vmatpush.msra.mxu0 0.0
      %2891 = vmatpush.msra.mxu0 0.0
      %2892 = vmatpush.msra.mxu0 0.0
      %2893 = vmatpush.msra.mxu0 0.0
      %2894 = vmatpush.msra.mxu0 0.0
      %2895 = vmatpush.msra.mxu0 0.0
      %2896 = vmatpush.msra.mxu0 0.0
      %2897 = vmatpush.msra.mxu0 0.0
      %2898 = vmatpush.msra.mxu0 0.0
      %2899 = vmatpush.msra.mxu0 0.0
      %2900 = vmatpush.msra.mxu0 0.0
      %2901 = vmatpush.msra.mxu0 %v1055
      %2902 = vmatmul.f32.gmra.mxu0 %v2884
      %v2903 = vpop.f32.mrf.mxu0
      %v2904 = vadd.f32 0.0, %v2903
      %2905 = vdwg.mxu0
      %v2907 = vsel %vm1967, %v2360, 0
      %2909 = vmatpush.msra.mxu0 0.0
      %2910 = vmatpush.msra.mxu0 0.0
      %2911 = vmatpush.msra.mxu0 0.0
      %2912 = vmatpush.msra.mxu0 0.0
      %2913 = vmatpush.msra.mxu0 0.0
      %2914 = vmatpush.msra.mxu0 0.0
      %2915 = vmatpush.msra.mxu0 0.0
      %2916 = vmatpush.msra.mxu0 0.0
      %2917 = vmatpush.msra.mxu0 0.0
      %2918 = vmatpush.msra.mxu0 0.0
      %2919 = vmatpush.msra.mxu0 0.0
      %2920 = vmatpush.msra.mxu0 0.0
      %2921 = vmatpush.msra.mxu0 0.0
      %2922 = vmatpush.msra.mxu0 0.0
      %2923 = vmatpush.msra.mxu0 0.0
      %2924 = vmatpush.msra.mxu0 %v1058
      %2925 = vmatmul.f32.gmra.mxu0 %v2907
      %v2926 = vpop.f32.mrf.mxu0
      %v2927 = vadd.f32 0.0, %v2926
      %2928 = vdwg.mxu0
      %v2930 = vsel %vm1967, %v2375, 0
      %2932 = vmatpush.msra.mxu0 0.0
      %2933 = vmatpush.msra.mxu0 0.0
      %2934 = vmatpush.msra.mxu0 0.0
      %2935 = vmatpush.msra.mxu0 0.0
      %2936 = vmatpush.msra.mxu0 0.0
      %2937 = vmatpush.msra.mxu0 0.0
      %2938 = vmatpush.msra.mxu0 0.0
      %2939 = vmatpush.msra.mxu0 0.0
      %2940 = vmatpush.msra.mxu0 0.0
      %2941 = vmatpush.msra.mxu0 0.0
      %2942 = vmatpush.msra.mxu0 0.0
      %2943 = vmatpush.msra.mxu0 0.0
      %2944 = vmatpush.msra.mxu0 0.0
      %2945 = vmatpush.msra.mxu0 0.0
      %2946 = vmatpush.msra.mxu0 0.0
      %2947 = vmatpush.msra.mxu0 %v1061
      %2948 = vmatmul.f32.gmra.mxu0 %v2930
      %v2949 = vpop.f32.mrf.mxu0
      %v2950 = vadd.f32 0.0, %v2949
      %2951 = vdwg.mxu0
      %v2953 = vsel %vm1967, %v2390, 0
      %2955 = vmatpush.msra.mxu0 0.0
      %2956 = vmatpush.msra.mxu0 0.0
      %2957 = vmatpush.msra.mxu0 0.0
      %2958 = vmatpush.msra.mxu0 0.0
      %2959 = vmatpush.msra.mxu0 0.0
      %2960 = vmatpush.msra.mxu0 0.0
      %2961 = vmatpush.msra.mxu0 0.0
      %2962 = vmatpush.msra.mxu0 0.0
      %2963 = vmatpush.msra.mxu0 0.0
      %2964 = vmatpush.msra.mxu0 0.0
      %2965 = vmatpush.msra.mxu0 0.0
      %2966 = vmatpush.msra.mxu0 0.0
      %2967 = vmatpush.msra.mxu0 0.0
      %2968 = vmatpush.msra.mxu0 0.0
      %2969 = vmatpush.msra.mxu0 0.0
      %2970 = vmatpush.msra.mxu0 %v1064
      %2971 = vmatmul.f32.gmra.mxu0 %v2953
      %v2972 = vpop.f32.mrf.mxu0
      %v2973 = vadd.f32 0.0, %v2972
      %2974 = vdwg.mxu0
      %v2976 = vsel %vm1967, %v2405, 0
      %2978 = vmatpush.msra.mxu0 0.0
      %2979 = vmatpush.msra.mxu0 0.0
      %2980 = vmatpush.msra.mxu0 0.0
      %2981 = vmatpush.msra.mxu0 0.0
      %2982 = vmatpush.msra.mxu0 0.0
      %2983 = vmatpush.msra.mxu0 0.0
      %2984 = vmatpush.msra.mxu0 0.0
      %2985 = vmatpush.msra.mxu0 0.0
      %2986 = vmatpush.msra.mxu0 0.0
      %2987 = vmatpush.msra.mxu0 0.0
      %2988 = vmatpush.msra.mxu0 0.0
      %2989 = vmatpush.msra.mxu0 0.0
      %2990 = vmatpush.msra.mxu0 0.0
      %2991 = vmatpush.msra.mxu0 0.0
      %2992 = vmatpush.msra.mxu0 0.0
      %2993 = vmatpush.msra.mxu0 %v1067
      %2994 = vmatmul.f32.gmra.mxu0 %v2976
      %v2995 = vpop.f32.mrf.mxu0
      %v2996 = vadd.f32 0.0, %v2995
      %2997 = vdwg.mxu0
      %v2999 = vsel %vm1967, %v2420, 0
      %3001 = vmatpush.msra.mxu0 0.0
      %3002 = vmatpush.msra.mxu0 0.0
      %3003 = vmatpush.msra.mxu0 0.0
      %3004 = vmatpush.msra.mxu0 0.0
      %3005 = vmatpush.msra.mxu0 0.0
      %3006 = vmatpush.msra.mxu0 0.0
      %3007 = vmatpush.msra.mxu0 0.0
      %3008 = vmatpush.msra.mxu0 0.0
      %3009 = vmatpush.msra.mxu0 0.0
      %3010 = vmatpush.msra.mxu0 0.0
      %3011 = vmatpush.msra.mxu0 0.0
      %3012 = vmatpush.msra.mxu0 0.0
      %3013 = vmatpush.msra.mxu0 0.0
      %3014 = vmatpush.msra.mxu0 0.0
      %3015 = vmatpush.msra.mxu0 0.0
      %3016 = vmatpush.msra.mxu0 %v1070
      %3017 = vmatmul.f32.gmra.mxu0 %v2999
      %v3018 = vpop.f32.mrf.mxu0
      %v3019 = vadd.f32 0.0, %v3018
      %3020 = vdwg.mxu0
      %v3022 = vsel %vm1967, %v2435, 0
      %3024 = vmatpush.msra.mxu0 0.0
      %3025 = vmatpush.msra.mxu0 0.0
      %3026 = vmatpush.msra.mxu0 0.0
      %3027 = vmatpush.msra.mxu0 0.0
      %3028 = vmatpush.msra.mxu0 0.0
      %3029 = vmatpush.msra.mxu0 0.0
      %3030 = vmatpush.msra.mxu0 0.0
      %3031 = vmatpush.msra.mxu0 0.0
      %3032 = vmatpush.msra.mxu0 0.0
      %3033 = vmatpush.msra.mxu0 0.0
      %3034 = vmatpush.msra.mxu0 0.0
      %3035 = vmatpush.msra.mxu0 0.0
      %3036 = vmatpush.msra.mxu0 0.0
      %3037 = vmatpush.msra.mxu0 0.0
      %3038 = vmatpush.msra.mxu0 0.0
      %3039 = vmatpush.msra.mxu0 %v1073
      %3040 = vmatmul.f32.gmra.mxu0 %v3022
      %v3041 = vpop.f32.mrf.mxu0
      %v3042 = vadd.f32 0.0, %v3041
      %3043 = vdwg.mxu0
      %v3045 = vsel %vm1967, %v2450, 0
      %3047 = vmatpush.msra.mxu0 0.0
      %3048 = vmatpush.msra.mxu0 0.0
      %3049 = vmatpush.msra.mxu0 0.0
      %3050 = vmatpush.msra.mxu0 0.0
      %3051 = vmatpush.msra.mxu0 0.0
      %3052 = vmatpush.msra.mxu0 0.0
      %3053 = vmatpush.msra.mxu0 0.0
      %3054 = vmatpush.msra.mxu0 0.0
      %3055 = vmatpush.msra.mxu0 0.0
      %3056 = vmatpush.msra.mxu0 0.0
      %3057 = vmatpush.msra.mxu0 0.0
      %3058 = vmatpush.msra.mxu0 0.0
      %3059 = vmatpush.msra.mxu0 0.0
      %3060 = vmatpush.msra.mxu0 0.0
      %3061 = vmatpush.msra.mxu0 0.0
      %3062 = vmatpush.msra.mxu0 %v1076
      %3063 = vmatmul.f32.gmra.mxu0 %v3045
      %v3064 = vpop.f32.mrf.mxu0
      %v3065 = vadd.f32 0.0, %v3064
      %3066 = vdwg.mxu0
      %v3068 = vsel %vm1967, %v2465, 0
      %3070 = vmatpush.msra.mxu0 0.0
      %3071 = vmatpush.msra.mxu0 0.0
      %3072 = vmatpush.msra.mxu0 0.0
      %3073 = vmatpush.msra.mxu0 0.0
      %3074 = vmatpush.msra.mxu0 0.0
      %3075 = vmatpush.msra.mxu0 0.0
      %3076 = vmatpush.msra.mxu0 0.0
      %3077 = vmatpush.msra.mxu0 0.0
      %3078 = vmatpush.msra.mxu0 0.0
      %3079 = vmatpush.msra.mxu0 0.0
      %3080 = vmatpush.msra.mxu0 0.0
      %3081 = vmatpush.msra.mxu0 0.0
      %3082 = vmatpush.msra.mxu0 0.0
      %3083 = vmatpush.msra.mxu0 0.0
      %3084 = vmatpush.msra.mxu0 0.0
      %3085 = vmatpush.msra.mxu0 %v1079
      %3086 = vmatmul.f32.gmra.mxu0 %v3068
      %v3087 = vpop.f32.mrf.mxu0
      %v3088 = vadd.f32 0.0, %v3087
      %3089 = vdwg.mxu0
      %v3091 = vsel %vm1967, %v2480, 0
      %3093 = vmatpush.msra.mxu0 0.0
      %3094 = vmatpush.msra.mxu0 0.0
      %3095 = vmatpush.msra.mxu0 0.0
      %3096 = vmatpush.msra.mxu0 0.0
      %3097 = vmatpush.msra.mxu0 0.0
      %3098 = vmatpush.msra.mxu0 0.0
      %3099 = vmatpush.msra.mxu0 0.0
      %3100 = vmatpush.msra.mxu0 0.0
      %3101 = vmatpush.msra.mxu0 0.0
      %3102 = vmatpush.msra.mxu0 0.0
      %3103 = vmatpush.msra.mxu0 0.0
      %3104 = vmatpush.msra.mxu0 0.0
      %3105 = vmatpush.msra.mxu0 0.0
      %3106 = vmatpush.msra.mxu0 0.0
      %3107 = vmatpush.msra.mxu0 0.0
      %3108 = vmatpush.msra.mxu0 %v1082
      %3109 = vmatmul.f32.gmra.mxu0 %v3091
      %v3110 = vpop.f32.mrf.mxu0
      %v3111 = vadd.f32 0.0, %v3110
      %3112 = vdwg.mxu0
      %v3114 = vsel %vm1967, %v2495, 0
      %3116 = vmatpush.msra.mxu0 0.0
      %3117 = vmatpush.msra.mxu0 0.0
      %3118 = vmatpush.msra.mxu0 0.0
      %3119 = vmatpush.msra.mxu0 0.0
      %3120 = vmatpush.msra.mxu0 0.0
      %3121 = vmatpush.msra.mxu0 0.0
      %3122 = vmatpush.msra.mxu0 0.0
      %3123 = vmatpush.msra.mxu0 0.0
      %3124 = vmatpush.msra.mxu0 0.0
      %3125 = vmatpush.msra.mxu0 0.0
      %3126 = vmatpush.msra.mxu0 0.0
      %3127 = vmatpush.msra.mxu0 0.0
      %3128 = vmatpush.msra.mxu0 0.0
      %3129 = vmatpush.msra.mxu0 0.0
      %3130 = vmatpush.msra.mxu0 0.0
      %3131 = vmatpush.msra.mxu0 %v1085
      %3132 = vmatmul.f32.gmra.mxu0 %v3114
      %v3133 = vpop.f32.mrf.mxu0
      %v3134 = vadd.f32 0.0, %v3133
      %3135 = vdwg.mxu0
      %v3137 = vsel %vm1967, %v2510, 0
      %3139 = vmatpush.msra.mxu0 0.0
      %3140 = vmatpush.msra.mxu0 0.0
      %3141 = vmatpush.msra.mxu0 0.0
      %3142 = vmatpush.msra.mxu0 0.0
      %3143 = vmatpush.msra.mxu0 0.0
      %3144 = vmatpush.msra.mxu0 0.0
      %3145 = vmatpush.msra.mxu0 0.0
      %3146 = vmatpush.msra.mxu0 0.0
      %3147 = vmatpush.msra.mxu0 0.0
      %3148 = vmatpush.msra.mxu0 0.0
      %3149 = vmatpush.msra.mxu0 0.0
      %3150 = vmatpush.msra.mxu0 0.0
      %3151 = vmatpush.msra.mxu0 0.0
      %3152 = vmatpush.msra.mxu0 0.0
      %3153 = vmatpush.msra.mxu0 0.0
      %3154 = vmatpush.msra.mxu0 %v1088
      %3155 = vmatmul.f32.gmra.mxu0 %v3137
      %v3156 = vpop.f32.mrf.mxu0
      %v3157 = vadd.f32 0.0, %v3156
      %3158 = vdwg.mxu0
      %v3160 = vsel %vm1967, %v2525, 0
      %3162 = vmatpush.msra.mxu0 0.0
      %3163 = vmatpush.msra.mxu0 0.0
      %3164 = vmatpush.msra.mxu0 0.0
      %3165 = vmatpush.msra.mxu0 0.0
      %3166 = vmatpush.msra.mxu0 0.0
      %3167 = vmatpush.msra.mxu0 0.0
      %3168 = vmatpush.msra.mxu0 0.0
      %3169 = vmatpush.msra.mxu0 0.0
      %3170 = vmatpush.msra.mxu0 0.0
      %3171 = vmatpush.msra.mxu0 0.0
      %3172 = vmatpush.msra.mxu0 0.0
      %3173 = vmatpush.msra.mxu0 0.0
      %3174 = vmatpush.msra.mxu0 0.0
      %3175 = vmatpush.msra.mxu0 0.0
      %3176 = vmatpush.msra.mxu0 0.0
      %3177 = vmatpush.msra.mxu0 %v1091
      %3178 = vmatmul.f32.gmra.mxu0 %v3160
      %v3179 = vpop.f32.mrf.mxu0
      %v3180 = vadd.f32 0.0, %v3179
      %3181 = vdwg.mxu0
      %v3183 = vsel %vm1967, %v2540, 0
      %3185 = vmatpush.msra.mxu0 0.0
      %3186 = vmatpush.msra.mxu0 0.0
      %3187 = vmatpush.msra.mxu0 0.0
      %3188 = vmatpush.msra.mxu0 0.0
      %3189 = vmatpush.msra.mxu0 0.0
      %3190 = vmatpush.msra.mxu0 0.0
      %3191 = vmatpush.msra.mxu0 0.0
      %3192 = vmatpush.msra.mxu0 0.0
      %3193 = vmatpush.msra.mxu0 0.0
      %3194 = vmatpush.msra.mxu0 0.0
      %3195 = vmatpush.msra.mxu0 0.0
      %3196 = vmatpush.msra.mxu0 0.0
      %3197 = vmatpush.msra.mxu0 0.0
      %3198 = vmatpush.msra.mxu0 0.0
      %3199 = vmatpush.msra.mxu0 0.0
      %3200 = vmatpush.msra.mxu0 %v1094
      %3201 = vmatmul.f32.gmra.mxu0 %v3183
      %v3202 = vpop.f32.mrf.mxu0
      %v3203 = vadd.f32 0.0, %v3202
      %3204 = vdwg.mxu0
      %v3206 = vsel %vm1967, %v2555, 0
      %3208 = vmatpush.msra.mxu0 0.0
      %3209 = vmatpush.msra.mxu0 0.0
      %3210 = vmatpush.msra.mxu0 0.0
      %3211 = vmatpush.msra.mxu0 0.0
      %3212 = vmatpush.msra.mxu0 0.0
      %3213 = vmatpush.msra.mxu0 0.0
      %3214 = vmatpush.msra.mxu0 0.0
      %3215 = vmatpush.msra.mxu0 0.0
      %3216 = vmatpush.msra.mxu0 0.0
      %3217 = vmatpush.msra.mxu0 0.0
      %3218 = vmatpush.msra.mxu0 0.0
      %3219 = vmatpush.msra.mxu0 0.0
      %3220 = vmatpush.msra.mxu0 0.0
      %3221 = vmatpush.msra.mxu0 0.0
      %3222 = vmatpush.msra.mxu0 0.0
      %3223 = vmatpush.msra.mxu0 %v1097
      %3224 = vmatmul.f32.gmra.mxu0 %v3206
      %v3225 = vpop.f32.mrf.mxu0
      %v3226 = vadd.f32 0.0, %v3225
      %3227 = vdwg.mxu0
      %v3229 = vsel %vm1967, %v2570, 0
      %3231 = vmatpush.msra.mxu0 0.0
      %3232 = vmatpush.msra.mxu0 0.0
      %3233 = vmatpush.msra.mxu0 0.0
      %3234 = vmatpush.msra.mxu0 0.0
      %3235 = vmatpush.msra.mxu0 0.0
      %3236 = vmatpush.msra.mxu0 0.0
      %3237 = vmatpush.msra.mxu0 0.0
      %3238 = vmatpush.msra.mxu0 0.0
      %3239 = vmatpush.msra.mxu0 0.0
      %3240 = vmatpush.msra.mxu0 0.0
      %3241 = vmatpush.msra.mxu0 0.0
      %3242 = vmatpush.msra.mxu0 0.0
      %3243 = vmatpush.msra.mxu0 0.0
      %3244 = vmatpush.msra.mxu0 0.0
      %3245 = vmatpush.msra.mxu0 0.0
      %3246 = vmatpush.msra.mxu0 %v1100
      %3247 = vmatmul.f32.gmra.mxu0 %v3229
      %v3248 = vpop.f32.mrf.mxu0
      %v3249 = vadd.f32 0.0, %v3248
      %3250 = vdwg.mxu0
      %v3252 = vsel %vm1967, %v2585, 0
      %3254 = vmatpush.msra.mxu0 0.0
      %3255 = vmatpush.msra.mxu0 0.0
      %3256 = vmatpush.msra.mxu0 0.0
      %3257 = vmatpush.msra.mxu0 0.0
      %3258 = vmatpush.msra.mxu0 0.0
      %3259 = vmatpush.msra.mxu0 0.0
      %3260 = vmatpush.msra.mxu0 0.0
      %3261 = vmatpush.msra.mxu0 0.0
      %3262 = vmatpush.msra.mxu0 0.0
      %3263 = vmatpush.msra.mxu0 0.0
      %3264 = vmatpush.msra.mxu0 0.0
      %3265 = vmatpush.msra.mxu0 0.0
      %3266 = vmatpush.msra.mxu0 0.0
      %3267 = vmatpush.msra.mxu0 0.0
      %3268 = vmatpush.msra.mxu0 0.0
      %3269 = vmatpush.msra.mxu0 %v1103
      %3270 = vmatmul.f32.gmra.mxu0 %v3252
      %v3271 = vpop.f32.mrf.mxu0
      %v3272 = vadd.f32 0.0, %v3271
      %3273 = vdwg.mxu0
      %v3275 = vsel %vm1967, %v2600, 0
      %3277 = vmatpush.msra.mxu0 0.0
      %3278 = vmatpush.msra.mxu0 0.0
      %3279 = vmatpush.msra.mxu0 0.0
      %3280 = vmatpush.msra.mxu0 0.0
      %3281 = vmatpush.msra.mxu0 0.0
      %3282 = vmatpush.msra.mxu0 0.0
      %3283 = vmatpush.msra.mxu0 0.0
      %3284 = vmatpush.msra.mxu0 0.0
      %3285 = vmatpush.msra.mxu0 0.0
      %3286 = vmatpush.msra.mxu0 0.0
      %3287 = vmatpush.msra.mxu0 0.0
      %3288 = vmatpush.msra.mxu0 0.0
      %3289 = vmatpush.msra.mxu0 0.0
      %3290 = vmatpush.msra.mxu0 0.0
      %3291 = vmatpush.msra.mxu0 0.0
      %3292 = vmatpush.msra.mxu0 %v1106
      %3293 = vmatmul.f32.gmra.mxu0 %v3275
      %v3294 = vpop.f32.mrf.mxu0
      %v3295 = vadd.f32 0.0, %v3294
      %3296 = vdwg.mxu0
      %v3298 = vsel %vm1967, %v2615, 0
      %3300 = vmatpush.msra.mxu0 0.0
      %3301 = vmatpush.msra.mxu0 0.0
      %3302 = vmatpush.msra.mxu0 0.0
      %3303 = vmatpush.msra.mxu0 0.0
      %3304 = vmatpush.msra.mxu0 0.0
      %3305 = vmatpush.msra.mxu0 0.0
      %3306 = vmatpush.msra.mxu0 0.0
      %3307 = vmatpush.msra.mxu0 0.0
      %3308 = vmatpush.msra.mxu0 0.0
      %3309 = vmatpush.msra.mxu0 0.0
      %3310 = vmatpush.msra.mxu0 0.0
      %3311 = vmatpush.msra.mxu0 0.0
      %3312 = vmatpush.msra.mxu0 0.0
      %3313 = vmatpush.msra.mxu0 0.0
      %3314 = vmatpush.msra.mxu0 0.0
      %3315 = vmatpush.msra.mxu0 %v1109
      %3316 = vmatmul.f32.gmra.mxu0 %v3298
      %v3317 = vpop.f32.mrf.mxu0
      %v3318 = vadd.f32 0.0, %v3317
      %3319 = vdwg.mxu0
      %v3321 = vsel %vm1967, %v2630, 0
      %3323 = vmatpush.msra.mxu0 0.0
      %3324 = vmatpush.msra.mxu0 0.0
      %3325 = vmatpush.msra.mxu0 0.0
      %3326 = vmatpush.msra.mxu0 0.0
      %3327 = vmatpush.msra.mxu0 0.0
      %3328 = vmatpush.msra.mxu0 0.0
      %3329 = vmatpush.msra.mxu0 0.0
      %3330 = vmatpush.msra.mxu0 0.0
      %3331 = vmatpush.msra.mxu0 0.0
      %3332 = vmatpush.msra.mxu0 0.0
      %3333 = vmatpush.msra.mxu0 0.0
      %3334 = vmatpush.msra.mxu0 0.0
      %3335 = vmatpush.msra.mxu0 0.0
      %3336 = vmatpush.msra.mxu0 0.0
      %3337 = vmatpush.msra.mxu0 0.0
      %3338 = vmatpush.msra.mxu0 %v1112
      %3339 = vmatmul.f32.gmra.mxu0 %v3321
      %v3340 = vpop.f32.mrf.mxu0
      %v3341 = vadd.f32 0.0, %v3340
      %3342 = vdwg.mxu0
      %v3344 = vsel %vm1967, %v2645, 0
      %3346 = vmatpush.msra.mxu0 0.0
      %3347 = vmatpush.msra.mxu0 0.0
      %3348 = vmatpush.msra.mxu0 0.0
      %3349 = vmatpush.msra.mxu0 0.0
      %3350 = vmatpush.msra.mxu0 0.0
      %3351 = vmatpush.msra.mxu0 0.0
      %3352 = vmatpush.msra.mxu0 0.0
      %3353 = vmatpush.msra.mxu0 0.0
      %3354 = vmatpush.msra.mxu0 0.0
      %3355 = vmatpush.msra.mxu0 0.0
      %3356 = vmatpush.msra.mxu0 0.0
      %3357 = vmatpush.msra.mxu0 0.0
      %3358 = vmatpush.msra.mxu0 0.0
      %3359 = vmatpush.msra.mxu0 0.0
      %3360 = vmatpush.msra.mxu0 0.0
      %3361 = vmatpush.msra.mxu0 %v1115
      %3362 = vmatmul.f32.gmra.mxu0 %v3344
      %v3363 = vpop.f32.mrf.mxu0
      %v3364 = vadd.f32 0.0, %v3363
      %3365 = vdwg.mxu0
      %v3367 = vsel %vm1967, %v2660, 0
      %3369 = vmatpush.msra.mxu0 0.0
      %3370 = vmatpush.msra.mxu0 0.0
      %3371 = vmatpush.msra.mxu0 0.0
      %3372 = vmatpush.msra.mxu0 0.0
      %3373 = vmatpush.msra.mxu0 0.0
      %3374 = vmatpush.msra.mxu0 0.0
      %3375 = vmatpush.msra.mxu0 0.0
      %3376 = vmatpush.msra.mxu0 0.0
      %3377 = vmatpush.msra.mxu0 0.0
      %3378 = vmatpush.msra.mxu0 0.0
      %3379 = vmatpush.msra.mxu0 0.0
      %3380 = vmatpush.msra.mxu0 0.0
      %3381 = vmatpush.msra.mxu0 0.0
      %3382 = vmatpush.msra.mxu0 0.0
      %3383 = vmatpush.msra.mxu0 0.0
      %3384 = vmatpush.msra.mxu0 %v1118
      %3385 = vmatmul.f32.gmra.mxu0 %v3367
      %v3386 = vpop.f32.mrf.mxu0
      %v3387 = vadd.f32 0.0, %v3386
      %3388 = vdwg.mxu0
      %v3390 = vsel %vm1967, %v2675, 0
      %3392 = vmatpush.msra.mxu0 0.0
      %3393 = vmatpush.msra.mxu0 0.0
      %3394 = vmatpush.msra.mxu0 0.0
      %3395 = vmatpush.msra.mxu0 0.0
      %3396 = vmatpush.msra.mxu0 0.0
      %3397 = vmatpush.msra.mxu0 0.0
      %3398 = vmatpush.msra.mxu0 0.0
      %3399 = vmatpush.msra.mxu0 0.0
      %3400 = vmatpush.msra.mxu0 0.0
      %3401 = vmatpush.msra.mxu0 0.0
      %3402 = vmatpush.msra.mxu0 0.0
      %3403 = vmatpush.msra.mxu0 0.0
      %3404 = vmatpush.msra.mxu0 0.0
      %3405 = vmatpush.msra.mxu0 0.0
      %3406 = vmatpush.msra.mxu0 0.0
      %3407 = vmatpush.msra.mxu0 %v1121
      %3408 = vmatmul.f32.gmra.mxu0 %v3390
      %v3409 = vpop.f32.mrf.mxu0
      %v3410 = vadd.f32 0.0, %v3409
      %3411 = vdwg.mxu0
      %v3413 = vsel %vm1967, %v2690, 0
      %3415 = vmatpush.msra.mxu0 0.0
      %3416 = vmatpush.msra.mxu0 0.0
      %3417 = vmatpush.msra.mxu0 0.0
      %3418 = vmatpush.msra.mxu0 0.0
      %3419 = vmatpush.msra.mxu0 0.0
      %3420 = vmatpush.msra.mxu0 0.0
      %3421 = vmatpush.msra.mxu0 0.0
      %3422 = vmatpush.msra.mxu0 0.0
      %3423 = vmatpush.msra.mxu0 0.0
      %3424 = vmatpush.msra.mxu0 0.0
      %3425 = vmatpush.msra.mxu0 0.0
      %3426 = vmatpush.msra.mxu0 0.0
      %3427 = vmatpush.msra.mxu0 0.0
      %3428 = vmatpush.msra.mxu0 0.0
      %3429 = vmatpush.msra.mxu0 0.0
      %3430 = vmatpush.msra.mxu0 %v1124
      %3431 = vmatmul.f32.gmra.mxu0 %v3413
      %v3432 = vpop.f32.mrf.mxu0
      %v3433 = vadd.f32 0.0, %v3432
      %3434 = vdwg.mxu0
      %v3436 = vsel %vm1967, %v2705, 0
      %3438 = vmatpush.msra.mxu0 0.0
      %3439 = vmatpush.msra.mxu0 0.0
      %3440 = vmatpush.msra.mxu0 0.0
      %3441 = vmatpush.msra.mxu0 0.0
      %3442 = vmatpush.msra.mxu0 0.0
      %3443 = vmatpush.msra.mxu0 0.0
      %3444 = vmatpush.msra.mxu0 0.0
      %3445 = vmatpush.msra.mxu0 0.0
      %3446 = vmatpush.msra.mxu0 0.0
      %3447 = vmatpush.msra.mxu0 0.0
      %3448 = vmatpush.msra.mxu0 0.0
      %3449 = vmatpush.msra.mxu0 0.0
      %3450 = vmatpush.msra.mxu0 0.0
      %3451 = vmatpush.msra.mxu0 0.0
      %3452 = vmatpush.msra.mxu0 0.0
      %3453 = vmatpush.msra.mxu0 %v1127
      %3454 = vmatmul.f32.gmra.mxu0 %v3436
      %v3455 = vpop.f32.mrf.mxu0
      %v3456 = vadd.f32 0.0, %v3455
      %3457 = vdwg.mxu0
      %v3459 = vsel %vm1967, %v2720, 0
      %3461 = vmatpush.msra.mxu0 0.0
      %3462 = vmatpush.msra.mxu0 0.0
      %3463 = vmatpush.msra.mxu0 0.0
      %3464 = vmatpush.msra.mxu0 0.0
      %3465 = vmatpush.msra.mxu0 0.0
      %3466 = vmatpush.msra.mxu0 0.0
      %3467 = vmatpush.msra.mxu0 0.0
      %3468 = vmatpush.msra.mxu0 0.0
      %3469 = vmatpush.msra.mxu0 0.0
      %3470 = vmatpush.msra.mxu0 0.0
      %3471 = vmatpush.msra.mxu0 0.0
      %3472 = vmatpush.msra.mxu0 0.0
      %3473 = vmatpush.msra.mxu0 0.0
      %3474 = vmatpush.msra.mxu0 0.0
      %3475 = vmatpush.msra.mxu0 0.0
      %3476 = vmatpush.msra.mxu0 %v1130
      %3477 = vmatmul.f32.gmra.mxu0 %v3459
      %v3478 = vpop.f32.mrf.mxu0
      %v3479 = vadd.f32 0.0, %v3478
      %3480 = vdwg.mxu0
      %v3482 = vsel %vm1967, %v2735, 0
      %3484 = vmatpush.msra.mxu0 0.0
      %3485 = vmatpush.msra.mxu0 0.0
      %3486 = vmatpush.msra.mxu0 0.0
      %3487 = vmatpush.msra.mxu0 0.0
      %3488 = vmatpush.msra.mxu0 0.0
      %3489 = vmatpush.msra.mxu0 0.0
      %3490 = vmatpush.msra.mxu0 0.0
      %3491 = vmatpush.msra.mxu0 0.0
      %3492 = vmatpush.msra.mxu0 0.0
      %3493 = vmatpush.msra.mxu0 0.0
      %3494 = vmatpush.msra.mxu0 0.0
      %3495 = vmatpush.msra.mxu0 0.0
      %3496 = vmatpush.msra.mxu0 0.0
      %3497 = vmatpush.msra.mxu0 0.0
      %3498 = vmatpush.msra.mxu0 0.0
      %3499 = vmatpush.msra.mxu0 %v1133
      %3500 = vmatmul.f32.gmra.mxu0 %v3482
      %v3501 = vpop.f32.mrf.mxu0
      %v3502 = vadd.f32 0.0, %v3501
      %3503 = vdwg.mxu0
      %v3536 = vrot.slane %v2812, 7
      %vm3537 = vcmask 1041409
      %v3538 = vsel %vm3537, %v3536, %v2789
      %v3539 = vrot.slane %v2835, 6
      %vm3540 = vcmask 1042434
      %v3541 = vsel %vm3540, %v3539, %v3538
      %v3542 = vrot.slane %v2858, 5
      %vm3543 = vcmask 1043459
      %v3544 = vsel %vm3543, %v3542, %v3541
      %v3545 = vrot.slane %v2881, 4
      %vm3546 = vcmask 1044484
      %v3547 = vsel %vm3546, %v3545, %v3544
      %v3548 = vrot.slane %v2904, 3
      %vm3549 = vcmask 1045509
      %v3550 = vsel %vm3549, %v3548, %v3547
      %v3551 = vrot.slane %v2927, 2
      %vm3552 = vcmask 1046534
      %v3553 = vsel %vm3552, %v3551, %v3550
      %v3554 = vrot.slane %v2950, 1
      %vm3555 = vcmask 1047559
      %v3556 = vsel %vm3555, %v3554, %v3553
      %v3557 = vrot.slane %v2996, 7
      %v3558 = vsel %vm3537, %v3557, %v2973
      %v3559 = vrot.slane %v3019, 6
      %v3560 = vsel %vm3540, %v3559, %v3558
      %v3561 = vrot.slane %v3042, 5
      %v3562 = vsel %vm3543, %v3561, %v3560
      %v3563 = vrot.slane %v3065, 4
      %v3564 = vsel %vm3546, %v3563, %v3562
      %v3565 = vrot.slane %v3088, 3
      %v3566 = vsel %vm3549, %v3565, %v3564
      %v3567 = vrot.slane %v3111, 2
      %v3568 = vsel %vm3552, %v3567, %v3566
      %v3569 = vrot.slane %v3134, 1
      %v3570 = vsel %vm3555, %v3569, %v3568
      %v3571 = vrot.slane %v3180, 7
      %v3572 = vsel %vm3537, %v3571, %v3157
      %v3573 = vrot.slane %v3203, 6
      %v3574 = vsel %vm3540, %v3573, %v3572
      %v3575 = vrot.slane %v3226, 5
      %v3576 = vsel %vm3543, %v3575, %v3574
      %v3577 = vrot.slane %v3249, 4
      %v3578 = vsel %vm3546, %v3577, %v3576
      %v3579 = vrot.slane %v3272, 3
      %v3580 = vsel %vm3549, %v3579, %v3578
      %v3581 = vrot.slane %v3295, 2
      %v3582 = vsel %vm3552, %v3581, %v3580
      %v3583 = vrot.slane %v3318, 1
      %v3584 = vsel %vm3555, %v3583, %v3582
      %v3585 = vrot.slane %v3364, 7
      %v3586 = vsel %vm3537, %v3585, %v3341
      %v3587 = vrot.slane %v3387, 6
      %v3588 = vsel %vm3540, %v3587, %v3586
      %v3589 = vrot.slane %v3410, 5
      %v3590 = vsel %vm3543, %v3589, %v3588
      %v3591 = vrot.slane %v3433, 4
      %v3592 = vsel %vm3546, %v3591, %v3590
      %v3593 = vrot.slane %v3456, 3
      %v3594 = vsel %vm3549, %v3593, %v3592
      %v3595 = vrot.slane %v3479, 2
      %v3596 = vsel %vm3552, %v3595, %v3594
      %v3597 = vrot.slane %v3502, 1
      %v3598 = vsel %vm3555, %v3597, %v3596
      %3603 = vst.msk [vmem:[%s307] sm:$0xff] %vm355, %v3556
      %3604 = vst.msk [vmem:[%s307 + $0x10] sm:$0xff] %vm355, %v3570
      %3605 = vst.msk [vmem:[%s307 + $0x20] sm:$0xff] %vm355, %v3584
      %3606 = vst.msk [vmem:[%s307 + $0x30] sm:$0xff] %vm355, %v3598
      %v3607 = vrot.slane %v2789, 1
      %v3608 = vsel %vm3537, %v2812, %v3607
      %v3609 = vrot.slane %v2835, 7
      %v3610 = vsel %vm3540, %v3609, %v3608
      %v3611 = vrot.slane %v2858, 6
      %v3612 = vsel %vm3543, %v3611, %v3610
      %v3613 = vrot.slane %v2881, 5
      %v3614 = vsel %vm3546, %v3613, %v3612
      %v3615 = vrot.slane %v2904, 4
      %v3616 = vsel %vm3549, %v3615, %v3614
      %v3617 = vrot.slane %v2927, 3
      %v3618 = vsel %vm3552, %v3617, %v3616
      %v3619 = vrot.slane %v2950, 2
      %v3620 = vsel %vm3555, %v3619, %v3618
      %v3621 = vrot.slane %v2973, 1
      %v3622 = vsel %vm3537, %v2996, %v3621
      %v3623 = vrot.slane %v3019, 7
      %v3624 = vsel %vm3540, %v3623, %v3622
      %v3625 = vrot.slane %v3042, 6
      %v3626 = vsel %vm3543, %v3625, %v3624
      %v3627 = vrot.slane %v3065, 5
      %v3628 = vsel %vm3546, %v3627, %v3626
      %v3629 = vrot.slane %v3088, 4
      %v3630 = vsel %vm3549, %v3629, %v3628
      %v3631 = vrot.slane %v3111, 3
      %v3632 = vsel %vm3552, %v3631, %v3630
      %v3633 = vrot.slane %v3134, 2
      %v3634 = vsel %vm3555, %v3633, %v3632
      %v3635 = vrot.slane %v3157, 1
      %v3636 = vsel %vm3537, %v3180, %v3635
      %v3637 = vrot.slane %v3203, 7
      %v3638 = vsel %vm3540, %v3637, %v3636
      %v3639 = vrot.slane %v3226, 6
      %v3640 = vsel %vm3543, %v3639, %v3638
      %v3641 = vrot.slane %v3249, 5
      %v3642 = vsel %vm3546, %v3641, %v3640
      %v3643 = vrot.slane %v3272, 4
      %v3644 = vsel %vm3549, %v3643, %v3642
      %v3645 = vrot.slane %v3295, 3
      %v3646 = vsel %vm3552, %v3645, %v3644
      %v3647 = vrot.slane %v3318, 2
      %v3648 = vsel %vm3555, %v3647, %v3646
      %v3649 = vrot.slane %v3341, 1
      %v3650 = vsel %vm3537, %v3364, %v3649
      %v3651 = vrot.slane %v3387, 7
      %v3652 = vsel %vm3540, %v3651, %v3650
      %v3653 = vrot.slane %v3410, 6
      %v3654 = vsel %vm3543, %v3653, %v3652
      %v3655 = vrot.slane %v3433, 5
      %v3656 = vsel %vm3546, %v3655, %v3654
      %v3657 = vrot.slane %v3456, 4
      %v3658 = vsel %vm3549, %v3657, %v3656
      %v3659 = vrot.slane %v3479, 3
      %v3660 = vsel %vm3552, %v3659, %v3658
      %v3661 = vrot.slane %v3502, 2
      %v3662 = vsel %vm3555, %v3661, %v3660
      %3663 = vrot.lane.b32.xlu0 %v3620, 32
      %v3664 = vpop.permute.xlu0 %3663
      %3665 = vrot.lane.b32.xlu0 %v3634, 32
      %v3666 = vpop.permute.xlu0 %3665
      %3667 = vrot.lane.b32.xlu0 %v3648, 32
      %v3668 = vpop.permute.xlu0 %3667
      %3669 = vrot.lane.b32.xlu0 %v3662, 32
      %v3670 = vpop.permute.xlu0 %3669
      %vm3675 = vcmask 523520
      %3676 = vst.msk [vmem:[%s307] sm:$0xff] %vm3675, %v3664
      %3677 = vst.msk [vmem:[%s307 + $0x10] sm:$0xff] %vm3675, %v3666
      %3678 = vst.msk [vmem:[%s307 + $0x20] sm:$0xff] %vm3675, %v3668
      %3679 = vst.msk [vmem:[%s307 + $0x30] sm:$0xff] %vm3675, %v3670
      %v3680 = vrot.slane %v2789, 2
      %v3681 = vrot.slane %v2812, 1
      %v3682 = vsel %vm3537, %v3681, %v3680
      %v3683 = vsel %vm3540, %v2835, %v3682
      %v3684 = vrot.slane %v2858, 7
      %v3685 = vsel %vm3543, %v3684, %v3683
      %v3686 = vrot.slane %v2881, 6
      %v3687 = vsel %vm3546, %v3686, %v3685
      %v3688 = vrot.slane %v2904, 5
      %v3689 = vsel %vm3549, %v3688, %v3687
      %v3690 = vrot.slane %v2927, 4
      %v3691 = vsel %vm3552, %v3690, %v3689
      %v3692 = vrot.slane %v2950, 3
      %v3693 = vsel %vm3555, %v3692, %v3691
      %v3694 = vrot.slane %v2973, 2
      %v3695 = vrot.slane %v2996, 1
      %v3696 = vsel %vm3537, %v3695, %v3694
      %v3697 = vsel %vm3540, %v3019, %v3696
      %v3698 = vrot.slane %v3042, 7
      %v3699 = vsel %vm3543, %v3698, %v3697
      %v3700 = vrot.slane %v3065, 6
      %v3701 = vsel %vm3546, %v3700, %v3699
      %v3702 = vrot.slane %v3088, 5
      %v3703 = vsel %vm3549, %v3702, %v3701
      %v3704 = vrot.slane %v3111, 4
      %v3705 = vsel %vm3552, %v3704, %v3703
      %v3706 = vrot.slane %v3134, 3
      %v3707 = vsel %vm3555, %v3706, %v3705
      %v3708 = vrot.slane %v3157, 2
      %v3709 = vrot.slane %v3180, 1
      %v3710 = vsel %vm3537, %v3709, %v3708
      %v3711 = vsel %vm3540, %v3203, %v3710
      %v3712 = vrot.slane %v3226, 7
      %v3713 = vsel %vm3543, %v3712, %v3711
      %v3714 = vrot.slane %v3249, 6
      %v3715 = vsel %vm3546, %v3714, %v3713
      %v3716 = vrot.slane %v3272, 5
      %v3717 = vsel %vm3549, %v3716, %v3715
      %v3718 = vrot.slane %v3295, 4
      %v3719 = vsel %vm3552, %v3718, %v3717
      %v3720 = vrot.slane %v3318, 3
      %v3721 = vsel %vm3555, %v3720, %v3719
      %v3722 = vrot.slane %v3341, 2
      %v3723 = vrot.slane %v3364, 1
      %v3724 = vsel %vm3537, %v3723, %v3722
      %v3725 = vsel %vm3540, %v3387, %v3724
      %v3726 = vrot.slane %v3410, 7
      %v3727 = vsel %vm3543, %v3726, %v3725
      %v3728 = vrot.slane %v3433, 6
      %v3729 = vsel %vm3546, %v3728, %v3727
      %v3730 = vrot.slane %v3456, 5
      %v3731 = vsel %vm3549, %v3730, %v3729
      %v3732 = vrot.slane %v3479, 4
      %v3733 = vsel %vm3552, %v3732, %v3731
      %v3734 = vrot.slane %v3502, 3
      %v3735 = vsel %vm3555, %v3734, %v3733
      %3736 = vrot.lane.b32.xlu0 %v3693, 64
      %v3737 = vpop.permute.xlu0 %3736
      %3738 = vrot.lane.b32.xlu0 %v3707, 64
      %v3739 = vpop.permute.xlu0 %3738
      %3740 = vrot.lane.b32.xlu0 %v3721, 64
      %v3741 = vpop.permute.xlu0 %3740
      %3742 = vrot.lane.b32.xlu0 %v3735, 64
      %v3743 = vpop.permute.xlu0 %3742
      %vm3748 = vcmask 785920
      %3749 = vst.msk [vmem:[%s307] sm:$0xff] %vm3748, %v3737
      %3750 = vst.msk [vmem:[%s307 + $0x10] sm:$0xff] %vm3748, %v3739
      %3751 = vst.msk [vmem:[%s307 + $0x20] sm:$0xff] %vm3748, %v3741
      %3752 = vst.msk [vmem:[%s307 + $0x30] sm:$0xff] %vm3748, %v3743
      %v3753 = vrot.slane %v2789, 3
      %v3754 = vrot.slane %v2812, 2
      %v3755 = vsel %vm3537, %v3754, %v3753
      %v3756 = vrot.slane %v2835, 1
      %v3757 = vsel %vm3540, %v3756, %v3755
      %v3758 = vsel %vm3543, %v2858, %v3757
      %v3759 = vrot.slane %v2881, 7
      %v3760 = vsel %vm3546, %v3759, %v3758
      %v3761 = vrot.slane %v2904, 6
      %v3762 = vsel %vm3549, %v3761, %v3760
      %v3763 = vrot.slane %v2927, 5
      %v3764 = vsel %vm3552, %v3763, %v3762
      %v3765 = vrot.slane %v2950, 4
      %v3766 = vsel %vm3555, %v3765, %v3764
      %v3767 = vrot.slane %v2973, 3
      %v3768 = vrot.slane %v2996, 2
      %v3769 = vsel %vm3537, %v3768, %v3767
      %v3770 = vrot.slane %v3019, 1
      %v3771 = vsel %vm3540, %v3770, %v3769
      %v3772 = vsel %vm3543, %v3042, %v3771
      %v3773 = vrot.slane %v3065, 7
      %v3774 = vsel %vm3546, %v3773, %v3772
      %v3775 = vrot.slane %v3088, 6
      %v3776 = vsel %vm3549, %v3775, %v3774
      %v3777 = vrot.slane %v3111, 5
      %v3778 = vsel %vm3552, %v3777, %v3776
      %v3779 = vrot.slane %v3134, 4
      %v3780 = vsel %vm3555, %v3779, %v3778
      %v3781 = vrot.slane %v3157, 3
      %v3782 = vrot.slane %v3180, 2
      %v3783 = vsel %vm3537, %v3782, %v3781
      %v3784 = vrot.slane %v3203, 1
      %v3785 = vsel %vm3540, %v3784, %v3783
      %v3786 = vsel %vm3543, %v3226, %v3785
      %v3787 = vrot.slane %v3249, 7
      %v3788 = vsel %vm3546, %v3787, %v3786
      %v3789 = vrot.slane %v3272, 6
      %v3790 = vsel %vm3549, %v3789, %v3788
      %v3791 = vrot.slane %v3295, 5
      %v3792 = vsel %vm3552, %v3791, %v3790
      %v3793 = vrot.slane %v3318, 4
      %v3794 = vsel %vm3555, %v3793, %v3792
      %v3795 = vrot.slane %v3341, 3
      %v3796 = vrot.slane %v3364, 2
      %v3797 = vsel %vm3537, %v3796, %v3795
      %v3798 = vrot.slane %v3387, 1
      %v3799 = vsel %vm3540, %v3798, %v3797
      %v3800 = vsel %vm3543, %v3410, %v3799
      %v3801 = vrot.slane %v3433, 7
      %v3802 = vsel %vm3546, %v3801, %v3800
      %v3803 = vrot.slane %v3456, 6
      %v3804 = vsel %vm3549, %v3803, %v3802
      %v3805 = vrot.slane %v3479, 5
      %v3806 = vsel %vm3552, %v3805, %v3804
      %v3807 = vrot.slane %v3502, 4
      %v3808 = vsel %vm3555, %v3807, %v3806
      %3809 = vrot.lane.b32.xlu0 %v3766, 96
      %v3810 = vpop.permute.xlu0 %3809
      %3811 = vrot.lane.b32.xlu0 %v3780, 96
      %v3812 = vpop.permute.xlu0 %3811
      %3813 = vrot.lane.b32.xlu0 %v3794, 96
      %v3814 = vpop.permute.xlu0 %3813
      %3815 = vrot.lane.b32.xlu0 %v3808, 96
      %v3816 = vpop.permute.xlu0 %3815
      %vm3821 = vcmask 1048320
      %3822 = vst.msk [vmem:[%s307] sm:$0xff] %vm3821, %v3810
      %3823 = vst.msk [vmem:[%s307 + $0x10] sm:$0xff] %vm3821, %v3812
      %3824 = vst.msk [vmem:[%s307 + $0x20] sm:$0xff] %vm3821, %v3814
      %3825 = vst.msk [vmem:[%s307 + $0x30] sm:$0xff] %vm3821, %v3816
      %v3826 = vrot.slane %v2789, 4
      %v3827 = vrot.slane %v2812, 3
      %v3828 = vsel %vm3537, %v3827, %v3826
      %v3829 = vrot.slane %v2835, 2
      %v3830 = vsel %vm3540, %v3829, %v3828
      %v3831 = vrot.slane %v2858, 1
      %v3832 = vsel %vm3543, %v3831, %v3830
      %v3833 = vsel %vm3546, %v2881, %v3832
      %v3834 = vrot.slane %v2904, 7
      %v3835 = vsel %vm3549, %v3834, %v3833
      %v3836 = vrot.slane %v2927, 6
      %v3837 = vsel %vm3552, %v3836, %v3835
      %v3838 = vrot.slane %v2950, 5
      %v3839 = vsel %vm3555, %v3838, %v3837
      %v3840 = vrot.slane %v2973, 4
      %v3841 = vrot.slane %v2996, 3
      %v3842 = vsel %vm3537, %v3841, %v3840
      %v3843 = vrot.slane %v3019, 2
      %v3844 = vsel %vm3540, %v3843, %v3842
      %v3845 = vrot.slane %v3042, 1
      %v3846 = vsel %vm3543, %v3845, %v3844
      %v3847 = vsel %vm3546, %v3065, %v3846
      %v3848 = vrot.slane %v3088, 7
      %v3849 = vsel %vm3549, %v3848, %v3847
      %v3850 = vrot.slane %v3111, 6
      %v3851 = vsel %vm3552, %v3850, %v3849
      %v3852 = vrot.slane %v3134, 5
      %v3853 = vsel %vm3555, %v3852, %v3851
      %v3854 = vrot.slane %v3157, 4
      %v3855 = vrot.slane %v3180, 3
      %v3856 = vsel %vm3537, %v3855, %v3854
      %v3857 = vrot.slane %v3203, 2
      %v3858 = vsel %vm3540, %v3857, %v3856
      %v3859 = vrot.slane %v3226, 1
      %v3860 = vsel %vm3543, %v3859, %v3858
      %v3861 = vsel %vm3546, %v3249, %v3860
      %v3862 = vrot.slane %v3272, 7
      %v3863 = vsel %vm3549, %v3862, %v3861
      %v3864 = vrot.slane %v3295, 6
      %v3865 = vsel %vm3552, %v3864, %v3863
      %v3866 = vrot.slane %v3318, 5
      %v3867 = vsel %vm3555, %v3866, %v3865
      %v3868 = vrot.slane %v3341, 4
      %v3869 = vrot.slane %v3364, 3
      %v3870 = vsel %vm3537, %v3869, %v3868
      %v3871 = vrot.slane %v3387, 2
      %v3872 = vsel %vm3540, %v3871, %v3870
      %v3873 = vrot.slane %v3410, 1
      %v3874 = vsel %vm3543, %v3873, %v3872
      %v3875 = vsel %vm3546, %v3433, %v3874
      %v3876 = vrot.slane %v3456, 7
      %v3877 = vsel %vm3549, %v3876, %v3875
      %v3878 = vrot.slane %v3479, 6
      %v3879 = vsel %vm3552, %v3878, %v3877
      %v3880 = vrot.slane %v3502, 5
      %v3881 = vsel %vm3555, %v3880, %v3879
      %3886 = vst.msk [vmem:[%s307 + $0x8] sm:$0xff] %vm355, %v3839
      %3887 = vst.msk [vmem:[%s307 + $0x18] sm:$0xff] %vm355, %v3853
      %3888 = vst.msk [vmem:[%s307 + $0x28] sm:$0xff] %vm355, %v3867
      %3889 = vst.msk [vmem:[%s307 + $0x38] sm:$0xff] %vm355, %v3881
      %v3890 = vrot.slane %v2789, 5
      %v3891 = vrot.slane %v2812, 4
      %v3892 = vsel %vm3537, %v3891, %v3890
      %v3893 = vrot.slane %v2835, 3
      %v3894 = vsel %vm3540, %v3893, %v3892
      %v3895 = vrot.slane %v2858, 2
      %v3896 = vsel %vm3543, %v3895, %v3894
      %v3897 = vrot.slane %v2881, 1
      %v3898 = vsel %vm3546, %v3897, %v3896
      %v3899 = vsel %vm3549, %v2904, %v3898
      %v3900 = vrot.slane %v2927, 7
      %v3901 = vsel %vm3552, %v3900, %v3899
      %v3902 = vrot.slane %v2950, 6
      %v3903 = vsel %vm3555, %v3902, %v3901
      %v3904 = vrot.slane %v2973, 5
      %v3905 = vrot.slane %v2996, 4
      %v3906 = vsel %vm3537, %v3905, %v3904
      %v3907 = vrot.slane %v3019, 3
      %v3908 = vsel %vm3540, %v3907, %v3906
      %v3909 = vrot.slane %v3042, 2
      %v3910 = vsel %vm3543, %v3909, %v3908
      %v3911 = vrot.slane %v3065, 1
      %v3912 = vsel %vm3546, %v3911, %v3910
      %v3913 = vsel %vm3549, %v3088, %v3912
      %v3914 = vrot.slane %v3111, 7
      %v3915 = vsel %vm3552, %v3914, %v3913
      %v3916 = vrot.slane %v3134, 6
      %v3917 = vsel %vm3555, %v3916, %v3915
      %v3918 = vrot.slane %v3157, 5
      %v3919 = vrot.slane %v3180, 4
      %v3920 = vsel %vm3537, %v3919, %v3918
      %v3921 = vrot.slane %v3203, 3
      %v3922 = vsel %vm3540, %v3921, %v3920
      %v3923 = vrot.slane %v3226, 2
      %v3924 = vsel %vm3543, %v3923, %v3922
      %v3925 = vrot.slane %v3249, 1
      %v3926 = vsel %vm3546, %v3925, %v3924
      %v3927 = vsel %vm3549, %v3272, %v3926
      %v3928 = vrot.slane %v3295, 7
      %v3929 = vsel %vm3552, %v3928, %v3927
      %v3930 = vrot.slane %v3318, 6
      %v3931 = vsel %vm3555, %v3930, %v3929
      %v3932 = vrot.slane %v3341, 5
      %v3933 = vrot.slane %v3364, 4
      %v3934 = vsel %vm3537, %v3933, %v3932
      %v3935 = vrot.slane %v3387, 3
      %v3936 = vsel %vm3540, %v3935, %v3934
      %v3937 = vrot.slane %v3410, 2
      %v3938 = vsel %vm3543, %v3937, %v3936
      %v3939 = vrot.slane %v3433, 1
      %v3940 = vsel %vm3546, %v3939, %v3938
      %v3941 = vsel %vm3549, %v3456, %v3940
      %v3942 = vrot.slane %v3479, 7
      %v3943 = vsel %vm3552, %v3942, %v3941
      %v3944 = vrot.slane %v3502, 6
      %v3945 = vsel %vm3555, %v3944, %v3943
      %3946 = vrot.lane.b32.xlu0 %v3903, 32
      %v3947 = vpop.permute.xlu0 %3946
      %3948 = vrot.lane.b32.xlu0 %v3917, 32
      %v3949 = vpop.permute.xlu0 %3948
      %3950 = vrot.lane.b32.xlu0 %v3931, 32
      %v3951 = vpop.permute.xlu0 %3950
      %3952 = vrot.lane.b32.xlu0 %v3945, 32
      %v3953 = vpop.permute.xlu0 %3952
      %3958 = vst.msk [vmem:[%s307 + $0x8] sm:$0xff] %vm3675, %v3947
      %3959 = vst.msk [vmem:[%s307 + $0x18] sm:$0xff] %vm3675, %v3949
      %3960 = vst.msk [vmem:[%s307 + $0x28] sm:$0xff] %vm3675, %v3951
      %3961 = vst.msk [vmem:[%s307 + $0x38] sm:$0xff] %vm3675, %v3953
      %v3962 = vrot.slane %v2789, 6
      %v3963 = vrot.slane %v2812, 5
      %v3964 = vsel %vm3537, %v3963, %v3962
      %v3965 = vrot.slane %v2835, 4
      %v3966 = vsel %vm3540, %v3965, %v3964
      %v3967 = vrot.slane %v2858, 3
      %v3968 = vsel %vm3543, %v3967, %v3966
      %v3969 = vrot.slane %v2881, 2
      %v3970 = vsel %vm3546, %v3969, %v3968
      %v3971 = vrot.slane %v2904, 1
      %v3972 = vsel %vm3549, %v3971, %v3970
      %v3973 = vsel %vm3552, %v2927, %v3972
      %v3974 = vrot.slane %v2950, 7
      %v3975 = vsel %vm3555, %v3974, %v3973
      %v3976 = vrot.slane %v2973, 6
      %v3977 = vrot.slane %v2996, 5
      %v3978 = vsel %vm3537, %v3977, %v3976
      %v3979 = vrot.slane %v3019, 4
      %v3980 = vsel %vm3540, %v3979, %v3978
      %v3981 = vrot.slane %v3042, 3
      %v3982 = vsel %vm3543, %v3981, %v3980
      %v3983 = vrot.slane %v3065, 2
      %v3984 = vsel %vm3546, %v3983, %v3982
      %v3985 = vrot.slane %v3088, 1
      %v3986 = vsel %vm3549, %v3985, %v3984
      %v3987 = vsel %vm3552, %v3111, %v3986
      %v3988 = vrot.slane %v3134, 7
      %v3989 = vsel %vm3555, %v3988, %v3987
      %v3990 = vrot.slane %v3157, 6
      %v3991 = vrot.slane %v3180, 5
      %v3992 = vsel %vm3537, %v3991, %v3990
      %v3993 = vrot.slane %v3203, 4
      %v3994 = vsel %vm3540, %v3993, %v3992
      %v3995 = vrot.slane %v3226, 3
      %v3996 = vsel %vm3543, %v3995, %v3994
      %v3997 = vrot.slane %v3249, 2
      %v3998 = vsel %vm3546, %v3997, %v3996
      %v3999 = vrot.slane %v3272, 1
      %v4000 = vsel %vm3549, %v3999, %v3998
      %v4001 = vsel %vm3552, %v3295, %v4000
      %v4002 = vrot.slane %v3318, 7
      %v4003 = vsel %vm3555, %v4002, %v4001
      %v4004 = vrot.slane %v3341, 6
      %v4005 = vrot.slane %v3364, 5
      %v4006 = vsel %vm3537, %v4005, %v4004
      %v4007 = vrot.slane %v3387, 4
      %v4008 = vsel %vm3540, %v4007, %v4006
      %v4009 = vrot.slane %v3410, 3
      %v4010 = vsel %vm3543, %v4009, %v4008
      %v4011 = vrot.slane %v3433, 2
      %v4012 = vsel %vm3546, %v4011, %v4010
      %v4013 = vrot.slane %v3456, 1
      %v4014 = vsel %vm3549, %v4013, %v4012
      %v4015 = vsel %vm3552, %v3479, %v4014
      %v4016 = vrot.slane %v3502, 7
      %v4017 = vsel %vm3555, %v4016, %v4015
      %4018 = vrot.lane.b32.xlu0 %v3975, 64
      %v4019 = vpop.permute.xlu0 %4018
      %4020 = vrot.lane.b32.xlu0 %v3989, 64
      %v4021 = vpop.permute.xlu0 %4020
      %4022 = vrot.lane.b32.xlu0 %v4003, 64
      %v4023 = vpop.permute.xlu0 %4022
      %4024 = vrot.lane.b32.xlu0 %v4017, 64
      %v4025 = vpop.permute.xlu0 %4024
      %4030 = vst.msk [vmem:[%s307 + $0x8] sm:$0xff] %vm3748, %v4019
      %4031 = vst.msk [vmem:[%s307 + $0x18] sm:$0xff] %vm3748, %v4021
      %4032 = vst.msk [vmem:[%s307 + $0x28] sm:$0xff] %vm3748, %v4023
      %4033 = vst.msk [vmem:[%s307 + $0x38] sm:$0xff] %vm3748, %v4025
      %v4034 = vrot.slane %v2789, 7
      %v4035 = vrot.slane %v2812, 6
      %v4036 = vsel %vm3537, %v4035, %v4034
      %v4037 = vrot.slane %v2835, 5
      %v4038 = vsel %vm3540, %v4037, %v4036
      %v4039 = vrot.slane %v2858, 4
      %v4040 = vsel %vm3543, %v4039, %v4038
      %v4041 = vrot.slane %v2881, 3
      %v4042 = vsel %vm3546, %v4041, %v4040
      %v4043 = vrot.slane %v2904, 2
      %v4044 = vsel %vm3549, %v4043, %v4042
      %v4045 = vrot.slane %v2927, 1
      %v4046 = vsel %vm3552, %v4045, %v4044
      %v4047 = vsel %vm3555, %v2950, %v4046
      %v4048 = vrot.slane %v2973, 7
      %v4049 = vrot.slane %v2996, 6
      %v4050 = vsel %vm3537, %v4049, %v4048
      %v4051 = vrot.slane %v3019, 5
      %v4052 = vsel %vm3540, %v4051, %v4050
      %v4053 = vrot.slane %v3042, 4
      %v4054 = vsel %vm3543, %v4053, %v4052
      %v4055 = vrot.slane %v3065, 3
      %v4056 = vsel %vm3546, %v4055, %v4054
      %v4057 = vrot.slane %v3088, 2
      %v4058 = vsel %vm3549, %v4057, %v4056
      %v4059 = vrot.slane %v3111, 1
      %v4060 = vsel %vm3552, %v4059, %v4058
      %v4061 = vsel %vm3555, %v3134, %v4060
      %v4062 = vrot.slane %v3157, 7
      %v4063 = vrot.slane %v3180, 6
      %v4064 = vsel %vm3537, %v4063, %v4062
      %v4065 = vrot.slane %v3203, 5
      %v4066 = vsel %vm3540, %v4065, %v4064
      %v4067 = vrot.slane %v3226, 4
      %v4068 = vsel %vm3543, %v4067, %v4066
      %v4069 = vrot.slane %v3249, 3
      %v4070 = vsel %vm3546, %v4069, %v4068
      %v4071 = vrot.slane %v3272, 2
      %v4072 = vsel %vm3549, %v4071, %v4070
      %v4073 = vrot.slane %v3295, 1
      %v4074 = vsel %vm3552, %v4073, %v4072
      %v4075 = vsel %vm3555, %v3318, %v4074
      %v4076 = vrot.slane %v3341, 7
      %v4077 = vrot.slane %v3364, 6
      %v4078 = vsel %vm3537, %v4077, %v4076
      %v4079 = vrot.slane %v3387, 5
      %v4080 = vsel %vm3540, %v4079, %v4078
      %v4081 = vrot.slane %v3410, 4
      %v4082 = vsel %vm3543, %v4081, %v4080
      %v4083 = vrot.slane %v3433, 3
      %v4084 = vsel %vm3546, %v4083, %v4082
      %v4085 = vrot.slane %v3456, 2
      %v4086 = vsel %vm3549, %v4085, %v4084
      %v4087 = vrot.slane %v3479, 1
      %v4088 = vsel %vm3552, %v4087, %v4086
      %v4089 = vsel %vm3555, %v3502, %v4088
      %4090 = vrot.lane.b32.xlu0 %v4047, 96
      %v4091 = vpop.permute.xlu0 %4090
      %4092 = vrot.lane.b32.xlu0 %v4061, 96
      %v4093 = vpop.permute.xlu0 %4092
      %4094 = vrot.lane.b32.xlu0 %v4075, 96
      %v4095 = vpop.permute.xlu0 %4094
      %4096 = vrot.lane.b32.xlu0 %v4089, 96
      %v4097 = vpop.permute.xlu0 %4096
      %4102 = vst.msk [vmem:[%s307 + $0x8] sm:$0xff] %vm3821, %v4091
      %4103 = vst.msk [vmem:[%s307 + $0x18] sm:$0xff] %vm3821, %v4093
      %4104 = vst.msk [vmem:[%s307 + $0x28] sm:$0xff] %vm3821, %v4095
      %4105 = vst.msk [vmem:[%s307 + $0x38] sm:$0xff] %vm3821, %v4097
      %s4106 = smul.u32 4, %s18
      %p4107 = scmp.lt.s32.totalorder %s4106, 7
      %s4108 = scalar_select %p4107, %s4106, 7
      %s4109 = smul.addr %s4108, 2
      %s4110 = smul.addr %s4109, 8
      %s4111 = scalar_lea.vmem %s5, %s4110
      %s4112 = smul.u32 32, %s18
      %p4113 = scmp.lt.s32.totalorder %s4112, 63
      %s4114 = scalar_select %p4113, %s4112, 63
      %s4115 = smul.addr %s4114, 8
      %s4116 = scalar_lea.vmem %s6, %s4115
      // Predicated region
      $region41: #{batched_single_head_attention.1} parent=39 // pred_check
        %p4117 = pneg %p156
      $region42: #{batched_single_head_attention.1} parent=39 // pred_check_branch
        %4119 = sbr.rel (%p4117) target = $region44
      $region43: #{batched_single_head_attention.1} parent=39 // pred_region
        %s4120 = smul.u32 4, %s18
      $region44: #{batched_single_head_attention.1} parent=39 // pred_fallthru
        _
      // Predicated region
      $region45: #{batched_single_head_attention.1} parent=39 // pred_check
        %p4121 = pneg %p182
      $region46: #{batched_single_head_attention.1} parent=39 // pred_check_branch
        %4123 = sbr.rel (%p4121) target = $region48
      $region47: #{batched_single_head_attention.1} parent=39 // pred_region
        %s4124 = smul.u32 32, %s18
      $region48: #{batched_single_head_attention.1} parent=39 // pred_fallthru
        _
    $region40: #{batched_single_head_attention.1} parent=5 // pred_fallthru
      _
    %p4125 = scmp.le.s32.totalorder 2, %s13
    // Predicated region
    $region49: #{batched_single_head_attention.1} parent=5 // pred_check
      %p4126 = pneg %p4125
    $region50: #{batched_single_head_attention.1} parent=5 // pred_check_branch
      %4128 = sbr.rel (%p4126) target = $region52
    $region51: #{batched_single_head_attention.1} parent=5 // pred_region
      %s4129 = ssub.s32 %s13, 2
      // Predicated region
      $region53: #{batched_single_head_attention.1} parent=51 // pred_check
        %p4130 = pneg %p162
      $region54: #{batched_single_head_attention.1} parent=51 // pred_check_branch
        %4132 = sbr.rel (%p4130) target = $region56
      $region55: #{batched_single_head_attention.1} parent=51 // pred_region
        %s4133 = smul.u32 4, %s19
        %p4134 = scmp.lt.s32.totalorder %s4133, 7
        %s4135 = scalar_select %p4134, %s4133, 7
        %s4136 = smul.addr %s4135, 2
        %s4137 = smul.addr %s4136, 8
        %s4138 = scalar_lea.vmem %s5, %s4137
      $region56: #{batched_single_head_attention.1} parent=51 // pred_fallthru
        _
      // Predicated region
      $region57: #{batched_single_head_attention.1} parent=51 // pred_check
        %p4139 = pneg %p188
      $region58: #{batched_single_head_attention.1} parent=51 // pred_check_branch
        %4141 = sbr.rel (%p4139) target = $region60
      $region59: #{batched_single_head_attention.1} parent=51 // pred_region
        %s4142 = smul.u32 32, %s19
        %p4143 = scmp.lt.s32.totalorder %s4142, 63
        %s4144 = scalar_select %p4143, %s4142, 63
        %s4145 = smul.addr %s4144, 8
        %s4146 = scalar_lea.vmem %s6, %s4145
      $region60: #{batched_single_head_attention.1} parent=51 // pred_fallthru
        _
    $region52: #{batched_single_head_attention.1} parent=5 // pred_fallthru
      _
  $region6: #{batched_single_head_attention.1} parent=0 // loop_footer
    %s17 = sadd.s32 1, %s13
  $region7: #{batched_single_head_attention.1} parent=0 // loop_footer_branch
    %12 = sbr.rel target = $region3
  $region8: #{batched_single_head_attention.1} parent=0 // loop_exit
    _

</llo_original>
